<compile_context>
chip_gen: v7x
topology: tpu7x:2x2x1
jax: 0.10.0
libtpu: 0.0.40
codegen_flags: <defaults>
</compile_context>

<pallas_src>
import functools
import math

import jax
import jax.numpy as jnp
from jax.experimental import pallas as pl
from jax.experimental.pallas import tpu as pltpu

LN_EPS = 1e-5                      # nn.LayerNorm default
COMPUTE_DTYPE = jnp.bfloat16       # MXU operand dtype; accumulation stays f32

# Slots in the packed per-layer "small parameter" array.
_SA_IN_B, _SA_OUT_B, _CA_IN_B, _CA_OUT_B = 0, 1, 2, 3
_FF1_B, _FF2_B = 4, 5
_N1_W, _N1_B, _N2_W, _N2_B, _N3_W, _N3_B = 6, 7, 8, 9, 10, 11
_N_SMALL = 12


def _layernorm(x, w, b):
    mu = jnp.mean(x, axis=-1, keepdims=True)
    xc = x - mu
    var = jnp.mean(xc * xc, axis=-1, keepdims=True)
    return xc * jax.lax.rsqrt(var + LN_EPS) * w + b


def _softmax_rows(s):
    s = s - jnp.max(s, axis=-1, keepdims=True)
    p = jnp.exp(s)
    return p * pl.reciprocal(jnp.sum(p, axis=-1, keepdims=True), approx=True)


def _mha(q_src, kv_src, mask, w_in, b_in, w_out_h, b_out,
         *, nhead, bt, seq, self_attn):
    """Multi-head attention on a (bt*seq, D) activation slab.

    q_src/kv_src : (M, D) f32 / bf16     w_in   : bf16 (D, 3D) packed [q|k|v]
    w_out_h      : bf16 (nhead, hd, D)   b_in   : f32 (1, 3D)    b_out: f32 (1, D)
    mask         : f32 (bt, seq, seq) additive, or None

    Per-head PV results are folded directly into the output projection
    (acc += pv_h @ w_out[h]), so there is no lane-sliced scratch write and no
    head concatenation before the out-projection.
    """
    M, D = q_src.shape
    hd = D // nhead
    scale = 1.0 / math.sqrt(hd)

    if self_attn:
        qkv = jnp.dot(q_src.astype(COMPUTE_DTYPE), w_in,
                      preferred_element_type=jnp.float32) + b_in
        q, k, v = qkv[:, :D], qkv[:, D:2 * D], qkv[:, 2 * D:]
    else:
        q = jnp.dot(q_src.astype(COMPUTE_DTYPE), w_in[:, :D],
                    preferred_element_type=jnp.float32) + b_in[:, :D]
        kv = jnp.dot(kv_src.astype(COMPUTE_DTYPE), w_in[:, D:],
                     preferred_element_type=jnp.float32) + b_in[:, D:]
        k, v = kv[:, :D], kv[:, D:]

    q = q * scale  # fold 1/sqrt(hd) into q (M*D elems) instead of the SxS scores

    acc = jnp.zeros((M, D), jnp.float32)
    # Static unroll over heads; intermediates die at the per-head accumulation.
    # (For nhead >= 8 a batched-head einsum would bound live ranges better.)
    for h in range(nhead):
        sl = slice(h * hd, (h + 1) * hd)
        qh = q[:, sl].reshape(bt, seq, hd).astype(COMPUTE_DTYPE)
        kh = k[:, sl].reshape(bt, seq, hd).astype(COMPUTE_DTYPE)
        vh = v[:, sl].reshape(bt, seq, hd).astype(COMPUTE_DTYPE)
        s = jnp.einsum('bqd,bkd->bqk', qh, kh,
                       preferred_element_type=jnp.float32)
        if mask is not None:
            s = s + mask
        p = _softmax_rows(s)
        pv = jnp.einsum('bqk,bkd->bqd', p.astype(COMPUTE_DTYPE), vh,
                        preferred_element_type=jnp.float32)
        acc = acc + jnp.dot(pv.reshape(M, hd).astype(COMPUTE_DTYPE), w_out_h[h],
                            preferred_element_type=jnp.float32)
    return acc + b_out


def _decoder_kernel(tgt_ref, mask_ref, pad_ref,
                    sa_in_w_ref, sa_out_w_ref, ca_in_w_ref, ca_out_w_ref,
                    ff1_w_ref, ff2_w_ref, small_ref,
                    out_ref, x_scr,
                    *, nhead, bt, seq, d_model, d_ff):
    l = pl.program_id(1)
    D, F, M = d_model, d_ff, bt * seq

    # memory == original tgt (forward() passes memory=tgt); resident in bf16.
    memory = tgt_ref[...].reshape(M, D)

    @pl.when(l == 0)
    def _():
        x_scr[...] = memory.astype(jnp.float32)   # residual stream starts as tgt

    x = x_scr[...]

    small = small_ref[0]                          # (12, Pmax) f32

    def sp(idx, width):                           # (1, width) static slice
        return small[idx:idx + 1, :width]

    sa_in_b, sa_out_b = sp(_SA_IN_B, 3 * D), sp(_SA_OUT_B, D)
    ca_in_b, ca_out_b = sp(_CA_IN_B, 3 * D), sp(_CA_OUT_B, D)
    ff1_b, ff2_b = sp(_FF1_B, F), sp(_FF2_B, D)
    n1_w, n1_b = sp(_N1_W, D), sp(_N1_B, D)
    n2_w, n2_b = sp(_N2_W, D), sp(_N2_B, D)
    n3_w, n3_b = sp(_N3_W, D), sp(_N3_B, D)

    # Combined additive self-attention mask: shared (S,S) tgt_mask + per-key
    # padding (bt,1,S). Built once per grid step; no (bt,S,S) HBM transfer.
    self_mask = mask_ref[...][None, :, :] + pad_ref[...]

    mha = functools.partial(_mha, nhead=nhead, bt=bt, seq=seq)

    # --- self-attention block (post-norm) ---
    sa = mha(x, x, self_mask, sa_in_w_ref[0], sa_in_b,
             sa_out_w_ref[0], sa_out_b, self_attn=True)
    x = _layernorm(x + sa, n1_w, n1_b)

    # --- cross-attention block: memory == original tgt, no mask ---
    ca = mha(x, memory, None, ca_in_w_ref[0], ca_in_b,
             ca_out_w_ref[0], ca_out_b, self_attn=False)
    x = _layernorm(x + ca, n2_w, n2_b)

    # --- feed-forward block (ReLU) ---
    hdn = jnp.maximum(
        jnp.dot(x.astype(COMPUTE_DTYPE), ff1_w_ref[0],
                preferred_element_type=jnp.float32) + ff1_b, 0.0)
    ff = jnp.dot(hdn.astype(COMPUTE_DTYPE), ff2_w_ref[0],
                 preferred_element_type=jnp.float32) + ff2_b
    x = _layernorm(x + ff, n3_w, n3_b)
    # TODO(synk): dropout is an inference-time no-op and is omitted.

    x_scr[...] = x

    @pl.when(l == pl.num_programs(1) - 1)
    def _():
        out_ref[...] = x.reshape(bt, seq, D).astype(out_ref.dtype)


# ----------------------------------------------------------------------------
# Wrapper: tiling heuristics + pallas_call
# ----------------------------------------------------------------------------

def _vmem_usage_bytes(bt, S, D, F, layer_w_bytes, small_bytes):
    """Rough per-grid-step VMEM footprint for picking the batch block size."""
    M = bt * S
    resident = (2 * layer_w_bytes + 2 * small_bytes   # double-buffered layer params
                + 2 * M * D * 2                       # tgt block (bf16)
                + 2 * S * S * 4                       # shared additive tgt_mask
                + 2 * bt * S * 4                      # key-padding vector
                + 2 * M * D * 4                       # output block (f32)
                + M * D * 4)                          # residual-stream scratch
    transient = (M * 3 * D * 4                        # fused QKV slab (f32)
                 + 2 * bt * S * S * 4                 # combined mask + scores/probs
                 + M * F * 4                          # FFN hidden (f32)
                 + 3 * M * D * 4)                     # attention acc + residuals
    return resident + transient


def _pick_vmem_limit():
    try:
        phys = int(pltpu.get_tpu_info().vmem_capacity_bytes)
    except Exception:
        phys = 64 * 1024 * 1024                       # conservative (v7x-sized)
    # Leave headroom for compiler internal scratch; never below 32 MiB.
    return max(32 * 1024 * 1024, min(int(phys * 0.8), 100 * 1024 * 1024))


def _choose_bt(B, S, D, F, layer_w_bytes, small_bytes, vmem_budget):
    divisors = [d for d in range(1, B + 1) if B % d == 0]
    cap_rows = max(S, 1024)          # target 512-1024 GEMM rows per batch block
    bt = 1
    for cand in divisors:
        if cand * S <= cap_rows and _vmem_usage_bytes(
                cand, S, D, F, layer_w_bytes, small_bytes) <= vmem_budget:
            bt = cand
    # Keep >= 2 batch blocks (v7x megacore) if that still leaves >= 256 rows.
    if B // bt == 1 and B > 1:
        for cand in sorted(divisors, reverse=True):
            if cand < B and cand * S >= 256 and _vmem_usage_bytes(
                    cand, S, D, F, layer_w_bytes, small_bytes) <= vmem_budget:
                bt = cand
                break
    return bt


def decoder_forward(tgt, tgt_mask, tgt_pad_mask, params, *, nhead):
    """tgt: (B,S,D) f32, tgt_mask: (S,S) additive f32, tgt_pad_mask: (B,S) bool."""
    B, S, D = tgt.shape
    L = params["sa_in_w"].shape[0]
    F = params["ff1_w"].shape[-1]
    hd = D // nhead

    # --- parameters -----------------------------------------------------------
    # Big matmul weights stay separate (bf16); out-projections are pre-reshaped
    # to (nhead, hd, D) so the kernel indexes heads on a leading dim (no
    # sublane slicing). Layout is (in, out): y = x @ W.  Real PyTorch weights
    # ((out, in)) must be transposed by the caller before filling `params`.
    sa_in_w = params["sa_in_w"].astype(COMPUTE_DTYPE)
    ca_in_w = params["ca_in_w"].astype(COMPUTE_DTYPE)
    sa_out_w = params["sa_out_w"].reshape(L, nhead, hd, D).astype(COMPUTE_DTYPE)
    ca_out_w = params["ca_out_w"].reshape(L, nhead, hd, D).astype(COMPUTE_DTYPE)
    ff1_w = params["ff1_w"].astype(COMPUTE_DTYPE)
    ff2_w = params["ff2_w"].astype(COMPUTE_DTYPE)

    # All per-layer vectors (biases + LayerNorm scale/shift) packed into one
    # (L, 12, Pmax) f32 array -> a single small DMA per grid step instead of 12.
    p_max = max(3 * D, F)
    p_max = ((p_max + 127) // 128) * 128

    def row(name, width):
        return jnp.pad(params[name].reshape(L, width).astype(jnp.float32),
                       ((0, 0), (0, p_max - width)))

    small = jnp.stack([
        row("sa_in_b", 3 * D), row("sa_out_b", D),
        row("ca_in_b", 3 * D), row("ca_out_b", D),
        row("ff1_b", F), row("ff2_b", D),
        row("n1_w", D), row("n1_b", D),
        row("n2_w", D), row("n2_b", D),
        row("n3_w", D), row("n3_b", D),
    ], axis=1)                                          # (L, 12, Pmax)

    big_weights = (sa_in_w, sa_out_w, ca_in_w, ca_out_w, ff1_w, ff2_w)
    layer_w_bytes = sum(int(w.size) * w.dtype.itemsize for w in big_weights) // L
    small_bytes = int(small.size) * small.dtype.itemsize // L

    # --- tiling ----------------------------------------------------------------
    vmem_limit = _pick_vmem_limit()
    bt = _choose_bt(B, S, D, F, layer_w_bytes, small_bytes, int(vmem_limit * 0.85))
    nb = B // bt
    # NOTE: for very large D/F on v7x (64 MiB VMEM) the double-buffered FFN
    # weights may need an extra inner K/N split (emit_pipeline); not needed here.

    # --- activations / masks ---------------------------------------------------
    tgt_bf16 = tgt.astype(COMPUTE_DTYPE)                # halves tgt HBM/VMEM traffic
    pad_add = jnp.where(tgt_pad_mask, jnp.float32(-1e9),
                        jnp.float32(0.0)).reshape(B, 1, S)
    tgt_mask_f32 = tgt_mask.astype(jnp.float32)         # (S, S), shared across batch

    def layer_spec(arr):
        n_rest = arr.ndim - 1
        return pl.BlockSpec((1,) + arr.shape[1:],
                            lambda b, l, _n=n_rest: (l,) + (0,) * _n)

    in_specs = [
        pl.BlockSpec((bt, S, D), lambda b, l: (b, 0, 0)),   # tgt (resident over l)
        pl.BlockSpec((S, S), lambda b, l: (0, 0)),          # shared additive tgt_mask
        pl.BlockSpec((bt, 1, S), lambda b, l: (b, 0, 0)),   # per-key padding add
        layer_spec(sa_in_w), layer_spec(sa_out_w),
        layer_spec(ca_in_w), layer_spec(ca_out_w),
        layer_spec(ff1_w), layer_spec(ff2_w),
        layer_spec(small),
    ]

    # Cost estimate (weights are re-read once per batch block).
    Mtot = B * S
    flops = L * (16 * Mtot * D * D + 8 * Mtot * S * D + 4 * Mtot * D * F)
    transcendentals = L * 2 * B * nhead * S * S
    bytes_accessed = (L * nb * (layer_w_bytes + small_bytes)
                      + Mtot * D * 2 + nb * S * S * 4 + B * S * 4
                      + Mtot * D * 4)

    kernel = functools.partial(_decoder_kernel, nhead=nhead, bt=bt, seq=S,
                               d_model=D, d_ff=F)
    grid_spec = pltpu.PrefetchScalarGridSpec(
        num_scalar_prefetch=0,
        grid=(nb, L),
        in_specs=in_specs,
        out_specs=pl.BlockSpec((bt, S, D), lambda b, l: (b, 0, 0)),
        scratch_shapes=[pltpu.VMEM((bt * S, D), jnp.float32)],  # residual stream
    )
    return pl.pallas_call(
        kernel,
        # Kept f32 to match the PyTorch module; switch to bf16 if downstream allows.
        out_shape=jax.ShapeDtypeStruct((B, S, D), jnp.float32),
        grid_spec=grid_spec,
        compiler_params=pltpu.CompilerParams(
            dimension_semantics=("parallel", "arbitrary"),
            vmem_limit_bytes=vmem_limit),
        cost_estimate=pl.CostEstimate(flops=flops,
                                      transcendentals=transcendentals,
                                      bytes_accessed=bytes_accessed),
    )(tgt_bf16, tgt_mask_f32, pad_add, sa_in_w, sa_out_w, ca_in_w, ca_out_w,
      ff1_w, ff2_w, small)


def init_params(key, d_model, nhead, num_layers, d_ff):
    """Deterministic synthetic parameters with the same shapes as the PyTorch
    module (in_proj packed as [q|k|v]), stacked over layers, stored (in, out)."""
    D, L, F = d_model, num_layers, d_ff
    ks = jax.random.split(key, 6)
    std = jnp.float32(0.05)

    def w(k, shape):
        return std * jax.random.normal(k, shape, jnp.float32)

    zeros = lambda s: jnp.zeros(s, jnp.float32)
    ones = lambda s: jnp.ones(s, jnp.float32)
    return {
        "sa_in_w": w(ks[0], (L, D, 3 * D)), "sa_in_b": zeros((L, 1, 3 * D)),
        "sa_out_w": w(ks[1], (L, D, D)),    "sa_out_b": zeros((L, 1, D)),
        "ca_in_w": w(ks[2], (L, D, 3 * D)), "ca_in_b": zeros((L, 1, 3 * D)),
        "ca_out_w": w(ks[3], (L, D, D)),    "ca_out_b": zeros((L, 1, D)),
        "ff1_w": w(ks[4], (L, D, F)), "ff1_b": zeros((L, 1, F)),
        "ff2_w": w(ks[5], (L, F, D)), "ff2_b": zeros((L, 1, D)),
        "n1_w": ones((L, 1, D)), "n1_b": zeros((L, 1, D)),
        "n2_w": ones((L, 1, D)), "n2_b": zeros((L, 1, D)),
        "n3_w": ones((L, 1, D)), "n3_b": zeros((L, 1, D)),
    }


if __name__ == "__main__":
    # Module hyperparameters (small but consistent with the forward pass)
    d_model, nhead, num_layers, d_ff, dropout = 32, 4, 2, 64, 0.1
    B, S = 2, 8

    key = jax.random.PRNGKey(0)
    k_tgt, k_par = jax.random.split(key)

    tgt = jax.random.normal(k_tgt, (B, S, d_model), jnp.float32)

    # causal attn mask (additive; large-negative instead of -inf for stability)
    row_i = jnp.arange(S)[:, None]
    col_i = jnp.arange(S)[None, :]
    tgt_mask = jnp.where(col_i > row_i, -1e9, 0.0).astype(jnp.float32)

    # key padding mask: True = ignore that position; pad last 2 tokens of batch 1
    tgt_pad_mask = jnp.zeros((B, S), dtype=bool).at[1, -2:].set(True)

    params = init_params(k_par, d_model, nhead, num_layers, d_ff)

    out = decoder_forward(tgt, tgt_mask, tgt_pad_mask, params, nhead=nhead)
    out = jax.block_until_ready(out)

    assert out.shape == (B, S, d_model)
    assert bool(jnp.all(jnp.isfinite(out)))
    print("KERNEL_OK")
</pallas_src>

<mosaic_0001>
module attributes {stable_mosaic.version = 11 : i64} {
  func.func @_decoder_kernel(%arg0: i32, %arg1: i32, %arg2: memref<2x8x32xbf16, #tpu.memory_space<vmem>>, %arg3: memref<8x8xf32, #tpu.memory_space<vmem>>, %arg4: memref<2x1x8xf32, #tpu.memory_space<vmem>>, %arg5: memref<1x32x96xbf16, #tpu.memory_space<vmem>>, %arg6: memref<1x4x8x32xbf16, #tpu.memory_space<vmem>>, %arg7: memref<1x32x96xbf16, #tpu.memory_space<vmem>>, %arg8: memref<1x4x8x32xbf16, #tpu.memory_space<vmem>>, %arg9: memref<1x32x64xbf16, #tpu.memory_space<vmem>>, %arg10: memref<1x64x32xbf16, #tpu.memory_space<vmem>>, %arg11: memref<1x12x128xf32, #tpu.memory_space<vmem>>, %arg12: memref<2x8x32xf32, #tpu.memory_space<vmem>>, %arg13: memref<16x32xf32, #tpu.memory_space<vmem>>) attributes {dimension_semantics = [#tpu.dimension_semantics<parallel>, #tpu.dimension_semantics<arbitrary>], iteration_bounds = array<i64: 1, 2>, scalar_prefetch = 0 : i64, scratch_operands = 1 : i64, tpu.core_type = #tpu.core_type<tc>, window_params = [{transform_indices = @transform_0, window_bounds = array<i64: 2, 8, 32>}, {pipeline_mode = #tpu.pipeline_mode<synchronous>, transform_indices = @transform_1, window_bounds = array<i64: 8, 8>}, {transform_indices = @transform_2, window_bounds = array<i64: 2, 1, 8>}, {transform_indices = @transform_3, window_bounds = array<i64: 1, 32, 96>}, {transform_indices = @transform_4, window_bounds = array<i64: 1, 4, 8, 32>}, {transform_indices = @transform_5, window_bounds = array<i64: 1, 32, 96>}, {transform_indices = @transform_6, window_bounds = array<i64: 1, 4, 8, 32>}, {transform_indices = @transform_7, window_bounds = array<i64: 1, 32, 64>}, {transform_indices = @transform_8, window_bounds = array<i64: 1, 64, 32>}, {transform_indices = @transform_9, window_bounds = array<i64: 1, 12, 128>}, {transform_indices = @transform_10, window_bounds = array<i64: 2, 8, 32>}]} {
    %c0 = arith.constant 0 : index
    %c0_0 = arith.constant 0 : index
    %c0_1 = arith.constant 0 : index
    %0 = vector.load %arg2[%c0, %c0_0, %c0_1] : memref<2x8x32xbf16, #tpu.memory_space<vmem>>, vector<2x8x32xbf16>
    %1 = vector.shape_cast %0 : vector<2x8x32xbf16> to vector<16x32xbf16>
    %c0_i32 = arith.constant 0 : i32
    %2 = arith.cmpi eq, %arg1, %c0_i32 : i32
    %3 = arith.extui %2 : i1 to i32
    %c0_i32_2 = arith.constant 0 : i32
    %4 = arith.cmpi ne, %3, %c0_i32_2 : i32
    scf.if %4 {
      %373 = arith.extf %1 : vector<16x32xbf16> to vector<16x32xf32>
      %c0_100 = arith.constant 0 : index
      %c0_101 = arith.constant 0 : index
      %374 = vector.load %arg13[%c0_100, %c0_101] : memref<16x32xf32, #tpu.memory_space<vmem>>, vector<16x32xf32>
      tpu.vector_store %arg13[%c0_100, %c0_101], %373 {strides = array<i32>} : memref<16x32xf32, #tpu.memory_space<vmem>>, vector<16x32xf32>,
    } else {
    }
    %c0_3 = arith.constant 0 : index
    %c0_4 = arith.constant 0 : index
    %5 = vector.load %arg13[%c0_3, %c0_4] : memref<16x32xf32, #tpu.memory_space<vmem>>, vector<16x32xf32>
    %c0_5 = arith.constant 0 : index
    %c0_6 = arith.constant 0 : index
    %c0_7 = arith.constant 0 : index
    %6 = vector.load %arg11[%c0_5, %c0_6, %c0_7] : memref<1x12x128xf32, #tpu.memory_space<vmem>>, vector<1x12x128xf32>
    %7 = vector.shape_cast %6 : vector<1x12x128xf32> to vector<12x128xf32>
    %8 = vector.extract_strided_slice %7 {offsets = [0, 0], sizes = [1, 96], strides = [1, 1]} : vector<12x128xf32> to vector<1x96xf32>
    %9 = vector.extract_strided_slice %7 {offsets = [1, 0], sizes = [1, 32], strides = [1, 1]} : vector<12x128xf32> to vector<1x32xf32>
    %10 = vector.extract_strided_slice %7 {offsets = [2, 0], sizes = [1, 96], strides = [1, 1]} : vector<12x128xf32> to vector<1x96xf32>
    %11 = vector.extract_strided_slice %7 {offsets = [3, 0], sizes = [1, 32], strides = [1, 1]} : vector<12x128xf32> to vector<1x32xf32>
    %12 = vector.extract_strided_slice %7 {offsets = [4, 0], sizes = [1, 64], strides = [1, 1]} : vector<12x128xf32> to vector<1x64xf32>
    %13 = vector.extract_strided_slice %7 {offsets = [5, 0], sizes = [1, 32], strides = [1, 1]} : vector<12x128xf32> to vector<1x32xf32>
    %14 = vector.extract_strided_slice %7 {offsets = [6, 0], sizes = [1, 32], strides = [1, 1]} : vector<12x128xf32> to vector<1x32xf32>
    %15 = vector.extract_strided_slice %7 {offsets = [7, 0], sizes = [1, 32], strides = [1, 1]} : vector<12x128xf32> to vector<1x32xf32>
    %16 = vector.extract_strided_slice %7 {offsets = [8, 0], sizes = [1, 32], strides = [1, 1]} : vector<12x128xf32> to vector<1x32xf32>
    %17 = vector.extract_strided_slice %7 {offsets = [9, 0], sizes = [1, 32], strides = [1, 1]} : vector<12x128xf32> to vector<1x32xf32>
    %18 = vector.extract_strided_slice %7 {offsets = [10, 0], sizes = [1, 32], strides = [1, 1]} : vector<12x128xf32> to vector<1x32xf32>
    %19 = vector.extract_strided_slice %7 {offsets = [11, 0], sizes = [1, 32], strides = [1, 1]} : vector<12x128xf32> to vector<1x32xf32>
    %c0_8 = arith.constant 0 : index
    %c0_9 = arith.constant 0 : index
    %20 = vector.load %arg3[%c0_8, %c0_9] : memref<8x8xf32, #tpu.memory_space<vmem>>, vector<8x8xf32>
    %21 = vector.shape_cast %20 : vector<8x8xf32> to vector<1x8x8xf32>
    %c0_10 = arith.constant 0 : index
    %c0_11 = arith.constant 0 : index
    %c0_12 = arith.constant 0 : index
    %22 = vector.load %arg4[%c0_10, %c0_11, %c0_12] : memref<2x1x8xf32, #tpu.memory_space<vmem>>, vector<2x1x8xf32>
    %23 = vector.broadcast %21 : vector<1x8x8xf32> to vector<2x8x8xf32>
    %24 = vector.broadcast %22 : vector<2x1x8xf32> to vector<2x8x8xf32>
    %25 = arith.addf %23, %24 : vector<2x8x8xf32>
    %c0_13 = arith.constant 0 : index
    %c0_14 = arith.constant 0 : index
    %c0_15 = arith.constant 0 : index
    %26 = vector.load %arg5[%c0_13, %c0_14, %c0_15] : memref<1x32x96xbf16, #tpu.memory_space<vmem>>, vector<1x32x96xbf16>
    %27 = vector.shape_cast %26 : vector<1x32x96xbf16> to vector<32x96xbf16>
    %c0_16 = arith.constant 0 : index
    %c0_17 = arith.constant 0 : index
    %c0_18 = arith.constant 0 : index
    %c0_19 = arith.constant 0 : index
    %28 = vector.load %arg6[%c0_16, %c0_17, %c0_18, %c0_19] : memref<1x4x8x32xbf16, #tpu.memory_space<vmem>>, vector<1x4x8x32xbf16>
    %29 = vector.shape_cast %28 : vector<1x4x8x32xbf16> to vector<4x8x32xbf16>
    %30 = arith.truncf %5 : vector<16x32xf32> to vector<16x32xbf16>
    %cst = arith.constant dense<0.000000e+00> : vector<16x96xf32>
    %31 = tpu.matmul %30, %27, %cst {dimension_numbers = #tpu.dot_dimension_numbers<[1], [0], [0], [1], [0, 0, 1, 1], [], []>} : vector<16x32xbf16>, vector<32x96xbf16>, vector<16x96xf32> -> vector<16x96xf32>
    %32 = vector.broadcast %8 : vector<1x96xf32> to vector<16x96xf32>
    %33 = arith.addf %31, %32 : vector<16x96xf32>
    %34 = vector.extract_strided_slice %33 {offsets = [0, 0], sizes = [16, 32], strides = [1, 1]} : vector<16x96xf32> to vector<16x32xf32>
    %35 = vector.extract_strided_slice %33 {offsets = [0, 32], sizes = [16, 32], strides = [1, 1]} : vector<16x96xf32> to vector<16x32xf32>
    %36 = vector.extract_strided_slice %33 {offsets = [0, 64], sizes = [16, 32], strides = [1, 1]} : vector<16x96xf32> to vector<16x32xf32>
    %cst_20 = arith.constant 0.353553385 : f32
    %37 = vector.broadcast %cst_20 : f32 to vector<16x32xf32>
    %38 = arith.mulf %34, %37 : vector<16x32xf32>
    %cst_21 = arith.constant 0.000000e+00 : f32
    %39 = vector.broadcast %cst_21 : f32 to vector<16x32xf32>
    %40 = vector.extract_strided_slice %38 {offsets = [0, 0], sizes = [16, 8], strides = [1, 1]} : vector<16x32xf32> to vector<16x8xf32>
    %41 = vector.shape_cast %40 : vector<16x8xf32> to vector<2x8x8xf32>
    %42 = arith.truncf %41 : vector<2x8x8xf32> to vector<2x8x8xbf16>
    %43 = vector.extract_strided_slice %35 {offsets = [0, 0], sizes = [16, 8], strides = [1, 1]} : vector<16x32xf32> to vector<16x8xf32>
    %44 = vector.shape_cast %43 : vector<16x8xf32> to vector<2x8x8xf32>
    %45 = arith.truncf %44 : vector<2x8x8xf32> to vector<2x8x8xbf16>
    %46 = vector.extract_strided_slice %36 {offsets = [0, 0], sizes = [16, 8], strides = [1, 1]} : vector<16x32xf32> to vector<16x8xf32>
    %47 = vector.shape_cast %46 : vector<16x8xf32> to vector<2x8x8xf32>
    %48 = arith.truncf %47 : vector<2x8x8xf32> to vector<2x8x8xbf16>
    "tpu.trace_start"() <{level = 10 : i32, message = "bqd,bkd->bqk"}> : () -> ()
    %cst_22 = arith.constant dense<0.000000e+00> : vector<2x8x8xf32>
    %49 = tpu.matmul %42, %45, %cst_22 {dimension_numbers = #tpu.dot_dimension_numbers<[2], [2], [1], [1], [0, 0, 0, 1, 1, 1], [0], [0]>} : vector<2x8x8xbf16>, vector<2x8x8xbf16>, vector<2x8x8xf32> -> vector<2x8x8xf32>
    "tpu.trace_stop"() : () -> ()
    %50 = arith.addf %49, %25 : vector<2x8x8xf32>
    %cst_23 = arith.constant dense<0xFF800000> : vector<2x8xf32>
    %51 = vector.multi_reduction <maximumf>, %50, %cst_23 [2] : vector<2x8x8xf32> to vector<2x8xf32>
    %52 = vector.shape_cast %51 : vector<2x8xf32> to vector<2x8x1xf32>
    %53 = vector.broadcast %52 : vector<2x8x1xf32> to vector<2x8x8xf32>
    %54 = arith.subf %50, %53 : vector<2x8x8xf32>
    %55 = math.exp %54 : vector<2x8x8xf32>
    %cst_24 = arith.constant dense<0.000000e+00> : vector<2x8xf32>
    %56 = vector.multi_reduction <add>, %55, %cst_24 [2] : vector<2x8x8xf32> to vector<2x8xf32>
    %57 = vector.shape_cast %56 : vector<2x8xf32> to vector<2x8x1xf32>
    %58 = tpu.reciprocal %57 {approx = true} : vector<2x8x1xf32> -> vector<2x8x1xf32>
    %59 = vector.broadcast %58 : vector<2x8x1xf32> to vector<2x8x8xf32>
    %60 = arith.mulf %55, %59 : vector<2x8x8xf32>
    %61 = arith.truncf %60 : vector<2x8x8xf32> to vector<2x8x8xbf16>
    "tpu.trace_start"() <{level = 10 : i32, message = "bqk,bkd->bqd"}> : () -> ()
    %cst_25 = arith.constant dense<0.000000e+00> : vector<2x8x8xf32>
    %62 = tpu.matmul %61, %48, %cst_25 {dimension_numbers = #tpu.dot_dimension_numbers<[2], [1], [1], [2], [0, 0, 0, 1, 1, 2], [0], [0]>} : vector<2x8x8xbf16>, vector<2x8x8xbf16>, vector<2x8x8xf32> -> vector<2x8x8xf32>
    "tpu.trace_stop"() : () -> ()
    %63 = vector.shape_cast %62 : vector<2x8x8xf32> to vector<16x8xf32>
    %64 = arith.truncf %63 : vector<16x8xf32> to vector<16x8xbf16>
    %65 = vector.extract_strided_slice %29 {offsets = [0, 0, 0], sizes = [1, 8, 32], strides = [1, 1, 1]} : vector<4x8x32xbf16> to vector<1x8x32xbf16>
    %66 = vector.shape_cast %65 : vector<1x8x32xbf16> to vector<8x32xbf16>
    %cst_26 = arith.constant dense<0.000000e+00> : vector<16x32xf32>
    %67 = tpu.matmul %64, %66, %cst_26 {dimension_numbers = #tpu.dot_dimension_numbers<[1], [0], [0], [1], [0, 0, 1, 1], [], []>} : vector<16x8xbf16>, vector<8x32xbf16>, vector<16x32xf32> -> vector<16x32xf32>
    %68 = arith.addf %39, %67 : vector<16x32xf32>
    %69 = vector.extract_strided_slice %38 {offsets = [0, 8], sizes = [16, 8], strides = [1, 1]} : vector<16x32xf32> to vector<16x8xf32>
    %70 = vector.shape_cast %69 : vector<16x8xf32> to vector<2x8x8xf32>
    %71 = arith.truncf %70 : vector<2x8x8xf32> to vector<2x8x8xbf16>
    %72 = vector.extract_strided_slice %35 {offsets = [0, 8], sizes = [16, 8], strides = [1, 1]} : vector<16x32xf32> to vector<16x8xf32>
    %73 = vector.shape_cast %72 : vector<16x8xf32> to vector<2x8x8xf32>
    %74 = arith.truncf %73 : vector<2x8x8xf32> to vector<2x8x8xbf16>
    %75 = vector.extract_strided_slice %36 {offsets = [0, 8], sizes = [16, 8], strides = [1, 1]} : vector<16x32xf32> to vector<16x8xf32>
    %76 = vector.shape_cast %75 : vector<16x8xf32> to vector<2x8x8xf32>
    %77 = arith.truncf %76 : vector<2x8x8xf32> to vector<2x8x8xbf16>
    "tpu.trace_start"() <{level = 10 : i32, message = "bqd,bkd->bqk"}> : () -> ()
    %cst_27 = arith.constant dense<0.000000e+00> : vector<2x8x8xf32>
    %78 = tpu.matmul %71, %74, %cst_27 {dimension_numbers = #tpu.dot_dimension_numbers<[2], [2], [1], [1], [0, 0, 0, 1, 1, 1], [0], [0]>} : vector<2x8x8xbf16>, vector<2x8x8xbf16>, vector<2x8x8xf32> -> vector<2x8x8xf32>
    "tpu.trace_stop"() : () -> ()
    %79 = arith.addf %78, %25 : vector<2x8x8xf32>
    %cst_28 = arith.constant dense<0xFF800000> : vector<2x8xf32>
    %80 = vector.multi_reduction <maximumf>, %79, %cst_28 [2] : vector<2x8x8xf32> to vector<2x8xf32>
    %81 = vector.shape_cast %80 : vector<2x8xf32> to vector<2x8x1xf32>
    %82 = vector.broadcast %81 : vector<2x8x1xf32> to vector<2x8x8xf32>
    %83 = arith.subf %79, %82 : vector<2x8x8xf32>
    %84 = math.exp %83 : vector<2x8x8xf32>
    %cst_29 = arith.constant dense<0.000000e+00> : vector<2x8xf32>
    %85 = vector.multi_reduction <add>, %84, %cst_29 [2] : vector<2x8x8xf32> to vector<2x8xf32>
    %86 = vector.shape_cast %85 : vector<2x8xf32> to vector<2x8x1xf32>
    %87 = tpu.reciprocal %86 {approx = true} : vector<2x8x1xf32> -> vector<2x8x1xf32>
    %88 = vector.broadcast %87 : vector<2x8x1xf32> to vector<2x8x8xf32>
    %89 = arith.mulf %84, %88 : vector<2x8x8xf32>
    %90 = arith.truncf %89 : vector<2x8x8xf32> to vector<2x8x8xbf16>
    "tpu.trace_start"() <{level = 10 : i32, message = "bqk,bkd->bqd"}> : () -> ()
    %cst_30 = arith.constant dense<0.000000e+00> : vector<2x8x8xf32>
    %91 = tpu.matmul %90, %77, %cst_30 {dimension_numbers = #tpu.dot_dimension_numbers<[2], [1], [1], [2], [0, 0, 0, 1, 1, 2], [0], [0]>} : vector<2x8x8xbf16>, vector<2x8x8xbf16>, vector<2x8x8xf32> -> vector<2x8x8xf32>
    "tpu.trace_stop"() : () -> ()
    %92 = vector.shape_cast %91 : vector<2x8x8xf32> to vector<16x8xf32>
    %93 = arith.truncf %92 : vector<16x8xf32> to vector<16x8xbf16>
    %94 = vector.extract_strided_slice %29 {offsets = [1, 0, 0], sizes = [1, 8, 32], strides = [1, 1, 1]} : vector<4x8x32xbf16> to vector<1x8x32xbf16>
    %95 = vector.shape_cast %94 : vector<1x8x32xbf16> to vector<8x32xbf16>
    %cst_31 = arith.constant dense<0.000000e+00> : vector<16x32xf32>
    %96 = tpu.matmul %93, %95, %cst_31 {dimension_numbers = #tpu.dot_dimension_numbers<[1], [0], [0], [1], [0, 0, 1, 1], [], []>} : vector<16x8xbf16>, vector<8x32xbf16>, vector<16x32xf32> -> vector<16x32xf32>
    %97 = arith.addf %68, %96 : vector<16x32xf32>
    %98 = vector.extract_strided_slice %38 {offsets = [0, 16], sizes = [16, 8], strides = [1, 1]} : vector<16x32xf32> to vector<16x8xf32>
    %99 = vector.shape_cast %98 : vector<16x8xf32> to vector<2x8x8xf32>
    %100 = arith.truncf %99 : vector<2x8x8xf32> to vector<2x8x8xbf16>
    %101 = vector.extract_strided_slice %35 {offsets = [0, 16], sizes = [16, 8], strides = [1, 1]} : vector<16x32xf32> to vector<16x8xf32>
    %102 = vector.shape_cast %101 : vector<16x8xf32> to vector<2x8x8xf32>
    %103 = arith.truncf %102 : vector<2x8x8xf32> to vector<2x8x8xbf16>
    %104 = vector.extract_strided_slice %36 {offsets = [0, 16], sizes = [16, 8], strides = [1, 1]} : vector<16x32xf32> to vector<16x8xf32>
    %105 = vector.shape_cast %104 : vector<16x8xf32> to vector<2x8x8xf32>
    %106 = arith.truncf %105 : vector<2x8x8xf32> to vector<2x8x8xbf16>
    "tpu.trace_start"() <{level = 10 : i32, message = "bqd,bkd->bqk"}> : () -> ()
    %cst_32 = arith.constant dense<0.000000e+00> : vector<2x8x8xf32>
    %107 = tpu.matmul %100, %103, %cst_32 {dimension_numbers = #tpu.dot_dimension_numbers<[2], [2], [1], [1], [0, 0, 0, 1, 1, 1], [0], [0]>} : vector<2x8x8xbf16>, vector<2x8x8xbf16>, vector<2x8x8xf32> -> vector<2x8x8xf32>
    "tpu.trace_stop"() : () -> ()
    %108 = arith.addf %107, %25 : vector<2x8x8xf32>
    %cst_33 = arith.constant dense<0xFF800000> : vector<2x8xf32>
    %109 = vector.multi_reduction <maximumf>, %108, %cst_33 [2] : vector<2x8x8xf32> to vector<2x8xf32>
    %110 = vector.shape_cast %109 : vector<2x8xf32> to vector<2x8x1xf32>
    %111 = vector.broadcast %110 : vector<2x8x1xf32> to vector<2x8x8xf32>
    %112 = arith.subf %108, %111 : vector<2x8x8xf32>
    %113 = math.exp %112 : vector<2x8x8xf32>
    %cst_34 = arith.constant dense<0.000000e+00> : vector<2x8xf32>
    %114 = vector.multi_reduction <add>, %113, %cst_34 [2] : vector<2x8x8xf32> to vector<2x8xf32>
    %115 = vector.shape_cast %114 : vector<2x8xf32> to vector<2x8x1xf32>
    %116 = tpu.reciprocal %115 {approx = true} : vector<2x8x1xf32> -> vector<2x8x1xf32>
    %117 = vector.broadcast %116 : vector<2x8x1xf32> to vector<2x8x8xf32>
    %118 = arith.mulf %113, %117 : vector<2x8x8xf32>
    %119 = arith.truncf %118 : vector<2x8x8xf32> to vector<2x8x8xbf16>
    "tpu.trace_start"() <{level = 10 : i32, message = "bqk,bkd->bqd"}> : () -> ()
    %cst_35 = arith.constant dense<0.000000e+00> : vector<2x8x8xf32>
    %120 = tpu.matmul %119, %106, %cst_35 {dimension_numbers = #tpu.dot_dimension_numbers<[2], [1], [1], [2], [0, 0, 0, 1, 1, 2], [0], [0]>} : vector<2x8x8xbf16>, vector<2x8x8xbf16>, vector<2x8x8xf32> -> vector<2x8x8xf32>
    "tpu.trace_stop"() : () -> ()
    %121 = vector.shape_cast %120 : vector<2x8x8xf32> to vector<16x8xf32>
    %122 = arith.truncf %121 : vector<16x8xf32> to vector<16x8xbf16>
    %123 = vector.extract_strided_slice %29 {offsets = [2, 0, 0], sizes = [1, 8, 32], strides = [1, 1, 1]} : vector<4x8x32xbf16> to vector<1x8x32xbf16>
    %124 = vector.shape_cast %123 : vector<1x8x32xbf16> to vector<8x32xbf16>
    %cst_36 = arith.constant dense<0.000000e+00> : vector<16x32xf32>
    %125 = tpu.matmul %122, %124, %cst_36 {dimension_numbers = #tpu.dot_dimension_numbers<[1], [0], [0], [1], [0, 0, 1, 1], [], []>} : vector<16x8xbf16>, vector<8x32xbf16>, vector<16x32xf32> -> vector<16x32xf32>
    %126 = arith.addf %97, %125 : vector<16x32xf32>
    %127 = vector.extract_strided_slice %38 {offsets = [0, 24], sizes = [16, 8], strides = [1, 1]} : vector<16x32xf32> to vector<16x8xf32>
    %128 = vector.shape_cast %127 : vector<16x8xf32> to vector<2x8x8xf32>
    %129 = arith.truncf %128 : vector<2x8x8xf32> to vector<2x8x8xbf16>
    %130 = vector.extract_strided_slice %35 {offsets = [0, 24], sizes = [16, 8], strides = [1, 1]} : vector<16x32xf32> to vector<16x8xf32>
    %131 = vector.shape_cast %130 : vector<16x8xf32> to vector<2x8x8xf32>
    %132 = arith.truncf %131 : vector<2x8x8xf32> to vector<2x8x8xbf16>
    %133 = vector.extract_strided_slice %36 {offsets = [0, 24], sizes = [16, 8], strides = [1, 1]} : vector<16x32xf32> to vector<16x8xf32>
    %134 = vector.shape_cast %133 : vector<16x8xf32> to vector<2x8x8xf32>
    %135 = arith.truncf %134 : vector<2x8x8xf32> to vector<2x8x8xbf16>
    "tpu.trace_start"() <{level = 10 : i32, message = "bqd,bkd->bqk"}> : () -> ()
    %cst_37 = arith.constant dense<0.000000e+00> : vector<2x8x8xf32>
    %136 = tpu.matmul %129, %132, %cst_37 {dimension_numbers = #tpu.dot_dimension_numbers<[2], [2], [1], [1], [0, 0, 0, 1, 1, 1], [0], [0]>} : vector<2x8x8xbf16>, vector<2x8x8xbf16>, vector<2x8x8xf32> -> vector<2x8x8xf32>
    "tpu.trace_stop"() : () -> ()
    %137 = arith.addf %136, %25 : vector<2x8x8xf32>
    %cst_38 = arith.constant dense<0xFF800000> : vector<2x8xf32>
    %138 = vector.multi_reduction <maximumf>, %137, %cst_38 [2] : vector<2x8x8xf32> to vector<2x8xf32>
    %139 = vector.shape_cast %138 : vector<2x8xf32> to vector<2x8x1xf32>
    %140 = vector.broadcast %139 : vector<2x8x1xf32> to vector<2x8x8xf32>
    %141 = arith.subf %137, %140 : vector<2x8x8xf32>
    %142 = math.exp %141 : vector<2x8x8xf32>
    %cst_39 = arith.constant dense<0.000000e+00> : vector<2x8xf32>
    %143 = vector.multi_reduction <add>, %142, %cst_39 [2] : vector<2x8x8xf32> to vector<2x8xf32>
    %144 = vector.shape_cast %143 : vector<2x8xf32> to vector<2x8x1xf32>
    %145 = tpu.reciprocal %144 {approx = true} : vector<2x8x1xf32> -> vector<2x8x1xf32>
    %146 = vector.broadcast %145 : vector<2x8x1xf32> to vector<2x8x8xf32>
    %147 = arith.mulf %142, %146 : vector<2x8x8xf32>
    %148 = arith.truncf %147 : vector<2x8x8xf32> to vector<2x8x8xbf16>
    "tpu.trace_start"() <{level = 10 : i32, message = "bqk,bkd->bqd"}> : () -> ()
    %cst_40 = arith.constant dense<0.000000e+00> : vector<2x8x8xf32>
    %149 = tpu.matmul %148, %135, %cst_40 {dimension_numbers = #tpu.dot_dimension_numbers<[2], [1], [1], [2], [0, 0, 0, 1, 1, 2], [0], [0]>} : vector<2x8x8xbf16>, vector<2x8x8xbf16>, vector<2x8x8xf32> -> vector<2x8x8xf32>
    "tpu.trace_stop"() : () -> ()
    %150 = vector.shape_cast %149 : vector<2x8x8xf32> to vector<16x8xf32>
    %151 = arith.truncf %150 : vector<16x8xf32> to vector<16x8xbf16>
    %152 = vector.extract_strided_slice %29 {offsets = [3, 0, 0], sizes = [1, 8, 32], strides = [1, 1, 1]} : vector<4x8x32xbf16> to vector<1x8x32xbf16>
    %153 = vector.shape_cast %152 : vector<1x8x32xbf16> to vector<8x32xbf16>
    %cst_41 = arith.constant dense<0.000000e+00> : vector<16x32xf32>
    %154 = tpu.matmul %151, %153, %cst_41 {dimension_numbers = #tpu.dot_dimension_numbers<[1], [0], [0], [1], [0, 0, 1, 1], [], []>} : vector<16x8xbf16>, vector<8x32xbf16>, vector<16x32xf32> -> vector<16x32xf32>
    %155 = arith.addf %126, %154 : vector<16x32xf32>
    %156 = vector.broadcast %9 : vector<1x32xf32> to vector<16x32xf32>
    %157 = arith.addf %155, %156 : vector<16x32xf32>
    %158 = arith.addf %5, %157 : vector<16x32xf32>
    %cst_42 = arith.constant dense<0.000000e+00> : vector<16xf32>
    %159 = vector.multi_reduction <add>, %158, %cst_42 [1] : vector<16x32xf32> to vector<16xf32>
    %160 = vector.shape_cast %159 : vector<16xf32> to vector<16x1xf32>
    %cst_43 = arith.constant 3.200000e+01 : f32
    %161 = vector.broadcast %cst_43 : f32 to vector<16x1xf32>
    %162 = arith.divf %160, %161 : vector<16x1xf32>
    %163 = vector.broadcast %162 : vector<16x1xf32> to vector<16x32xf32>
    %164 = arith.subf %158, %163 : vector<16x32xf32>
    %165 = arith.mulf %164, %164 : vector<16x32xf32>
    %cst_44 = arith.constant dense<0.000000e+00> : vector<16xf32>
    %166 = vector.multi_reduction <add>, %165, %cst_44 [1] : vector<16x32xf32> to vector<16xf32>
    %167 = vector.shape_cast %166 : vector<16xf32> to vector<16x1xf32>
    %cst_45 = arith.constant 3.200000e+01 : f32
    %168 = vector.broadcast %cst_45 : f32 to vector<16x1xf32>
    %169 = arith.divf %167, %168 : vector<16x1xf32>
    %cst_46 = arith.constant 9.99999974E-6 : f32
    %170 = vector.broadcast %cst_46 : f32 to vector<16x1xf32>
    %171 = arith.addf %169, %170 : vector<16x1xf32>
    %172 = math.rsqrt %171 : vector<16x1xf32>
    %173 = vector.broadcast %172 : vector<16x1xf32> to vector<16x32xf32>
    %174 = arith.mulf %164, %173 : vector<16x32xf32>
    %175 = vector.broadcast %14 : vector<1x32xf32> to vector<16x32xf32>
    %176 = arith.mulf %174, %175 : vector<16x32xf32>
    %177 = vector.broadcast %15 : vector<1x32xf32> to vector<16x32xf32>
    %178 = arith.addf %176, %177 : vector<16x32xf32>
    %c0_47 = arith.constant 0 : index
    %c0_48 = arith.constant 0 : index
    %c0_49 = arith.constant 0 : index
    %179 = vector.load %arg7[%c0_47, %c0_48, %c0_49] : memref<1x32x96xbf16, #tpu.memory_space<vmem>>, vector<1x32x96xbf16>
    %180 = vector.shape_cast %179 : vector<1x32x96xbf16> to vector<32x96xbf16>
    %c0_50 = arith.constant 0 : index
    %c0_51 = arith.constant 0 : index
    %c0_52 = arith.constant 0 : index
    %c0_53 = arith.constant 0 : index
    %181 = vector.load %arg8[%c0_50, %c0_51, %c0_52, %c0_53] : memref<1x4x8x32xbf16, #tpu.memory_space<vmem>>, vector<1x4x8x32xbf16>
    %182 = vector.shape_cast %181 : vector<1x4x8x32xbf16> to vector<4x8x32xbf16>
    %183 = arith.truncf %178 : vector<16x32xf32> to vector<16x32xbf16>
    %184 = vector.extract_strided_slice %180 {offsets = [0, 0], sizes = [32, 32], strides = [1, 1]} : vector<32x96xbf16> to vector<32x32xbf16>
    %cst_54 = arith.constant dense<0.000000e+00> : vector<16x32xf32>
    %185 = tpu.matmul %183, %184, %cst_54 {dimension_numbers = #tpu.dot_dimension_numbers<[1], [0], [0], [1], [0, 0, 1, 1], [], []>} : vector<16x32xbf16>, vector<32x32xbf16>, vector<16x32xf32> -> vector<16x32xf32>
    %186 = vector.extract_strided_slice %10 {offsets = [0, 0], sizes = [1, 32], strides = [1, 1]} : vector<1x96xf32> to vector<1x32xf32>
    %187 = vector.broadcast %186 : vector<1x32xf32> to vector<16x32xf32>
    %188 = arith.addf %185, %187 : vector<16x32xf32>
    %189 = vector.extract_strided_slice %180 {offsets = [0, 32], sizes = [32, 64], strides = [1, 1]} : vector<32x96xbf16> to vector<32x64xbf16>
    %cst_55 = arith.constant dense<0.000000e+00> : vector<16x64xf32>
    %190 = tpu.matmul %1, %189, %cst_55 {dimension_numbers = #tpu.dot_dimension_numbers<[1], [0], [0], [1], [0, 0, 1, 1], [], []>} : vector<16x32xbf16>, vector<32x64xbf16>, vector<16x64xf32> -> vector<16x64xf32>
    %191 = vector.extract_strided_slice %10 {offsets = [0, 32], sizes = [1, 64], strides = [1, 1]} : vector<1x96xf32> to vector<1x64xf32>
    %192 = vector.broadcast %191 : vector<1x64xf32> to vector<16x64xf32>
    %193 = arith.addf %190, %192 : vector<16x64xf32>
    %194 = vector.extract_strided_slice %193 {offsets = [0, 0], sizes = [16, 32], strides = [1, 1]} : vector<16x64xf32> to vector<16x32xf32>
    %195 = vector.extract_strided_slice %193 {offsets = [0, 32], sizes = [16, 32], strides = [1, 1]} : vector<16x64xf32> to vector<16x32xf32>
    %cst_56 = arith.constant 0.353553385 : f32
    %196 = vector.broadcast %cst_56 : f32 to vector<16x32xf32>
    %197 = arith.mulf %188, %196 : vector<16x32xf32>
    %cst_57 = arith.constant 0.000000e+00 : f32
    %198 = vector.broadcast %cst_57 : f32 to vector<16x32xf32>
    %199 = vector.extract_strided_slice %197 {offsets = [0, 0], sizes = [16, 8], strides = [1, 1]} : vector<16x32xf32> to vector<16x8xf32>
    %200 = vector.shape_cast %199 : vector<16x8xf32> to vector<2x8x8xf32>
    %201 = arith.truncf %200 : vector<2x8x8xf32> to vector<2x8x8xbf16>
    %202 = vector.extract_strided_slice %194 {offsets = [0, 0], sizes = [16, 8], strides = [1, 1]} : vector<16x32xf32> to vector<16x8xf32>
    %203 = vector.shape_cast %202 : vector<16x8xf32> to vector<2x8x8xf32>
    %204 = arith.truncf %203 : vector<2x8x8xf32> to vector<2x8x8xbf16>
    %205 = vector.extract_strided_slice %195 {offsets = [0, 0], sizes = [16, 8], strides = [1, 1]} : vector<16x32xf32> to vector<16x8xf32>
    %206 = vector.shape_cast %205 : vector<16x8xf32> to vector<2x8x8xf32>
    %207 = arith.truncf %206 : vector<2x8x8xf32> to vector<2x8x8xbf16>
    "tpu.trace_start"() <{level = 10 : i32, message = "bqd,bkd->bqk"}> : () -> ()
    %cst_58 = arith.constant dense<0.000000e+00> : vector<2x8x8xf32>
    %208 = tpu.matmul %201, %204, %cst_58 {dimension_numbers = #tpu.dot_dimension_numbers<[2], [2], [1], [1], [0, 0, 0, 1, 1, 1], [0], [0]>} : vector<2x8x8xbf16>, vector<2x8x8xbf16>, vector<2x8x8xf32> -> vector<2x8x8xf32>
    "tpu.trace_stop"() : () -> ()
    %cst_59 = arith.constant dense<0xFF800000> : vector<2x8xf32>
    %209 = vector.multi_reduction <maximumf>, %208, %cst_59 [2] : vector<2x8x8xf32> to vector<2x8xf32>
    %210 = vector.shape_cast %209 : vector<2x8xf32> to vector<2x8x1xf32>
    %211 = vector.broadcast %210 : vector<2x8x1xf32> to vector<2x8x8xf32>
    %212 = arith.subf %208, %211 : vector<2x8x8xf32>
    %213 = math.exp %212 : vector<2x8x8xf32>
    %cst_60 = arith.constant dense<0.000000e+00> : vector<2x8xf32>
    %214 = vector.multi_reduction <add>, %213, %cst_60 [2] : vector<2x8x8xf32> to vector<2x8xf32>
    %215 = vector.shape_cast %214 : vector<2x8xf32> to vector<2x8x1xf32>
    %216 = tpu.reciprocal %215 {approx = true} : vector<2x8x1xf32> -> vector<2x8x1xf32>
    %217 = vector.broadcast %216 : vector<2x8x1xf32> to vector<2x8x8xf32>
    %218 = arith.mulf %213, %217 : vector<2x8x8xf32>
    %219 = arith.truncf %218 : vector<2x8x8xf32> to vector<2x8x8xbf16>
    "tpu.trace_start"() <{level = 10 : i32, message = "bqk,bkd->bqd"}> : () -> ()
    %cst_61 = arith.constant dense<0.000000e+00> : vector<2x8x8xf32>
    %220 = tpu.matmul %219, %207, %cst_61 {dimension_numbers = #tpu.dot_dimension_numbers<[2], [1], [1], [2], [0, 0, 0, 1, 1, 2], [0], [0]>} : vector<2x8x8xbf16>, vector<2x8x8xbf16>, vector<2x8x8xf32> -> vector<2x8x8xf32>
    "tpu.trace_stop"() : () -> ()
    %221 = vector.shape_cast %220 : vector<2x8x8xf32> to vector<16x8xf32>
    %222 = arith.truncf %221 : vector<16x8xf32> to vector<16x8xbf16>
    %223 = vector.extract_strided_slice %182 {offsets = [0, 0, 0], sizes = [1, 8, 32], strides = [1, 1, 1]} : vector<4x8x32xbf16> to vector<1x8x32xbf16>
    %224 = vector.shape_cast %223 : vector<1x8x32xbf16> to vector<8x32xbf16>
    %cst_62 = arith.constant dense<0.000000e+00> : vector<16x32xf32>
    %225 = tpu.matmul %222, %224, %cst_62 {dimension_numbers = #tpu.dot_dimension_numbers<[1], [0], [0], [1], [0, 0, 1, 1], [], []>} : vector<16x8xbf16>, vector<8x32xbf16>, vector<16x32xf32> -> vector<16x32xf32>
    %226 = arith.addf %198, %225 : vector<16x32xf32>
    %227 = vector.extract_strided_slice %197 {offsets = [0, 8], sizes = [16, 8], strides = [1, 1]} : vector<16x32xf32> to vector<16x8xf32>
    %228 = vector.shape_cast %227 : vector<16x8xf32> to vector<2x8x8xf32>
    %229 = arith.truncf %228 : vector<2x8x8xf32> to vector<2x8x8xbf16>
    %230 = vector.extract_strided_slice %194 {offsets = [0, 8], sizes = [16, 8], strides = [1, 1]} : vector<16x32xf32> to vector<16x8xf32>
    %231 = vector.shape_cast %230 : vector<16x8xf32> to vector<2x8x8xf32>
    %232 = arith.truncf %231 : vector<2x8x8xf32> to vector<2x8x8xbf16>
    %233 = vector.extract_strided_slice %195 {offsets = [0, 8], sizes = [16, 8], strides = [1, 1]} : vector<16x32xf32> to vector<16x8xf32>
    %234 = vector.shape_cast %233 : vector<16x8xf32> to vector<2x8x8xf32>
    %235 = arith.truncf %234 : vector<2x8x8xf32> to vector<2x8x8xbf16>
    "tpu.trace_start"() <{level = 10 : i32, message = "bqd,bkd->bqk"}> : () -> ()
    %cst_63 = arith.constant dense<0.000000e+00> : vector<2x8x8xf32>
    %236 = tpu.matmul %229, %232, %cst_63 {dimension_numbers = #tpu.dot_dimension_numbers<[2], [2], [1], [1], [0, 0, 0, 1, 1, 1], [0], [0]>} : vector<2x8x8xbf16>, vector<2x8x8xbf16>, vector<2x8x8xf32> -> vector<2x8x8xf32>
    "tpu.trace_stop"() : () -> ()
    %cst_64 = arith.constant dense<0xFF800000> : vector<2x8xf32>
    %237 = vector.multi_reduction <maximumf>, %236, %cst_64 [2] : vector<2x8x8xf32> to vector<2x8xf32>
    %238 = vector.shape_cast %237 : vector<2x8xf32> to vector<2x8x1xf32>
    %239 = vector.broadcast %238 : vector<2x8x1xf32> to vector<2x8x8xf32>
    %240 = arith.subf %236, %239 : vector<2x8x8xf32>
    %241 = math.exp %240 : vector<2x8x8xf32>
    %cst_65 = arith.constant dense<0.000000e+00> : vector<2x8xf32>
    %242 = vector.multi_reduction <add>, %241, %cst_65 [2] : vector<2x8x8xf32> to vector<2x8xf32>
    %243 = vector.shape_cast %242 : vector<2x8xf32> to vector<2x8x1xf32>
    %244 = tpu.reciprocal %243 {approx = true} : vector<2x8x1xf32> -> vector<2x8x1xf32>
    %245 = vector.broadcast %244 : vector<2x8x1xf32> to vector<2x8x8xf32>
    %246 = arith.mulf %241, %245 : vector<2x8x8xf32>
    %247 = arith.truncf %246 : vector<2x8x8xf32> to vector<2x8x8xbf16>
    "tpu.trace_start"() <{level = 10 : i32, message = "bqk,bkd->bqd"}> : () -> ()
    %cst_66 = arith.constant dense<0.000000e+00> : vector<2x8x8xf32>
    %248 = tpu.matmul %247, %235, %cst_66 {dimension_numbers = #tpu.dot_dimension_numbers<[2], [1], [1], [2], [0, 0, 0, 1, 1, 2], [0], [0]>} : vector<2x8x8xbf16>, vector<2x8x8xbf16>, vector<2x8x8xf32> -> vector<2x8x8xf32>
    "tpu.trace_stop"() : () -> ()
    %249 = vector.shape_cast %248 : vector<2x8x8xf32> to vector<16x8xf32>
    %250 = arith.truncf %249 : vector<16x8xf32> to vector<16x8xbf16>
    %251 = vector.extract_strided_slice %182 {offsets = [1, 0, 0], sizes = [1, 8, 32], strides = [1, 1, 1]} : vector<4x8x32xbf16> to vector<1x8x32xbf16>
    %252 = vector.shape_cast %251 : vector<1x8x32xbf16> to vector<8x32xbf16>
    %cst_67 = arith.constant dense<0.000000e+00> : vector<16x32xf32>
    %253 = tpu.matmul %250, %252, %cst_67 {dimension_numbers = #tpu.dot_dimension_numbers<[1], [0], [0], [1], [0, 0, 1, 1], [], []>} : vector<16x8xbf16>, vector<8x32xbf16>, vector<16x32xf32> -> vector<16x32xf32>
    %254 = arith.addf %226, %253 : vector<16x32xf32>
    %255 = vector.extract_strided_slice %197 {offsets = [0, 16], sizes = [16, 8], strides = [1, 1]} : vector<16x32xf32> to vector<16x8xf32>
    %256 = vector.shape_cast %255 : vector<16x8xf32> to vector<2x8x8xf32>
    %257 = arith.truncf %256 : vector<2x8x8xf32> to vector<2x8x8xbf16>
    %258 = vector.extract_strided_slice %194 {offsets = [0, 16], sizes = [16, 8], strides = [1, 1]} : vector<16x32xf32> to vector<16x8xf32>
    %259 = vector.shape_cast %258 : vector<16x8xf32> to vector<2x8x8xf32>
    %260 = arith.truncf %259 : vector<2x8x8xf32> to vector<2x8x8xbf16>
    %261 = vector.extract_strided_slice %195 {offsets = [0, 16], sizes = [16, 8], strides = [1, 1]} : vector<16x32xf32> to vector<16x8xf32>
    %262 = vector.shape_cast %261 : vector<16x8xf32> to vector<2x8x8xf32>
    %263 = arith.truncf %262 : vector<2x8x8xf32> to vector<2x8x8xbf16>
    "tpu.trace_start"() <{level = 10 : i32, message = "bqd,bkd->bqk"}> : () -> ()
    %cst_68 = arith.constant dense<0.000000e+00> : vector<2x8x8xf32>
    %264 = tpu.matmul %257, %260, %cst_68 {dimension_numbers = #tpu.dot_dimension_numbers<[2], [2], [1], [1], [0, 0, 0, 1, 1, 1], [0], [0]>} : vector<2x8x8xbf16>, vector<2x8x8xbf16>, vector<2x8x8xf32> -> vector<2x8x8xf32>
    "tpu.trace_stop"() : () -> ()
    %cst_69 = arith.constant dense<0xFF800000> : vector<2x8xf32>
    %265 = vector.multi_reduction <maximumf>, %264, %cst_69 [2] : vector<2x8x8xf32> to vector<2x8xf32>
    %266 = vector.shape_cast %265 : vector<2x8xf32> to vector<2x8x1xf32>
    %267 = vector.broadcast %266 : vector<2x8x1xf32> to vector<2x8x8xf32>
    %268 = arith.subf %264, %267 : vector<2x8x8xf32>
    %269 = math.exp %268 : vector<2x8x8xf32>
    %cst_70 = arith.constant dense<0.000000e+00> : vector<2x8xf32>
    %270 = vector.multi_reduction <add>, %269, %cst_70 [2] : vector<2x8x8xf32> to vector<2x8xf32>
    %271 = vector.shape_cast %270 : vector<2x8xf32> to vector<2x8x1xf32>
    %272 = tpu.reciprocal %271 {approx = true} : vector<2x8x1xf32> -> vector<2x8x1xf32>
    %273 = vector.broadcast %272 : vector<2x8x1xf32> to vector<2x8x8xf32>
    %274 = arith.mulf %269, %273 : vector<2x8x8xf32>
    %275 = arith.truncf %274 : vector<2x8x8xf32> to vector<2x8x8xbf16>
    "tpu.trace_start"() <{level = 10 : i32, message = "bqk,bkd->bqd"}> : () -> ()
    %cst_71 = arith.constant dense<0.000000e+00> : vector<2x8x8xf32>
    %276 = tpu.matmul %275, %263, %cst_71 {dimension_numbers = #tpu.dot_dimension_numbers<[2], [1], [1], [2], [0, 0, 0, 1, 1, 2], [0], [0]>} : vector<2x8x8xbf16>, vector<2x8x8xbf16>, vector<2x8x8xf32> -> vector<2x8x8xf32>
    "tpu.trace_stop"() : () -> ()
    %277 = vector.shape_cast %276 : vector<2x8x8xf32> to vector<16x8xf32>
    %278 = arith.truncf %277 : vector<16x8xf32> to vector<16x8xbf16>
    %279 = vector.extract_strided_slice %182 {offsets = [2, 0, 0], sizes = [1, 8, 32], strides = [1, 1, 1]} : vector<4x8x32xbf16> to vector<1x8x32xbf16>
    %280 = vector.shape_cast %279 : vector<1x8x32xbf16> to vector<8x32xbf16>
    %cst_72 = arith.constant dense<0.000000e+00> : vector<16x32xf32>
    %281 = tpu.matmul %278, %280, %cst_72 {dimension_numbers = #tpu.dot_dimension_numbers<[1], [0], [0], [1], [0, 0, 1, 1], [], []>} : vector<16x8xbf16>, vector<8x32xbf16>, vector<16x32xf32> -> vector<16x32xf32>
    %282 = arith.addf %254, %281 : vector<16x32xf32>
    %283 = vector.extract_strided_slice %197 {offsets = [0, 24], sizes = [16, 8], strides = [1, 1]} : vector<16x32xf32> to vector<16x8xf32>
    %284 = vector.shape_cast %283 : vector<16x8xf32> to vector<2x8x8xf32>
    %285 = arith.truncf %284 : vector<2x8x8xf32> to vector<2x8x8xbf16>
    %286 = vector.extract_strided_slice %194 {offsets = [0, 24], sizes = [16, 8], strides = [1, 1]} : vector<16x32xf32> to vector<16x8xf32>
    %287 = vector.shape_cast %286 : vector<16x8xf32> to vector<2x8x8xf32>
    %288 = arith.truncf %287 : vector<2x8x8xf32> to vector<2x8x8xbf16>
    %289 = vector.extract_strided_slice %195 {offsets = [0, 24], sizes = [16, 8], strides = [1, 1]} : vector<16x32xf32> to vector<16x8xf32>
    %290 = vector.shape_cast %289 : vector<16x8xf32> to vector<2x8x8xf32>
    %291 = arith.truncf %290 : vector<2x8x8xf32> to vector<2x8x8xbf16>
    "tpu.trace_start"() <{level = 10 : i32, message = "bqd,bkd->bqk"}> : () -> ()
    %cst_73 = arith.constant dense<0.000000e+00> : vector<2x8x8xf32>
    %292 = tpu.matmul %285, %288, %cst_73 {dimension_numbers = #tpu.dot_dimension_numbers<[2], [2], [1], [1], [0, 0, 0, 1, 1, 1], [0], [0]>} : vector<2x8x8xbf16>, vector<2x8x8xbf16>, vector<2x8x8xf32> -> vector<2x8x8xf32>
    "tpu.trace_stop"() : () -> ()
    %cst_74 = arith.constant dense<0xFF800000> : vector<2x8xf32>
    %293 = vector.multi_reduction <maximumf>, %292, %cst_74 [2] : vector<2x8x8xf32> to vector<2x8xf32>
    %294 = vector.shape_cast %293 : vector<2x8xf32> to vector<2x8x1xf32>
    %295 = vector.broadcast %294 : vector<2x8x1xf32> to vector<2x8x8xf32>
    %296 = arith.subf %292, %295 : vector<2x8x8xf32>
    %297 = math.exp %296 : vector<2x8x8xf32>
    %cst_75 = arith.constant dense<0.000000e+00> : vector<2x8xf32>
    %298 = vector.multi_reduction <add>, %297, %cst_75 [2] : vector<2x8x8xf32> to vector<2x8xf32>
    %299 = vector.shape_cast %298 : vector<2x8xf32> to vector<2x8x1xf32>
    %300 = tpu.reciprocal %299 {approx = true} : vector<2x8x1xf32> -> vector<2x8x1xf32>
    %301 = vector.broadcast %300 : vector<2x8x1xf32> to vector<2x8x8xf32>
    %302 = arith.mulf %297, %301 : vector<2x8x8xf32>
    %303 = arith.truncf %302 : vector<2x8x8xf32> to vector<2x8x8xbf16>
    "tpu.trace_start"() <{level = 10 : i32, message = "bqk,bkd->bqd"}> : () -> ()
    %cst_76 = arith.constant dense<0.000000e+00> : vector<2x8x8xf32>
    %304 = tpu.matmul %303, %291, %cst_76 {dimension_numbers = #tpu.dot_dimension_numbers<[2], [1], [1], [2], [0, 0, 0, 1, 1, 2], [0], [0]>} : vector<2x8x8xbf16>, vector<2x8x8xbf16>, vector<2x8x8xf32> -> vector<2x8x8xf32>
    "tpu.trace_stop"() : () -> ()
    %305 = vector.shape_cast %304 : vector<2x8x8xf32> to vector<16x8xf32>
    %306 = arith.truncf %305 : vector<16x8xf32> to vector<16x8xbf16>
    %307 = vector.extract_strided_slice %182 {offsets = [3, 0, 0], sizes = [1, 8, 32], strides = [1, 1, 1]} : vector<4x8x32xbf16> to vector<1x8x32xbf16>
    %308 = vector.shape_cast %307 : vector<1x8x32xbf16> to vector<8x32xbf16>
    %cst_77 = arith.constant dense<0.000000e+00> : vector<16x32xf32>
    %309 = tpu.matmul %306, %308, %cst_77 {dimension_numbers = #tpu.dot_dimension_numbers<[1], [0], [0], [1], [0, 0, 1, 1], [], []>} : vector<16x8xbf16>, vector<8x32xbf16>, vector<16x32xf32> -> vector<16x32xf32>
    %310 = arith.addf %282, %309 : vector<16x32xf32>
    %311 = vector.broadcast %11 : vector<1x32xf32> to vector<16x32xf32>
    %312 = arith.addf %310, %311 : vector<16x32xf32>
    %313 = arith.addf %178, %312 : vector<16x32xf32>
    %cst_78 = arith.constant dense<0.000000e+00> : vector<16xf32>
    %314 = vector.multi_reduction <add>, %313, %cst_78 [1] : vector<16x32xf32> to vector<16xf32>
    %315 = vector.shape_cast %314 : vector<16xf32> to vector<16x1xf32>
    %cst_79 = arith.constant 3.200000e+01 : f32
    %316 = vector.broadcast %cst_79 : f32 to vector<16x1xf32>
    %317 = arith.divf %315, %316 : vector<16x1xf32>
    %318 = vector.broadcast %317 : vector<16x1xf32> to vector<16x32xf32>
    %319 = arith.subf %313, %318 : vector<16x32xf32>
    %320 = arith.mulf %319, %319 : vector<16x32xf32>
    %cst_80 = arith.constant dense<0.000000e+00> : vector<16xf32>
    %321 = vector.multi_reduction <add>, %320, %cst_80 [1] : vector<16x32xf32> to vector<16xf32>
    %322 = vector.shape_cast %321 : vector<16xf32> to vector<16x1xf32>
    %cst_81 = arith.constant 3.200000e+01 : f32
    %323 = vector.broadcast %cst_81 : f32 to vector<16x1xf32>
    %324 = arith.divf %322, %323 : vector<16x1xf32>
    %cst_82 = arith.constant 9.99999974E-6 : f32
    %325 = vector.broadcast %cst_82 : f32 to vector<16x1xf32>
    %326 = arith.addf %324, %325 : vector<16x1xf32>
    %327 = math.rsqrt %326 : vector<16x1xf32>
    %328 = vector.broadcast %327 : vector<16x1xf32> to vector<16x32xf32>
    %329 = arith.mulf %319, %328 : vector<16x32xf32>
    %330 = vector.broadcast %16 : vector<1x32xf32> to vector<16x32xf32>
    %331 = arith.mulf %329, %330 : vector<16x32xf32>
    %332 = vector.broadcast %17 : vector<1x32xf32> to vector<16x32xf32>
    %333 = arith.addf %331, %332 : vector<16x32xf32>
    %334 = arith.truncf %333 : vector<16x32xf32> to vector<16x32xbf16>
    %c0_83 = arith.constant 0 : index
    %c0_84 = arith.constant 0 : index
    %c0_85 = arith.constant 0 : index
    %335 = vector.load %arg9[%c0_83, %c0_84, %c0_85] : memref<1x32x64xbf16, #tpu.memory_space<vmem>>, vector<1x32x64xbf16>
    %336 = vector.shape_cast %335 : vector<1x32x64xbf16> to vector<32x64xbf16>
    %cst_86 = arith.constant dense<0.000000e+00> : vector<16x64xf32>
    %337 = tpu.matmul %334, %336, %cst_86 {dimension_numbers = #tpu.dot_dimension_numbers<[1], [0], [0], [1], [0, 0, 1, 1], [], []>} : vector<16x32xbf16>, vector<32x64xbf16>, vector<16x64xf32> -> vector<16x64xf32>
    %338 = vector.broadcast %12 : vector<1x64xf32> to vector<16x64xf32>
    %339 = arith.addf %337, %338 : vector<16x64xf32>
    %cst_87 = arith.constant 0.000000e+00 : f32
    %340 = vector.broadcast %cst_87 : f32 to vector<16x64xf32>
    %341 = arith.maximumf %339, %340 : vector<16x64xf32>
    %342 = arith.truncf %341 : vector<16x64xf32> to vector<16x64xbf16>
    %c0_88 = arith.constant 0 : index
    %c0_89 = arith.constant 0 : index
    %c0_90 = arith.constant 0 : index
    %343 = vector.load %arg10[%c0_88, %c0_89, %c0_90] : memref<1x64x32xbf16, #tpu.memory_space<vmem>>, vector<1x64x32xbf16>
    %344 = vector.shape_cast %343 : vector<1x64x32xbf16> to vector<64x32xbf16>
    %cst_91 = arith.constant dense<0.000000e+00> : vector<16x32xf32>
    %345 = tpu.matmul %342, %344, %cst_91 {dimension_numbers = #tpu.dot_dimension_numbers<[1], [0], [0], [1], [0, 0, 1, 1], [], []>} : vector<16x64xbf16>, vector<64x32xbf16>, vector<16x32xf32> -> vector<16x32xf32>
    %346 = vector.broadcast %13 : vector<1x32xf32> to vector<16x32xf32>
    %347 = arith.addf %345, %346 : vector<16x32xf32>
    %348 = arith.addf %333, %347 : vector<16x32xf32>
    %cst_92 = arith.constant dense<0.000000e+00> : vector<16xf32>
    %349 = vector.multi_reduction <add>, %348, %cst_92 [1] : vector<16x32xf32> to vector<16xf32>
    %350 = vector.shape_cast %349 : vector<16xf32> to vector<16x1xf32>
    %cst_93 = arith.constant 3.200000e+01 : f32
    %351 = vector.broadcast %cst_93 : f32 to vector<16x1xf32>
    %352 = arith.divf %350, %351 : vector<16x1xf32>
    %353 = vector.broadcast %352 : vector<16x1xf32> to vector<16x32xf32>
    %354 = arith.subf %348, %353 : vector<16x32xf32>
    %355 = arith.mulf %354, %354 : vector<16x32xf32>
    %cst_94 = arith.constant dense<0.000000e+00> : vector<16xf32>
    %356 = vector.multi_reduction <add>, %355, %cst_94 [1] : vector<16x32xf32> to vector<16xf32>
    %357 = vector.shape_cast %356 : vector<16xf32> to vector<16x1xf32>
    %cst_95 = arith.constant 3.200000e+01 : f32
    %358 = vector.broadcast %cst_95 : f32 to vector<16x1xf32>
    %359 = arith.divf %357, %358 : vector<16x1xf32>
    %cst_96 = arith.constant 9.99999974E-6 : f32
    %360 = vector.broadcast %cst_96 : f32 to vector<16x1xf32>
    %361 = arith.addf %359, %360 : vector<16x1xf32>
    %362 = math.rsqrt %361 : vector<16x1xf32>
    %363 = vector.broadcast %362 : vector<16x1xf32> to vector<16x32xf32>
    %364 = arith.mulf %354, %363 : vector<16x32xf32>
    %365 = vector.broadcast %18 : vector<1x32xf32> to vector<16x32xf32>
    %366 = arith.mulf %364, %365 : vector<16x32xf32>
    %367 = vector.broadcast %19 : vector<1x32xf32> to vector<16x32xf32>
    %368 = arith.addf %366, %367 : vector<16x32xf32>
    %c0_97 = arith.constant 0 : index
    %c0_98 = arith.constant 0 : index
    %369 = vector.load %arg13[%c0_97, %c0_98] : memref<16x32xf32, #tpu.memory_space<vmem>>, vector<16x32xf32>
    tpu.vector_store %arg13[%c0_97, %c0_98], %368 {strides = array<i32>} : memref<16x32xf32, #tpu.memory_space<vmem>>, vector<16x32xf32>,
    %c1_i32 = arith.constant 1 : i32
    %370 = arith.cmpi eq, %arg1, %c1_i32 : i32
    %371 = arith.extui %370 : i1 to i32
    %c0_i32_99 = arith.constant 0 : i32
    %372 = arith.cmpi ne, %371, %c0_i32_99 : i32
    scf.if %372 {
      %373 = vector.shape_cast %368 : vector<16x32xf32> to vector<2x8x32xf32>
      %c0_100 = arith.constant 0 : index
      %c0_101 = arith.constant 0 : index
      %c0_102 = arith.constant 0 : index
      %374 = vector.load %arg12[%c0_100, %c0_101, %c0_102] : memref<2x8x32xf32, #tpu.memory_space<vmem>>, vector<2x8x32xf32>
      tpu.vector_store %arg12[%c0_100, %c0_101, %c0_102], %373 {strides = array<i32>} : memref<2x8x32xf32, #tpu.memory_space<vmem>>, vector<2x8x32xf32>,
    } else {
    }
    return
  }
  func.func @transform_0(%arg0: i32, %arg1: i32) -> (i32, i32, i32) {
    %c0_i32 = arith.constant 0 : i32
    %c0_i32_0 = arith.constant 0 : i32
    %c0_i32_1 = arith.constant 0 : i32
    return %arg0, %c0_i32, %c0_i32_0 : i32, i32, i32
  }
  func.func @transform_1(%arg0: i32, %arg1: i32) -> (i32, i32) {
    %c0_i32 = arith.constant 0 : i32
    %c0_i32_0 = arith.constant 0 : i32
    %c0_i32_1 = arith.constant 0 : i32
    return %c0_i32, %c0_i32_0 : i32, i32
  }
  func.func @transform_2(%arg0: i32, %arg1: i32) -> (i32, i32, i32) {
    %c0_i32 = arith.constant 0 : i32
    %c0_i32_0 = arith.constant 0 : i32
    %c0_i32_1 = arith.constant 0 : i32
    return %arg0, %c0_i32, %c0_i32_0 : i32, i32, i32
  }
  func.func @transform_3(%arg0: i32, %arg1: i32) -> (i32, i32, i32) {
    %c0_i32 = arith.constant 0 : i32
    %c0_i32_0 = arith.constant 0 : i32
    %c0_i32_1 = arith.constant 0 : i32
    return %arg1, %c0_i32, %c0_i32_0 : i32, i32, i32
  }
  func.func @transform_4(%arg0: i32, %arg1: i32) -> (i32, i32, i32, i32) {
    %c0_i32 = arith.constant 0 : i32
    %c0_i32_0 = arith.constant 0 : i32
    %c0_i32_1 = arith.constant 0 : i32
    %c0_i32_2 = arith.constant 0 : i32
    return %arg1, %c0_i32, %c0_i32_0, %c0_i32_1 : i32, i32, i32, i32
  }
  func.func @transform_5(%arg0: i32, %arg1: i32) -> (i32, i32, i32) {
    %c0_i32 = arith.constant 0 : i32
    %c0_i32_0 = arith.constant 0 : i32
    %c0_i32_1 = arith.constant 0 : i32
    return %arg1, %c0_i32, %c0_i32_0 : i32, i32, i32
  }
  func.func @transform_6(%arg0: i32, %arg1: i32) -> (i32, i32, i32, i32) {
    %c0_i32 = arith.constant 0 : i32
    %c0_i32_0 = arith.constant 0 : i32
    %c0_i32_1 = arith.constant 0 : i32
    %c0_i32_2 = arith.constant 0 : i32
    return %arg1, %c0_i32, %c0_i32_0, %c0_i32_1 : i32, i32, i32, i32
  }
  func.func @transform_7(%arg0: i32, %arg1: i32) -> (i32, i32, i32) {
    %c0_i32 = arith.constant 0 : i32
    %c0_i32_0 = arith.constant 0 : i32
    %c0_i32_1 = arith.constant 0 : i32
    return %arg1, %c0_i32, %c0_i32_0 : i32, i32, i32
  }
  func.func @transform_8(%arg0: i32, %arg1: i32) -> (i32, i32, i32) {
    %c0_i32 = arith.constant 0 : i32
    %c0_i32_0 = arith.constant 0 : i32
    %c0_i32_1 = arith.constant 0 : i32
    return %arg1, %c0_i32, %c0_i32_0 : i32, i32, i32
  }
  func.func @transform_9(%arg0: i32, %arg1: i32) -> (i32, i32, i32) {
    %c0_i32 = arith.constant 0 : i32
    %c0_i32_0 = arith.constant 0 : i32
    %c0_i32_1 = arith.constant 0 : i32
    return %arg1, %c0_i32, %c0_i32_0 : i32, i32, i32
  }
  func.func @transform_10(%arg0: i32, %arg1: i32) -> (i32, i32, i32) {
    %c0_i32 = arith.constant 0 : i32
    %c0_i32_0 = arith.constant 0 : i32
    %c0_i32_1 = arith.constant 0 : i32
    return %arg0, %c0_i32, %c0_i32_0 : i32, i32, i32
  }
}

</mosaic_0001>

<llo_original>
// kernel: tpu_custom_call.1
$region0: #{tpu_custom_call.1}
  #allocation0 [shape = 'u32[]', space=smem, size = 0x4, offset = 0x4, fixed_abs, tag = 'smem constant byte address 0x4 - core index']
  #allocation1 [shape = 'u32[144,128]{1,0:T(1,128)}', space=vmem, size = 0x12000, scoped, tag = 'internal scratch']
  #allocation2 [shape = 'f32[16,32]{1,0:T(8,128)}', space=vmem, size = 0x2000, scoped, tag = 'scratch operand']
  %s0 = inlined_call_operand.hbm [shape: bf16[2,8,32], index: 0, kind: input, shape index: {}]
  %s1 = inlined_call_operand.hbm [shape: f32[8,8], index: 1, kind: input, shape index: {}]
  %s2 = inlined_call_operand.vmem [shape: f32[2,1,8], index: 2, kind: input, shape index: {}]
  %s3 = inlined_call_operand.vmem [shape: bf16[2,32,96], index: 3, kind: input, shape index: {}]
  %s4 = inlined_call_operand.vmem [shape: bf16[2,4,8,32], index: 4, kind: input, shape index: {}]
  %s5 = inlined_call_operand.vmem [shape: bf16[2,32,96], index: 5, kind: input, shape index: {}]
  %s6 = inlined_call_operand.vmem [shape: bf16[2,4,8,32], index: 6, kind: input, shape index: {}]
  %s7 = inlined_call_operand.hbm [shape: bf16[2,32,64], index: 7, kind: input, shape index: {}]
  %s8 = inlined_call_operand.vmem [shape: bf16[2,64,32], index: 8, kind: input, shape index: {}]
  %s9 = inlined_call_operand.vmem [shape: f32[2,12,128], index: 9, kind: input, shape index: {}]
  %s10 = inlined_call_operand.hbm [shape: f32[2,8,32], index: 10, kind: output, shape index: {}]
  %s11 = sld [smem:[#allocation0]]
  $region93: #{tpu_custom_call.1} parent=0
    _
  %s13 = ssub.s32 1, %s11
  %s14 = scalar_select 0, %s13, %s11
  $region1: #{tpu_custom_call.1} parent=0
    #allocation3 [shape = 'u8[4096]{0}', space=vmem, size = 0x1000, scoped, tag = 'input window, operand 0, single buffered']
    #allocation4 [shape = 's32[2]{0}', space=sflag, size = 0x8, scoped, tag = 'scoped memory for tpu_custom_call.1']
    #allocation5 [shape = 's32[2]{0}', space=sflag, size = 0x8, scoped, tag = 'scoped memory for tpu_custom_call.1']
    #allocation6 [shape = 'u8[4096]{0}', space=vmem, size = 0x1000, scoped, tag = 'input window, operand 1, single buffered']
    #allocation7 [shape = 's32[1]{0}', space=sflag, size = 0x4, scoped, tag = 'scoped memory for tpu_custom_call.1']
    #allocation8 [shape = 'u8[16384]{0}', space=vmem, size = 0x4000, scoped, tag = 'input window, operand 7']
    #allocation9 [shape = 'u8[8192]{0}', space=vmem, size = 0x2000, scoped, tag = 'output window, operand 0, single buffered']
    %15 = vsyncpa [#allocation4], 0
    %16 = vsyncpa [#allocation7], 0
    %17 = vsyncpa [#allocation5], 0
    loop: start=0, step=1, limit=4
    $region2: #{tpu_custom_call.1} parent=1 // loop_pre_header
      _
    $region3: #{tpu_custom_call.1} parent=1 // loop_header
      %s19 = sphi 0, %s23
      %p20 = scmp.ge.s32.totalorder %s19, 4
      %s26 = sphi 0, %s38
      %s27 = sphi 0, %s34
      %s28 = sphi 0, %s26
      %s29 = sphi 0, %s27
      %s30 = sphi 0, %s28
      %s31 = sphi 0, %s29
      %s41 = sphi 0, %s43
      %s44 = sphi 0, %s41
      %s45 = sphi 0, %s44
      %s61 = sphi 0, %s45
      %s65 = sphi 0, %s65
      %s67 = sphi 0, %s65
      %s68 = sphi 0, %s67
      %s82 = sphi 0, %s68
      %s88 = sphi 0, %s90
      %s91 = sphi 0, %s88
      %s92 = sphi 0, %s91
      %s108 = sphi 0, %s92
      %s114 = sphi 0, %s116
      %s117 = sphi 0, %s114
      %s118 = sphi 0, %s117
      %s134 = sphi 0, %s118
      %s140 = sphi 0, %s142
      %s143 = sphi 0, %s140
      %s144 = sphi 0, %s143
      %s160 = sphi 0, %s144
      %s166 = sphi 0, %s168
      %s169 = sphi 0, %s166
      %s170 = sphi 0, %s169
      %s186 = sphi 0, %s170
      %s192 = sphi 0, %s194
      %s195 = sphi 0, %s192
      %s196 = sphi 0, %s195
      %s212 = sphi 0, %s196
      %s218 = sphi 0, %s220
      %s221 = sphi 0, %s218
      %s222 = sphi 0, %s221
      %s238 = sphi 0, %s222
      %s244 = sphi 0, %s246
      %s247 = sphi 0, %s244
      %s248 = sphi 0, %s247
      %s264 = sphi 0, %s248
      %s270 = sphi 0, %s272
      %s273 = sphi 0, %s270
      %s274 = sphi 0, %s273
      %s290 = sphi 0, %s274
      %s296 = sphi 0, %s298
      %s299 = sphi 0, %s296
      %s300 = sphi 0, %s299
      %s316 = sphi 0, %s300
    $region4: #{tpu_custom_call.1} parent=1 // loop_header_branch
      %22 = sbr.rel (%p20) target = $region8
    $region5: #{tpu_custom_call.1} parent=1 // loop_body
      %s24 = ssub.s32 %s19, 1
      %s25 = ssub.s32 %s19, 2
      %s32 = sadd.s32 1, %s27
      %p33 = scmp.ge.s32.totalorder %s32, 2
      %s34 = scalar_select %p33, 0, %s32
      %s35 = sadd.s32 1, %s26
      %s36 = scalar_select %p33, %s35, %s26
      %p37 = scmp.ge.s32.totalorder %s36, 1
      %s38 = scalar_select %p37, 0, %s36
      %s39 = ssub.s32 %s26, %s38
      %p40 = scmp.eq.s32.totalorder %s39, 0
      %s42 = sadd.s32 %s41, 1
      %s43 = scalar_select %p40, %s41, %s42
      %p46 = pneg %p40
      %p47 = scmp.eq.s32.totalorder %s19, 1
      %p48 = por %p46, %p47
      %p49 = scmp.ne.s32.totalorder %s41, %s44
      %p50 = scmp.eq.s32.totalorder %s19, 0
      %p51 = por %p49, %p50
      %p52 = scmp.ne.s32.totalorder %s41, %s44
      %p53 = scmp.eq.s32.totalorder %s24, 1
      %p54 = por %p52, %p53
      %p55 = scmp.ne.s32.totalorder %s44, %s45
      %p56 = scmp.eq.s32.totalorder %s24, 0
      %p57 = por %p55, %p56
      %p58 = scmp.ne.s32.totalorder %s44, %s45
      %p59 = scmp.eq.s32.totalorder %s25, 1
      %p60 = por %p58, %p59
      %p62 = scmp.ne.s32.totalorder %s45, %s61
      %p63 = scmp.eq.s32.totalorder %s25, 0
      %p64 = por %p62, %p63
      %s66 = sadd.s32 %s65, 1
      %p69 = scmp.eq.s32.totalorder %s19, 1
      %p70 = scmp.ne.s32.totalorder %s65, %s67
      %p71 = scmp.eq.s32.totalorder %s19, 0
      %p72 = por %p70, %p71
      %p73 = scmp.ne.s32.totalorder %s65, %s67
      %p74 = scmp.eq.s32.totalorder %s24, 1
      %p75 = por %p73, %p74
      %p76 = scmp.ne.s32.totalorder %s67, %s68
      %p77 = scmp.eq.s32.totalorder %s24, 0
      %p78 = por %p76, %p77
      %p79 = scmp.ne.s32.totalorder %s67, %s68
      %p80 = scmp.eq.s32.totalorder %s25, 1
      %p81 = por %p79, %p80
      %p83 = scmp.ne.s32.totalorder %s68, %s82
      %p84 = scmp.eq.s32.totalorder %s25, 0
      %p85 = por %p83, %p84
      %s86 = ssub.s32 %s26, %s38
      %p87 = scmp.eq.s32.totalorder %s86, 0
      %s89 = sadd.s32 %s88, 1
      %s90 = scalar_select %p87, %s88, %s89
      %p93 = pneg %p87
      %p94 = scmp.eq.s32.totalorder %s19, 1
      %p95 = por %p93, %p94
      %p96 = scmp.ne.s32.totalorder %s88, %s91
      %p97 = scmp.eq.s32.totalorder %s19, 0
      %p98 = por %p96, %p97
      %p99 = scmp.ne.s32.totalorder %s88, %s91
      %p100 = scmp.eq.s32.totalorder %s24, 1
      %p101 = por %p99, %p100
      %p102 = scmp.ne.s32.totalorder %s91, %s92
      %p103 = scmp.eq.s32.totalorder %s24, 0
      %p104 = por %p102, %p103
      %p105 = scmp.ne.s32.totalorder %s91, %s92
      %p106 = scmp.eq.s32.totalorder %s25, 1
      %p107 = por %p105, %p106
      %p109 = scmp.ne.s32.totalorder %s92, %s108
      %p110 = scmp.eq.s32.totalorder %s25, 0
      %p111 = por %p109, %p110
      %s112 = ssub.s32 %s27, %s34
      %p113 = scmp.eq.s32.totalorder %s112, 0
      %s115 = sadd.s32 %s114, 1
      %s116 = scalar_select %p113, %s114, %s115
      %p119 = pneg %p113
      %p120 = scmp.eq.s32.totalorder %s19, 1
      %p121 = por %p119, %p120
      %p122 = scmp.ne.s32.totalorder %s114, %s117
      %p123 = scmp.eq.s32.totalorder %s19, 0
      %p124 = por %p122, %p123
      %p125 = scmp.ne.s32.totalorder %s114, %s117
      %p126 = scmp.eq.s32.totalorder %s24, 1
      %p127 = por %p125, %p126
      %p128 = scmp.ne.s32.totalorder %s117, %s118
      %p129 = scmp.eq.s32.totalorder %s24, 0
      %p130 = por %p128, %p129
      %p131 = scmp.ne.s32.totalorder %s117, %s118
      %p132 = scmp.eq.s32.totalorder %s25, 1
      %p133 = por %p131, %p132
      %p135 = scmp.ne.s32.totalorder %s118, %s134
      %p136 = scmp.eq.s32.totalorder %s25, 0
      %p137 = por %p135, %p136
      %s138 = ssub.s32 %s27, %s34
      %p139 = scmp.eq.s32.totalorder %s138, 0
      %s141 = sadd.s32 %s140, 1
      %s142 = scalar_select %p139, %s140, %s141
      %p145 = pneg %p139
      %p146 = scmp.eq.s32.totalorder %s19, 1
      %p147 = por %p145, %p146
      %p148 = scmp.ne.s32.totalorder %s140, %s143
      %p149 = scmp.eq.s32.totalorder %s19, 0
      %p150 = por %p148, %p149
      %p151 = scmp.ne.s32.totalorder %s140, %s143
      %p152 = scmp.eq.s32.totalorder %s24, 1
      %p153 = por %p151, %p152
      %p154 = scmp.ne.s32.totalorder %s143, %s144
      %p155 = scmp.eq.s32.totalorder %s24, 0
      %p156 = por %p154, %p155
      %p157 = scmp.ne.s32.totalorder %s143, %s144
      %p158 = scmp.eq.s32.totalorder %s25, 1
      %p159 = por %p157, %p158
      %p161 = scmp.ne.s32.totalorder %s144, %s160
      %p162 = scmp.eq.s32.totalorder %s25, 0
      %p163 = por %p161, %p162
      %s164 = ssub.s32 %s27, %s34
      %p165 = scmp.eq.s32.totalorder %s164, 0
      %s167 = sadd.s32 %s166, 1
      %s168 = scalar_select %p165, %s166, %s167
      %p171 = pneg %p165
      %p172 = scmp.eq.s32.totalorder %s19, 1
      %p173 = por %p171, %p172
      %p174 = scmp.ne.s32.totalorder %s166, %s169
      %p175 = scmp.eq.s32.totalorder %s19, 0
      %p176 = por %p174, %p175
      %p177 = scmp.ne.s32.totalorder %s166, %s169
      %p178 = scmp.eq.s32.totalorder %s24, 1
      %p179 = por %p177, %p178
      %p180 = scmp.ne.s32.totalorder %s169, %s170
      %p181 = scmp.eq.s32.totalorder %s24, 0
      %p182 = por %p180, %p181
      %p183 = scmp.ne.s32.totalorder %s169, %s170
      %p184 = scmp.eq.s32.totalorder %s25, 1
      %p185 = por %p183, %p184
      %p187 = scmp.ne.s32.totalorder %s170, %s186
      %p188 = scmp.eq.s32.totalorder %s25, 0
      %p189 = por %p187, %p188
      %s190 = ssub.s32 %s27, %s34
      %p191 = scmp.eq.s32.totalorder %s190, 0
      %s193 = sadd.s32 %s192, 1
      %s194 = scalar_select %p191, %s192, %s193
      %p197 = pneg %p191
      %p198 = scmp.eq.s32.totalorder %s19, 1
      %p199 = por %p197, %p198
      %p200 = scmp.ne.s32.totalorder %s192, %s195
      %p201 = scmp.eq.s32.totalorder %s19, 0
      %p202 = por %p200, %p201
      %p203 = scmp.ne.s32.totalorder %s192, %s195
      %p204 = scmp.eq.s32.totalorder %s24, 1
      %p205 = por %p203, %p204
      %p206 = scmp.ne.s32.totalorder %s195, %s196
      %p207 = scmp.eq.s32.totalorder %s24, 0
      %p208 = por %p206, %p207
      %p209 = scmp.ne.s32.totalorder %s195, %s196
      %p210 = scmp.eq.s32.totalorder %s25, 1
      %p211 = por %p209, %p210
      %p213 = scmp.ne.s32.totalorder %s196, %s212
      %p214 = scmp.eq.s32.totalorder %s25, 0
      %p215 = por %p213, %p214
      %s216 = ssub.s32 %s27, %s34
      %p217 = scmp.eq.s32.totalorder %s216, 0
      %s219 = sadd.s32 %s218, 1
      %s220 = scalar_select %p217, %s218, %s219
      %p223 = pneg %p217
      %p224 = scmp.eq.s32.totalorder %s19, 1
      %p225 = por %p223, %p224
      %p226 = scmp.ne.s32.totalorder %s218, %s221
      %p227 = scmp.eq.s32.totalorder %s19, 0
      %p228 = por %p226, %p227
      %p229 = scmp.ne.s32.totalorder %s218, %s221
      %p230 = scmp.eq.s32.totalorder %s24, 1
      %p231 = por %p229, %p230
      %p232 = scmp.ne.s32.totalorder %s221, %s222
      %p233 = scmp.eq.s32.totalorder %s24, 0
      %p234 = por %p232, %p233
      %p235 = scmp.ne.s32.totalorder %s221, %s222
      %p236 = scmp.eq.s32.totalorder %s25, 1
      %p237 = por %p235, %p236
      %p239 = scmp.ne.s32.totalorder %s222, %s238
      %p240 = scmp.eq.s32.totalorder %s25, 0
      %p241 = por %p239, %p240
      %s242 = ssub.s32 %s27, %s34
      %p243 = scmp.eq.s32.totalorder %s242, 0
      %s245 = sadd.s32 %s244, 1
      %s246 = scalar_select %p243, %s244, %s245
      %p249 = pneg %p243
      %p250 = scmp.eq.s32.totalorder %s19, 1
      %p251 = por %p249, %p250
      %p252 = scmp.ne.s32.totalorder %s244, %s247
      %p253 = scmp.eq.s32.totalorder %s19, 0
      %p254 = por %p252, %p253
      %p255 = scmp.ne.s32.totalorder %s244, %s247
      %p256 = scmp.eq.s32.totalorder %s24, 1
      %p257 = por %p255, %p256
      %p258 = scmp.ne.s32.totalorder %s247, %s248
      %p259 = scmp.eq.s32.totalorder %s24, 0
      %p260 = por %p258, %p259
      %p261 = scmp.ne.s32.totalorder %s247, %s248
      %p262 = scmp.eq.s32.totalorder %s25, 1
      %p263 = por %p261, %p262
      %p265 = scmp.ne.s32.totalorder %s248, %s264
      %p266 = scmp.eq.s32.totalorder %s25, 0
      %p267 = por %p265, %p266
      %s268 = ssub.s32 %s27, %s34
      %p269 = scmp.eq.s32.totalorder %s268, 0
      %s271 = sadd.s32 %s270, 1
      %s272 = scalar_select %p269, %s270, %s271
      %p275 = pneg %p269
      %p276 = scmp.eq.s32.totalorder %s19, 1
      %p277 = por %p275, %p276
      %p278 = scmp.ne.s32.totalorder %s270, %s273
      %p279 = scmp.eq.s32.totalorder %s19, 0
      %p280 = por %p278, %p279
      %p281 = scmp.ne.s32.totalorder %s270, %s273
      %p282 = scmp.eq.s32.totalorder %s24, 1
      %p283 = por %p281, %p282
      %p284 = scmp.ne.s32.totalorder %s273, %s274
      %p285 = scmp.eq.s32.totalorder %s24, 0
      %p286 = por %p284, %p285
      %p287 = scmp.ne.s32.totalorder %s273, %s274
      %p288 = scmp.eq.s32.totalorder %s25, 1
      %p289 = por %p287, %p288
      %p291 = scmp.ne.s32.totalorder %s274, %s290
      %p292 = scmp.eq.s32.totalorder %s25, 0
      %p293 = por %p291, %p292
      %s294 = ssub.s32 %s26, %s38
      %p295 = scmp.eq.s32.totalorder %s294, 0
      %s297 = sadd.s32 %s296, 1
      %s298 = scalar_select %p295, %s296, %s297
      %p301 = pneg %p295
      %p302 = scmp.eq.s32.totalorder %s19, 1
      %p303 = por %p301, %p302
      %p304 = scmp.ne.s32.totalorder %s296, %s299
      %p305 = scmp.eq.s32.totalorder %s19, 0
      %p306 = por %p304, %p305
      %p307 = scmp.ne.s32.totalorder %s296, %s299
      %p308 = scmp.eq.s32.totalorder %s24, 1
      %p309 = por %p307, %p308
      %p310 = scmp.ne.s32.totalorder %s299, %s300
      %p311 = scmp.eq.s32.totalorder %s24, 0
      %p312 = por %p310, %p311
      %p313 = scmp.ne.s32.totalorder %s299, %s300
      %p314 = scmp.eq.s32.totalorder %s25, 1
      %p315 = por %p313, %p314
      %p317 = scmp.ne.s32.totalorder %s300, %s316
      %p318 = scmp.eq.s32.totalorder %s25, 0
      %p319 = por %p317, %p318
      %p320 = scmp.le.s32.totalorder 1, %s19
      %p321 = scmp.lt.s32.totalorder %s19, 3
      %p322 = pnand %p320, %p321
      %p323 = pneg %p322
      // Predicated region
      $region9: #{tpu_custom_call.1} parent=5 // pred_check
        _
      $region10: #{tpu_custom_call.1} parent=5 // pred_check_branch
        %325 = sbr.rel (%p322) target = $region12
      $region11: #{tpu_custom_call.1} parent=5 // pred_region
        %s326 = ssub.s32 %s19, 1
        // Predicated region
        $region13: #{tpu_custom_call.1} parent=11 // pred_check
          %p327 = pneg %p57
        $region14: #{tpu_custom_call.1} parent=11 // pred_check_branch
          %329 = sbr.rel (%p327) target = $region16
        $region15: #{tpu_custom_call.1} parent=11 // pred_region
          %s330 = smul.u32 2, %s28
          %s332 = ssub.s32 128, 128
          %333 = vsyncadd [#allocation4], %s332
          %s334 = smul.addr %s330, 64
          %s335 = scalar_lea.hbm %s0, %s334
          %s336 = sshll.u32 [#allocation3], 4
          %s337 = int_to_ptr.vmem [resolvable:$true] %s336
          %342 = dma.hbm_to_vmem [thread:$0]  %s335, 128, %s337, [#allocation4], 64, 64, 4
        $region16: #{tpu_custom_call.1} parent=11 // pred_fallthru
          _
        // Predicated region
        $region17: #{tpu_custom_call.1} parent=11 // pred_check
          %p343 = pneg %p78
        $region18: #{tpu_custom_call.1} parent=11 // pred_check_branch
          %345 = sbr.rel (%p343) target = $region20
        $region19: #{tpu_custom_call.1} parent=11 // pred_region
          %s347 = ssub.s32 128, 128
          %348 = vsyncadd [#allocation7], %s347
          %s350 = sshll.u32 [#allocation6], 4
          %s351 = int_to_ptr.vmem [resolvable:$true] %s350
          %353 = dma.hbm_to_vmem [thread:$0]  %s1, 128, %s351, [#allocation7]
        $region20: #{tpu_custom_call.1} parent=11 // pred_fallthru
          _
        // Predicated region
        $region21: #{tpu_custom_call.1} parent=11 // pred_check
          %p354 = pneg %p104
        $region22: #{tpu_custom_call.1} parent=11 // pred_check_branch
          %356 = sbr.rel (%p354) target = $region24
        $region23: #{tpu_custom_call.1} parent=11 // pred_region
          %s357 = smul.u32 2, %s28
          %p358 = scmp.lt.s32.totalorder %s357, 1
          %s359 = scalar_select %p358, %s357, 1
          %s360 = scalar_lea.vmem %s2, %s359
          %s361 = smul.u32 2, %s28
        $region24: #{tpu_custom_call.1} parent=11 // pred_fallthru
          _
      $region12: #{tpu_custom_call.1} parent=5 // pred_fallthru
        _
      %p362 = scmp.lt.s32.totalorder %s19, 2
      // Predicated region
      $region25: #{tpu_custom_call.1} parent=5 // pred_check
        %p363 = pneg %p362
      $region26: #{tpu_custom_call.1} parent=5 // pred_check_branch
        %365 = sbr.rel (%p363) target = $region28
      $region27: #{tpu_custom_call.1} parent=5 // pred_region
        // Predicated region
        $region29: #{tpu_custom_call.1} parent=27 // pred_check
          %p366 = pneg %p124
        $region30: #{tpu_custom_call.1} parent=27 // pred_check_branch
          %368 = sbr.rel (%p366) target = $region32
        $region31: #{tpu_custom_call.1} parent=27 // pred_region
          %p369 = scmp.lt.s32.totalorder %s27, 1
          %s370 = scalar_select %p369, %s27, 1
          %s371 = smul.addr %s370, 4
          %s372 = smul.addr %s371, 4
          %s373 = scalar_lea.vmem %s3, %s372
        $region32: #{tpu_custom_call.1} parent=27 // pred_fallthru
          _
        // Predicated region
        $region33: #{tpu_custom_call.1} parent=27 // pred_check
          %p374 = pneg %p150
        $region34: #{tpu_custom_call.1} parent=27 // pred_check_branch
          %376 = sbr.rel (%p374) target = $region36
        $region35: #{tpu_custom_call.1} parent=27 // pred_region
          %p377 = scmp.lt.s32.totalorder %s27, 1
          %s378 = scalar_select %p377, %s27, 1
          %s379 = smul.addr %s378, 4
          %s380 = smul.addr %s379, 4
          %s381 = scalar_lea.vmem %s4, %s380
        $region36: #{tpu_custom_call.1} parent=27 // pred_fallthru
          _
        // Predicated region
        $region37: #{tpu_custom_call.1} parent=27 // pred_check
          %p382 = pneg %p176
        $region38: #{tpu_custom_call.1} parent=27 // pred_check_branch
          %384 = sbr.rel (%p382) target = $region40
        $region39: #{tpu_custom_call.1} parent=27 // pred_region
          %p385 = scmp.lt.s32.totalorder %s27, 1
          %s386 = scalar_select %p385, %s27, 1
          %s387 = smul.addr %s386, 4
          %s388 = smul.addr %s387, 4
          %s389 = scalar_lea.vmem %s5, %s388
        $region40: #{tpu_custom_call.1} parent=27 // pred_fallthru
          _
        // Predicated region
        $region41: #{tpu_custom_call.1} parent=27 // pred_check
          %p390 = pneg %p202
        $region42: #{tpu_custom_call.1} parent=27 // pred_check_branch
          %392 = sbr.rel (%p390) target = $region44
        $region43: #{tpu_custom_call.1} parent=27 // pred_region
          %p393 = scmp.lt.s32.totalorder %s27, 1
          %s394 = scalar_select %p393, %s27, 1
          %s395 = smul.addr %s394, 4
          %s396 = smul.addr %s395, 4
          %s397 = scalar_lea.vmem %s6, %s396
        $region44: #{tpu_custom_call.1} parent=27 // pred_fallthru
          _
        // Predicated region
        $region45: #{tpu_custom_call.1} parent=27 // pred_check
          %p398 = pneg %p228
        $region46: #{tpu_custom_call.1} parent=27 // pred_check_branch
          %400 = sbr.rel (%p398) target = $region48
        $region47: #{tpu_custom_call.1} parent=27 // pred_region
          %s401 = sand.u32 %s19, 1
          %s402 = scalar_lea.sflag [#allocation4], %s401
          %s403 = sand.u32 %s218, 1
          %s404 = smul.addr %s403, 16
          %s405 = scalar_lea.vmem [#allocation8], %s404
          %s407 = ssub.s32 256, 256
          %408 = vsyncadd %s402, %s407
          %s409 = smul.addr %s27, 4
          %s410 = smul.addr %s409, 64
          %s411 = scalar_lea.hbm %s7, %s410
          %s412 = sshll.u32 %s405, 4
          %s413 = int_to_ptr.vmem [resolvable:$true] %s412
          %418 = dma.hbm_to_vmem [thread:$0]  %s411, 256, %s413, %s402, 64, 64, 4
        $region48: #{tpu_custom_call.1} parent=27 // pred_fallthru
          _
        // Predicated region
        $region49: #{tpu_custom_call.1} parent=27 // pred_check
          %p419 = pneg %p254
        $region50: #{tpu_custom_call.1} parent=27 // pred_check_branch
          %421 = sbr.rel (%p419) target = $region52
        $region51: #{tpu_custom_call.1} parent=27 // pred_region
          %p422 = scmp.lt.s32.totalorder %s27, 1
          %s423 = scalar_select %p422, %s27, 1
          %s424 = smul.addr %s423, 8
          %s425 = smul.addr %s424, 4
          %s426 = scalar_lea.vmem %s8, %s425
        $region52: #{tpu_custom_call.1} parent=27 // pred_fallthru
          _
        // Predicated region
        $region53: #{tpu_custom_call.1} parent=27 // pred_check
          %p427 = pneg %p280
        $region54: #{tpu_custom_call.1} parent=27 // pred_check_branch
          %429 = sbr.rel (%p427) target = $region56
        $region55: #{tpu_custom_call.1} parent=27 // pred_region
          %p430 = scmp.lt.s32.totalorder %s27, 1
          %s431 = scalar_select %p430, %s27, 1
          %s432 = smul.addr %s431, 2
          %s433 = smul.addr %s432, 8
          %s434 = scalar_lea.vmem %s9, %s433
        $region56: #{tpu_custom_call.1} parent=27 // pred_fallthru
          _
      $region28: #{tpu_custom_call.1} parent=5 // pred_fallthru
        _
      %p435 = scmp.le.s32.totalorder 1, %s19
      %p436 = scmp.lt.s32.totalorder %s19, 3
      %p437 = pnand %p435, %p436
      %p438 = pneg %p437
      // Predicated region
      $region57: #{tpu_custom_call.1} parent=5 // pred_check
        _
      $region58: #{tpu_custom_call.1} parent=5 // pred_check_branch
        %440 = sbr.rel (%p437) target = $region60
      $region59: #{tpu_custom_call.1} parent=5 // pred_region
        %s441 = ssub.s32 %s19, 1
        // Predicated region
        $region61: #{tpu_custom_call.1} parent=59 // pred_check
          %p442 = pneg %p57
        $region62: #{tpu_custom_call.1} parent=59 // pred_check_branch
          %444 = sbr.rel (%p442) target = $region64
        $region63: #{tpu_custom_call.1} parent=59 // pred_region
          %445 = dma.done [#allocation4], 128
        $region64: #{tpu_custom_call.1} parent=59 // pred_fallthru
          _
        // Predicated region
        $region65: #{tpu_custom_call.1} parent=59 // pred_check
          %p446 = pneg %p78
        $region66: #{tpu_custom_call.1} parent=59 // pred_check_branch
          %448 = sbr.rel (%p446) target = $region68
        $region67: #{tpu_custom_call.1} parent=59 // pred_region
          %449 = dma.done [#allocation7], 128
        $region68: #{tpu_custom_call.1} parent=59 // pred_fallthru
          _
        %s450 = sand.u32 %s24, 1
        %s451 = scalar_lea.sflag [#allocation4], %s450
        %s452 = sand.u32 %s221, 1
        %s453 = smul.addr %s452, 16
        %s454 = scalar_lea.vmem [#allocation8], %s453
        // Predicated region
        $region69: #{tpu_custom_call.1} parent=59 // pred_check
          %p455 = pneg %p234
        $region70: #{tpu_custom_call.1} parent=59 // pred_check_branch
          %457 = sbr.rel (%p455) target = $region72
        $region71: #{tpu_custom_call.1} parent=59 // pred_region
          %458 = dma.done %s451, 256
        $region72: #{tpu_custom_call.1} parent=59 // pred_fallthru
          _
        %p459 = pneg %p57
        %p460 = pneg %p54
        %p461 = pneg %p78
        %p462 = pneg %p75
        %s463 = smul.u32 2, %s28
        %p464 = scmp.lt.s32.totalorder %s463, 1
        %s465 = scalar_select %p464, %s463, 1
        %s466 = scalar_lea.vmem %s2, %s465
        %p467 = pneg %p104
        %p468 = pneg %p101
        %p469 = scmp.lt.s32.totalorder %s29, 1
        %s470 = scalar_select %p469, %s29, 1
        %s471 = smul.addr %s470, 4
        %s472 = smul.addr %s471, 4
        %s473 = scalar_lea.vmem %s3, %s472
        %p474 = pneg %p130
        %p475 = pneg %p127
        %p476 = scmp.lt.s32.totalorder %s29, 1
        %s477 = scalar_select %p476, %s29, 1
        %s478 = smul.addr %s477, 4
        %s479 = smul.addr %s478, 4
        %s480 = scalar_lea.vmem %s4, %s479
        %p481 = pneg %p156
        %p482 = pneg %p153
        %p483 = scmp.lt.s32.totalorder %s29, 1
        %s484 = scalar_select %p483, %s29, 1
        %s485 = smul.addr %s484, 4
        %s486 = smul.addr %s485, 4
        %s487 = scalar_lea.vmem %s5, %s486
        %p488 = pneg %p182
        %p489 = pneg %p179
        %p490 = scmp.lt.s32.totalorder %s29, 1
        %s491 = scalar_select %p490, %s29, 1
        %s492 = smul.addr %s491, 4
        %s493 = smul.addr %s492, 4
        %s494 = scalar_lea.vmem %s6, %s493
        %p495 = pneg %p208
        %p496 = pneg %p205
        %s497 = sand.u32 %s24, 1
        %s498 = scalar_lea.sflag [#allocation4], %s497
        %s499 = sand.u32 %s221, 1
        %s500 = smul.addr %s499, 16
        %s501 = scalar_lea.vmem [#allocation8], %s500
        %p502 = pneg %p234
        %p503 = pneg %p231
        %p504 = scmp.lt.s32.totalorder %s29, 1
        %s505 = scalar_select %p504, %s29, 1
        %s506 = smul.addr %s505, 8
        %s507 = smul.addr %s506, 4
        %s508 = scalar_lea.vmem %s8, %s507
        %p509 = pneg %p260
        %p510 = pneg %p257
        %p511 = scmp.lt.s32.totalorder %s29, 1
        %s512 = scalar_select %p511, %s29, 1
        %s513 = smul.addr %s512, 2
        %s514 = smul.addr %s513, 8
        %s515 = scalar_lea.vmem %s9, %s514
        %p516 = pneg %p286
        %p517 = pneg %p283
        %p518 = pneg %p312
        %p519 = pneg %p309
        %s520 = smul.u32 2, %s28
        %s521 = smul.u32 2, %s28
        %p522 = scmp.lt.s32.totalorder %s521, 1
        %s523 = scalar_select %p522, %s521, 1
        %s524 = scalar_lea.vmem %s2, %s523
        %s525 = smul.u32 2, %s28
        %p526 = scmp.lt.s32.totalorder %s29, 1
        %s527 = scalar_select %p526, %s29, 1
        %s528 = smul.addr %s527, 4
        %s529 = smul.addr %s528, 4
        %s530 = scalar_lea.vmem %s3, %s529
        %p531 = scmp.lt.s32.totalorder %s29, 1
        %s532 = scalar_select %p531, %s29, 1
        %s533 = smul.addr %s532, 4
        %s534 = smul.addr %s533, 4
        %s535 = scalar_lea.vmem %s4, %s534
        %p536 = scmp.lt.s32.totalorder %s29, 1
        %s537 = scalar_select %p536, %s29, 1
        %s538 = smul.addr %s537, 4
        %s539 = smul.addr %s538, 4
        %s540 = scalar_lea.vmem %s5, %s539
        %p541 = scmp.lt.s32.totalorder %s29, 1
        %s542 = scalar_select %p541, %s29, 1
        %s543 = smul.addr %s542, 4
        %s544 = smul.addr %s543, 4
        %s545 = scalar_lea.vmem %s6, %s544
        %p546 = scmp.lt.s32.totalorder %s29, 1
        %s547 = scalar_select %p546, %s29, 1
        %s548 = smul.addr %s547, 8
        %s549 = smul.addr %s548, 4
        %s550 = scalar_lea.vmem %s8, %s549
        %p551 = scmp.lt.s32.totalorder %s29, 1
        %s552 = scalar_select %p551, %s29, 1
        %s553 = smul.addr %s552, 2
        %s554 = smul.addr %s553, 8
        %s555 = scalar_lea.vmem %s9, %s554
        %s556 = smul.u32 2, %s28
        %v558 = vld [vmem:[#allocation3] sm:$0xf]
        %v559 = vld [vmem:[#allocation3 + $0x4] sm:$0xf]
        %p560 = scmp.eq.s32.totalorder %s29, 0
        // Predicated region
        $region73: #{tpu_custom_call.1} parent=59 // pred_check
          %p561 = pneg %p560
        $region74: #{tpu_custom_call.1} parent=59 // pred_check_branch
          %563 = sbr.rel (%p561) target = $region76
        $region75: #{tpu_custom_call.1} parent=59 // pred_region
          %v564 = vunpack.c.l.bf16 %v558
          %v565 = vunpack.c.l.bf16 %v559
          %vm566 = vcmask 261120
          %567 = vst.msk [vmem:[#allocation2] sm:$0xff] %vm566, %v564
          %568 = vst.msk [vmem:[#allocation2 + $0x8] sm:$0xff] %vm566, %v565
        $region76: #{tpu_custom_call.1} parent=59 // pred_fallthru
          _
        %v569 = vld [vmem:[#allocation2] sm:$0xff]
        %v570 = vld [vmem:[#allocation2 + $0x8] sm:$0xff]
        %v571 = vld [vmem:[%s555] sm:$0xff]
        %v572 = vld [vmem:[%s555 + $0x8] sm:$0xf]
        %v573 = vld [vmem:[#allocation6] sm:$0xff]
        %v574 = vld [vmem:[%s524] sm:$0x1]
        %v575 = vld [vmem:[%s524 + $0x1] sm:$0x1]
        %v578 = vlaneseq
        %v579 = vshrl.u32 %v578, 7
        %v580 = vsub.s32 0, %v579
        %v581 = vrot.slane %v574, %v580
        %v582 = vlaneseq
        %v583 = vshrl.u32 %v582, 7
        %v584 = vsub.s32 0, %v583
        %v585 = vrot.slane %v575, %v584
        %v588 = vadd.f32 %v573, %v581
        %v589 = vadd.f32 %v573, %v585
        %v590 = vld [vmem:[%s530] sm:$0xf]
        %v591 = vld [vmem:[%s530 + $0x4] sm:$0xf]
        %v592 = vld [vmem:[%s530 + $0x8] sm:$0xf]
        %v593 = vld [vmem:[%s530 + $0xc] sm:$0xf]
        %v594 = vld [vmem:[%s535] sm:$0xf]
        %v595 = vld [vmem:[%s535 + $0x4] sm:$0xf]
        %v596 = vld [vmem:[%s535 + $0x8] sm:$0xf]
        %v597 = vld [vmem:[%s535 + $0xc] sm:$0xf]
        %v598 = vpack.c.bf16 %v570, %v569
        %v599 = vlaneseq
        %v600 = vshrl.u32 %v599, 7
        %v601 = vsub.s32 0, %v600
        %v602 = vrot.slane %v571, %v601
        %v607 = vunpack.c.l.b16 %v590
        %v608 = vunpack.c.l.b16 %v591
        %v609 = vunpack.c.l.b16 %v592
        %v610 = vunpack.c.l.b16 %v593
        %v611 = vpack.c.b16 %v608, %v607
        %v612 = vpack.c.b16 %v610, %v609
        %vm615 = vcmask 261120
        %v617 = vsel %vm615, %v598, 0
        %619 = vmatprep.subr.bf16.mxu0 0
        %620 = vmatpush1.bf16.msra.mxu0 %v611
        %621 = vmatprep.subr.bf16.mxu0 0
        %622 = vmatpush1.bf16.msra.mxu0 %v612
        %623 = vmatprep.subr.bf16.mxu0 0
        %624 = vmatpush1.bf16.msra.mxu0 0
        %625 = vmatprep.subr.bf16.mxu0 0
        %626 = vmatpush1.bf16.msra.mxu0 0
        %627 = vmatprep.subr.bf16.mxu0 0
        %628 = vmatpush1.bf16.msra.mxu0 0
        %629 = vmatprep.subr.bf16.mxu0 0
        %630 = vmatpush1.bf16.msra.mxu0 0
        %631 = vmatprep.subr.bf16.mxu0 0
        %632 = vmatpush1.bf16.msra.mxu0 0
        %633 = vmatprep.subr.bf16.mxu0 0
        %634 = vmatpush1.bf16.msra.mxu0 0
        %635 = vmatprep.subr.bf16.mxu0 0
        %636 = vmatpush1.bf16.msra.mxu0 0
        %637 = vmatprep.subr.bf16.mxu0 0
        %638 = vmatpush1.bf16.msra.mxu0 0
        %639 = vmatprep.subr.bf16.mxu0 0
        %640 = vmatpush1.bf16.msra.mxu0 0
        %641 = vmatprep.subr.bf16.mxu0 0
        %642 = vmatpush1.bf16.msra.mxu0 0
        %643 = vmatprep.subr.bf16.mxu0 0
        %644 = vmatpush1.bf16.msra.mxu0 0
        %645 = vmatprep.subr.bf16.mxu0 0
        %646 = vmatpush1.bf16.msra.mxu0 0
        %647 = vmatprep.subr.bf16.mxu0 0
        %648 = vmatpush1.bf16.msra.mxu0 0
        %649 = vmatprep.subr.bf16.mxu0 0
        %650 = vmatpush1.bf16.msra.mxu0 0
        %651 = vmatprep.mubr.bf16.mxu0 0
        %652 = vmatmul.mubr.bf16.gmra.mrb[0].mxu0 %v617
        %v653 = vpop.f32.mrb[0].mxu0
        %v654 = vadd.f32 %v602, %v653
        %v655 = vpop.f32.mrb[0].mxu0
        %v656 = vpop.f32.mrb[0].mxu0
        %v657 = vadd.f32 %v602, %v656
        %v658 = vpop.f32.mrb[0].mxu0
        %659 = vdwg.mxu0
        %v660 = vmul.f32 %v654, 0.35355338
        %v661 = vmul.f32 %v657, 0.35355338
        %v662 = vpack.c.bf16 %v660, %v660
        %v663 = vpack.c.bf16 %v661, %v661
        %v664 = vpack.c.bf16 %v654, %v654
        %v665 = vpack.c.bf16 %v657, %v657
        %667 = vrot.lane.b32.xlu0 %v664, 96
        %v668 = vpop.permute.xlu0 %667
        %vm669 = vcmask 64512
        %v671 = vsel %vm669, %v662, 0
        %v674 = vsel %vm669, %v668, 0
        %676 = vmatprep.subr.bf16.mxu0 0
        %677 = vmatpush1.bf16.xpose.msra.mxu0 %v674
        %678 = vmatprep.subr.bf16.mxu0 0
        %679 = vmatpush1.bf16.xpose.msra.mxu0 0
        %680 = vmatprep.subr.bf16.mxu0 0
        %681 = vmatpush1.bf16.xpose.msra.mxu0 0
        %682 = vmatprep.subr.bf16.mxu0 0
        %683 = vmatpush1.bf16.xpose.msra.mxu0 0
        %684 = vmatprep.subr.bf16.mxu0 0
        %685 = vmatpush1.bf16.xpose.msra.mxu0 0
        %686 = vmatprep.subr.bf16.mxu0 0
        %687 = vmatpush1.bf16.xpose.msra.mxu0 0
        %688 = vmatprep.subr.bf16.mxu0 0
        %689 = vmatpush1.bf16.xpose.msra.mxu0 0
        %690 = vmatprep.subr.bf16.mxu0 0
        %691 = vmatpush1.bf16.xpose.msra.mxu0 0
        %692 = vmatprep.subr.bf16.mxu0 0
        %693 = vmatpush1.bf16.xpose.msra.mxu0 0
        %694 = vmatprep.subr.bf16.mxu0 0
        %695 = vmatpush1.bf16.xpose.msra.mxu0 0
        %696 = vmatprep.subr.bf16.mxu0 0
        %697 = vmatpush1.bf16.xpose.msra.mxu0 0
        %698 = vmatprep.subr.bf16.mxu0 0
        %699 = vmatpush1.bf16.xpose.msra.mxu0 0
        %700 = vmatprep.subr.bf16.mxu0 0
        %701 = vmatpush1.bf16.xpose.msra.mxu0 0
        %702 = vmatprep.subr.bf16.mxu0 0
        %703 = vmatpush1.bf16.xpose.msra.mxu0 0
        %704 = vmatprep.subr.bf16.mxu0 0
        %705 = vmatpush1.bf16.xpose.msra.mxu0 0
        %706 = vmatprep.subr.bf16.mxu0 0
        %707 = vmatpush1.bf16.xpose.msra.mxu0 0
        %708 = vmatprep.mubr.bf16.mxu0 0
        %709 = vmatmul.mubr.bf16.gmra.mrb[0].mxu0 %v671
        %v710 = vpop.f32.mrb[0].mxu0
        %v711 = vadd.f32 %v588, %v710
        %v712 = vpop.f32.mrb[0].mxu0
        %v713 = vpop.f32.mrb[0].mxu0
        %v714 = vpop.f32.mrb[0].mxu0
        %715 = vdwg.mxu0
        %717 = vrot.lane.b32.xlu0 %v665, 96
        %v718 = vpop.permute.xlu0 %717
        %v720 = vsel %vm669, %v663, 0
        %v723 = vsel %vm669, %v718, 0
        %725 = vmatprep.subr.bf16.mxu0 0
        %726 = vmatpush1.bf16.xpose.msra.mxu0 %v723
        %727 = vmatprep.subr.bf16.mxu0 0
        %728 = vmatpush1.bf16.xpose.msra.mxu0 0
        %729 = vmatprep.subr.bf16.mxu0 0
        %730 = vmatpush1.bf16.xpose.msra.mxu0 0
        %731 = vmatprep.subr.bf16.mxu0 0
        %732 = vmatpush1.bf16.xpose.msra.mxu0 0
        %733 = vmatprep.subr.bf16.mxu0 0
        %734 = vmatpush1.bf16.xpose.msra.mxu0 0
        %735 = vmatprep.subr.bf16.mxu0 0
        %736 = vmatpush1.bf16.xpose.msra.mxu0 0
        %737 = vmatprep.subr.bf16.mxu0 0
        %738 = vmatpush1.bf16.xpose.msra.mxu0 0
        %739 = vmatprep.subr.bf16.mxu0 0
        %740 = vmatpush1.bf16.xpose.msra.mxu0 0
        %741 = vmatprep.subr.bf16.mxu0 0
        %742 = vmatpush1.bf16.xpose.msra.mxu0 0
        %743 = vmatprep.subr.bf16.mxu0 0
        %744 = vmatpush1.bf16.xpose.msra.mxu0 0
        %745 = vmatprep.subr.bf16.mxu0 0
        %746 = vmatpush1.bf16.xpose.msra.mxu0 0
        %747 = vmatprep.subr.bf16.mxu0 0
        %748 = vmatpush1.bf16.xpose.msra.mxu0 0
        %749 = vmatprep.subr.bf16.mxu0 0
        %750 = vmatpush1.bf16.xpose.msra.mxu0 0
        %751 = vmatprep.subr.bf16.mxu0 0
        %752 = vmatpush1.bf16.xpose.msra.mxu0 0
        %753 = vmatprep.subr.bf16.mxu0 0
        %754 = vmatpush1.bf16.xpose.msra.mxu0 0
        %755 = vmatprep.subr.bf16.mxu0 0
        %756 = vmatpush1.bf16.xpose.msra.mxu0 0
        %757 = vmatprep.mubr.bf16.mxu0 0
        %758 = vmatmul.mubr.bf16.gmra.mrb[0].mxu0 %v720
        %v759 = vpop.f32.mrb[0].mxu0
        %v760 = vadd.f32 %v589, %v759
        %v761 = vpop.f32.mrb[0].mxu0
        %v762 = vpop.f32.mrb[0].mxu0
        %v763 = vpop.f32.mrb[0].mxu0
        %764 = vdwg.mxu0
        %v765 = vsel %vm669, %v711, -inf
        %766 = vmax.xlane.f32.xlu0 %v765
        %v767 = vpop.xlane.xlu0 %766
        %v768 = vsel %vm669, %v760, -inf
        %769 = vmax.xlane.f32.xlu0 %v768
        %v770 = vpop.xlane.xlu0 %769
        %v771 = vsub.f32 %v711, %v767
        %v772 = vsub.f32 %v760, %v770
        %v773 = vmul.f32 %v771, 1.442695
        %v774 = vpow.pop %v773
        %v775 = vmul.f32 %v772, 1.442695
        %v776 = vpow.pop %v775
        %v777 = vsel %vm669, %v774, 0.0
        %778 = vadd.xlane.f32.xlu0 %v777
        %v779 = vpop.xlane.xlu0 %778
        %v780 = vsel %vm669, %v776, 0.0
        %781 = vadd.xlane.f32.xlu0 %v780
        %v782 = vpop.xlane.xlu0 %781
        %v783 = vrcp.pop %v779
        %v784 = vrcp.pop %v782
        %v785 = vmul.f32 %v774, %v783
        %v786 = vmul.f32 %v776, %v784
        %v787 = vpack.c.bf16 %v785, %v785
        %v788 = vpack.c.bf16 %v786, %v786
        %789 = vrot.lane.b32.xlu0 %v664, 64
        %v790 = vpop.permute.xlu0 %789
        %v792 = vsel %vm669, %v787, 0
        %vm794 = vcmask 1043456
        %v796 = vsel %vm794, %v790, 0
        %798 = vmatprep.subr.bf16.mxu0 0
        %799 = vmatpush1.bf16.msra.mxu0 %v796
        %800 = vmatprep.subr.bf16.mxu0 0
        %801 = vmatpush1.bf16.msra.mxu0 0
        %802 = vmatprep.subr.bf16.mxu0 0
        %803 = vmatpush1.bf16.msra.mxu0 0
        %804 = vmatprep.subr.bf16.mxu0 0
        %805 = vmatpush1.bf16.msra.mxu0 0
        %806 = vmatprep.subr.bf16.mxu0 0
        %807 = vmatpush1.bf16.msra.mxu0 0
        %808 = vmatprep.subr.bf16.mxu0 0
        %809 = vmatpush1.bf16.msra.mxu0 0
        %810 = vmatprep.subr.bf16.mxu0 0
        %811 = vmatpush1.bf16.msra.mxu0 0
        %812 = vmatprep.subr.bf16.mxu0 0
        %813 = vmatpush1.bf16.msra.mxu0 0
        %814 = vmatprep.subr.bf16.mxu0 0
        %815 = vmatpush1.bf16.msra.mxu0 0
        %816 = vmatprep.subr.bf16.mxu0 0
        %817 = vmatpush1.bf16.msra.mxu0 0
        %818 = vmatprep.subr.bf16.mxu0 0
        %819 = vmatpush1.bf16.msra.mxu0 0
        %820 = vmatprep.subr.bf16.mxu0 0
        %821 = vmatpush1.bf16.msra.mxu0 0
        %822 = vmatprep.subr.bf16.mxu0 0
        %823 = vmatpush1.bf16.msra.mxu0 0
        %824 = vmatprep.subr.bf16.mxu0 0
        %825 = vmatpush1.bf16.msra.mxu0 0
        %826 = vmatprep.subr.bf16.mxu0 0
        %827 = vmatpush1.bf16.msra.mxu0 0
        %828 = vmatprep.subr.bf16.mxu0 0
        %829 = vmatpush1.bf16.msra.mxu0 0
        %830 = vmatprep.mubr.bf16.mxu0 0
        %831 = vmatmul.mubr.bf16.gmra.mrb[0].mxu0 %v792
        %v832 = vpop.f32.mrb[0].mxu0
        %v833 = vadd.f32 0.0, %v832
        %v834 = vpop.f32.mrb[0].mxu0
        %v835 = vpop.f32.mrb[0].mxu0
        %v836 = vpop.f32.mrb[0].mxu0
        %837 = vdwg.mxu0
        %838 = vrot.lane.b32.xlu0 %v665, 64
        %v839 = vpop.permute.xlu0 %838
        %v841 = vsel %vm669, %v788, 0
        %v844 = vsel %vm794, %v839, 0
        %846 = vmatprep.subr.bf16.mxu0 0
        %847 = vmatpush1.bf16.msra.mxu0 %v844
        %848 = vmatprep.subr.bf16.mxu0 0
        %849 = vmatpush1.bf16.msra.mxu0 0
        %850 = vmatprep.subr.bf16.mxu0 0
        %851 = vmatpush1.bf16.msra.mxu0 0
        %852 = vmatprep.subr.bf16.mxu0 0
        %853 = vmatpush1.bf16.msra.mxu0 0
        %854 = vmatprep.subr.bf16.mxu0 0
        %855 = vmatpush1.bf16.msra.mxu0 0
        %856 = vmatprep.subr.bf16.mxu0 0
        %857 = vmatpush1.bf16.msra.mxu0 0
        %858 = vmatprep.subr.bf16.mxu0 0
        %859 = vmatpush1.bf16.msra.mxu0 0
        %860 = vmatprep.subr.bf16.mxu0 0
        %861 = vmatpush1.bf16.msra.mxu0 0
        %862 = vmatprep.subr.bf16.mxu0 0
        %863 = vmatpush1.bf16.msra.mxu0 0
        %864 = vmatprep.subr.bf16.mxu0 0
        %865 = vmatpush1.bf16.msra.mxu0 0
        %866 = vmatprep.subr.bf16.mxu0 0
        %867 = vmatpush1.bf16.msra.mxu0 0
        %868 = vmatprep.subr.bf16.mxu0 0
        %869 = vmatpush1.bf16.msra.mxu0 0
        %870 = vmatprep.subr.bf16.mxu0 0
        %871 = vmatpush1.bf16.msra.mxu0 0
        %872 = vmatprep.subr.bf16.mxu0 0
        %873 = vmatpush1.bf16.msra.mxu0 0
        %874 = vmatprep.subr.bf16.mxu0 0
        %875 = vmatpush1.bf16.msra.mxu0 0
        %876 = vmatprep.subr.bf16.mxu0 0
        %877 = vmatpush1.bf16.msra.mxu0 0
        %878 = vmatprep.mubr.bf16.mxu0 0
        %879 = vmatmul.mubr.bf16.gmra.mrb[0].mxu0 %v841
        %v880 = vpop.f32.mrb[0].mxu0
        %v881 = vadd.f32 0.0, %v880
        %v882 = vpop.f32.mrb[0].mxu0
        %v883 = vpop.f32.mrb[0].mxu0
        %v884 = vpop.f32.mrb[0].mxu0
        %885 = vdwg.mxu0
        %v886 = vpack.c.bf16 %v881, %v833
        %888 = vrot.lane.b32.xlu0 %v662, 120
        %v889 = vpop.permute.xlu0 %888
        %890 = vrot.lane.b32.xlu0 %v664, 88
        %v891 = vpop.permute.xlu0 %890
        %v893 = vsel %vm669, %v889, 0
        %v896 = vsel %vm669, %v891, 0
        %898 = vmatprep.subr.bf16.mxu0 0
        %899 = vmatpush1.bf16.xpose.msra.mxu0 %v896
        %900 = vmatprep.subr.bf16.mxu0 0
        %901 = vmatpush1.bf16.xpose.msra.mxu0 0
        %902 = vmatprep.subr.bf16.mxu0 0
        %903 = vmatpush1.bf16.xpose.msra.mxu0 0
        %904 = vmatprep.subr.bf16.mxu0 0
        %905 = vmatpush1.bf16.xpose.msra.mxu0 0
        %906 = vmatprep.subr.bf16.mxu0 0
        %907 = vmatpush1.bf16.xpose.msra.mxu0 0
        %908 = vmatprep.subr.bf16.mxu0 0
        %909 = vmatpush1.bf16.xpose.msra.mxu0 0
        %910 = vmatprep.subr.bf16.mxu0 0
        %911 = vmatpush1.bf16.xpose.msra.mxu0 0
        %912 = vmatprep.subr.bf16.mxu0 0
        %913 = vmatpush1.bf16.xpose.msra.mxu0 0
        %914 = vmatprep.subr.bf16.mxu0 0
        %915 = vmatpush1.bf16.xpose.msra.mxu0 0
        %916 = vmatprep.subr.bf16.mxu0 0
        %917 = vmatpush1.bf16.xpose.msra.mxu0 0
        %918 = vmatprep.subr.bf16.mxu0 0
        %919 = vmatpush1.bf16.xpose.msra.mxu0 0
        %920 = vmatprep.subr.bf16.mxu0 0
        %921 = vmatpush1.bf16.xpose.msra.mxu0 0
        %922 = vmatprep.subr.bf16.mxu0 0
        %923 = vmatpush1.bf16.xpose.msra.mxu0 0
        %924 = vmatprep.subr.bf16.mxu0 0
        %925 = vmatpush1.bf16.xpose.msra.mxu0 0
        %926 = vmatprep.subr.bf16.mxu0 0
        %927 = vmatpush1.bf16.xpose.msra.mxu0 0
        %928 = vmatprep.subr.bf16.mxu0 0
        %929 = vmatpush1.bf16.xpose.msra.mxu0 0
        %930 = vmatprep.mubr.bf16.mxu0 0
        %931 = vmatmul.mubr.bf16.gmra.mrb[0].mxu0 %v893
        %v932 = vpop.f32.mrb[0].mxu0
        %v933 = vadd.f32 %v588, %v932
        %v934 = vpop.f32.mrb[0].mxu0
        %v935 = vpop.f32.mrb[0].mxu0
        %v936 = vpop.f32.mrb[0].mxu0
        %937 = vdwg.mxu0
        %939 = vrot.lane.b32.xlu0 %v663, 120
        %v940 = vpop.permute.xlu0 %939
        %941 = vrot.lane.b32.xlu0 %v665, 88
        %v942 = vpop.permute.xlu0 %941
        %v944 = vsel %vm669, %v940, 0
        %v947 = vsel %vm669, %v942, 0
        %949 = vmatprep.subr.bf16.mxu0 0
        %950 = vmatpush1.bf16.xpose.msra.mxu0 %v947
        %951 = vmatprep.subr.bf16.mxu0 0
        %952 = vmatpush1.bf16.xpose.msra.mxu0 0
        %953 = vmatprep.subr.bf16.mxu0 0
        %954 = vmatpush1.bf16.xpose.msra.mxu0 0
        %955 = vmatprep.subr.bf16.mxu0 0
        %956 = vmatpush1.bf16.xpose.msra.mxu0 0
        %957 = vmatprep.subr.bf16.mxu0 0
        %958 = vmatpush1.bf16.xpose.msra.mxu0 0
        %959 = vmatprep.subr.bf16.mxu0 0
        %960 = vmatpush1.bf16.xpose.msra.mxu0 0
        %961 = vmatprep.subr.bf16.mxu0 0
        %962 = vmatpush1.bf16.xpose.msra.mxu0 0
        %963 = vmatprep.subr.bf16.mxu0 0
        %964 = vmatpush1.bf16.xpose.msra.mxu0 0
        %965 = vmatprep.subr.bf16.mxu0 0
        %966 = vmatpush1.bf16.xpose.msra.mxu0 0
        %967 = vmatprep.subr.bf16.mxu0 0
        %968 = vmatpush1.bf16.xpose.msra.mxu0 0
        %969 = vmatprep.subr.bf16.mxu0 0
        %970 = vmatpush1.bf16.xpose.msra.mxu0 0
        %971 = vmatprep.subr.bf16.mxu0 0
        %972 = vmatpush1.bf16.xpose.msra.mxu0 0
        %973 = vmatprep.subr.bf16.mxu0 0
        %974 = vmatpush1.bf16.xpose.msra.mxu0 0
        %975 = vmatprep.subr.bf16.mxu0 0
        %976 = vmatpush1.bf16.xpose.msra.mxu0 0
        %977 = vmatprep.subr.bf16.mxu0 0
        %978 = vmatpush1.bf16.xpose.msra.mxu0 0
        %979 = vmatprep.subr.bf16.mxu0 0
        %980 = vmatpush1.bf16.xpose.msra.mxu0 0
        %981 = vmatprep.mubr.bf16.mxu0 0
        %982 = vmatmul.mubr.bf16.gmra.mrb[0].mxu0 %v944
        %v983 = vpop.f32.mrb[0].mxu0
        %v984 = vadd.f32 %v589, %v983
        %v985 = vpop.f32.mrb[0].mxu0
        %v986 = vpop.f32.mrb[0].mxu0
        %v987 = vpop.f32.mrb[0].mxu0
        %988 = vdwg.mxu0
        %v989 = vsel %vm669, %v933, -inf
        %990 = vmax.xlane.f32.xlu0 %v989
        %v991 = vpop.xlane.xlu0 %990
        %v992 = vsel %vm669, %v984, -inf
        %993 = vmax.xlane.f32.xlu0 %v992
        %v994 = vpop.xlane.xlu0 %993
        %v995 = vsub.f32 %v933, %v991
        %v996 = vsub.f32 %v984, %v994
        %v997 = vmul.f32 %v995, 1.442695
        %v998 = vpow.pop %v997
        %v999 = vmul.f32 %v996, 1.442695
        %v1000 = vpow.pop %v999
        %v1001 = vsel %vm669, %v998, 0.0
        %1002 = vadd.xlane.f32.xlu0 %v1001
        %v1003 = vpop.xlane.xlu0 %1002
        %v1004 = vsel %vm669, %v1000, 0.0
        %1005 = vadd.xlane.f32.xlu0 %v1004
        %v1006 = vpop.xlane.xlu0 %1005
        %v1007 = vrcp.pop %v1003
        %v1008 = vrcp.pop %v1006
        %v1009 = vmul.f32 %v998, %v1007
        %v1010 = vmul.f32 %v1000, %v1008
        %v1011 = vpack.c.bf16 %v1009, %v1009
        %v1012 = vpack.c.bf16 %v1010, %v1010
        %1013 = vrot.lane.b32.xlu0 %v664, 56
        %v1014 = vpop.permute.xlu0 %1013
        %v1016 = vsel %vm669, %v1011, 0
        %v1019 = vsel %vm794, %v1014, 0
        %1021 = vmatprep.subr.bf16.mxu0 0
        %1022 = vmatpush1.bf16.msra.mxu0 %v1019
        %1023 = vmatprep.subr.bf16.mxu0 0
        %1024 = vmatpush1.bf16.msra.mxu0 0
        %1025 = vmatprep.subr.bf16.mxu0 0
        %1026 = vmatpush1.bf16.msra.mxu0 0
        %1027 = vmatprep.subr.bf16.mxu0 0
        %1028 = vmatpush1.bf16.msra.mxu0 0
        %1029 = vmatprep.subr.bf16.mxu0 0
        %1030 = vmatpush1.bf16.msra.mxu0 0
        %1031 = vmatprep.subr.bf16.mxu0 0
        %1032 = vmatpush1.bf16.msra.mxu0 0
        %1033 = vmatprep.subr.bf16.mxu0 0
        %1034 = vmatpush1.bf16.msra.mxu0 0
        %1035 = vmatprep.subr.bf16.mxu0 0
        %1036 = vmatpush1.bf16.msra.mxu0 0
        %1037 = vmatprep.subr.bf16.mxu0 0
        %1038 = vmatpush1.bf16.msra.mxu0 0
        %1039 = vmatprep.subr.bf16.mxu0 0
        %1040 = vmatpush1.bf16.msra.mxu0 0
        %1041 = vmatprep.subr.bf16.mxu0 0
        %1042 = vmatpush1.bf16.msra.mxu0 0
        %1043 = vmatprep.subr.bf16.mxu0 0
        %1044 = vmatpush1.bf16.msra.mxu0 0
        %1045 = vmatprep.subr.bf16.mxu0 0
        %1046 = vmatpush1.bf16.msra.mxu0 0
        %1047 = vmatprep.subr.bf16.mxu0 0
        %1048 = vmatpush1.bf16.msra.mxu0 0
        %1049 = vmatprep.subr.bf16.mxu0 0
        %1050 = vmatpush1.bf16.msra.mxu0 0
        %1051 = vmatprep.subr.bf16.mxu0 0
        %1052 = vmatpush1.bf16.msra.mxu0 0
        %1053 = vmatprep.mubr.bf16.mxu0 0
        %1054 = vmatmul.mubr.bf16.gmra.mrb[0].mxu0 %v1016
        %v1055 = vpop.f32.mrb[0].mxu0
        %v1056 = vadd.f32 0.0, %v1055
        %v1057 = vpop.f32.mrb[0].mxu0
        %v1058 = vpop.f32.mrb[0].mxu0
        %v1059 = vpop.f32.mrb[0].mxu0
        %1060 = vdwg.mxu0
        %1061 = vrot.lane.b32.xlu0 %v665, 56
        %v1062 = vpop.permute.xlu0 %1061
        %v1064 = vsel %vm669, %v1012, 0
        %v1067 = vsel %vm794, %v1062, 0
        %1069 = vmatprep.subr.bf16.mxu0 0
        %1070 = vmatpush1.bf16.msra.mxu0 %v1067
        %1071 = vmatprep.subr.bf16.mxu0 0
        %1072 = vmatpush1.bf16.msra.mxu0 0
        %1073 = vmatprep.subr.bf16.mxu0 0
        %1074 = vmatpush1.bf16.msra.mxu0 0
        %1075 = vmatprep.subr.bf16.mxu0 0
        %1076 = vmatpush1.bf16.msra.mxu0 0
        %1077 = vmatprep.subr.bf16.mxu0 0
        %1078 = vmatpush1.bf16.msra.mxu0 0
        %1079 = vmatprep.subr.bf16.mxu0 0
        %1080 = vmatpush1.bf16.msra.mxu0 0
        %1081 = vmatprep.subr.bf16.mxu0 0
        %1082 = vmatpush1.bf16.msra.mxu0 0
        %1083 = vmatprep.subr.bf16.mxu0 0
        %1084 = vmatpush1.bf16.msra.mxu0 0
        %1085 = vmatprep.subr.bf16.mxu0 0
        %1086 = vmatpush1.bf16.msra.mxu0 0
        %1087 = vmatprep.subr.bf16.mxu0 0
        %1088 = vmatpush1.bf16.msra.mxu0 0
        %1089 = vmatprep.subr.bf16.mxu0 0
        %1090 = vmatpush1.bf16.msra.mxu0 0
        %1091 = vmatprep.subr.bf16.mxu0 0
        %1092 = vmatpush1.bf16.msra.mxu0 0
        %1093 = vmatprep.subr.bf16.mxu0 0
        %1094 = vmatpush1.bf16.msra.mxu0 0
        %1095 = vmatprep.subr.bf16.mxu0 0
        %1096 = vmatpush1.bf16.msra.mxu0 0
        %1097 = vmatprep.subr.bf16.mxu0 0
        %1098 = vmatpush1.bf16.msra.mxu0 0
        %1099 = vmatprep.subr.bf16.mxu0 0
        %1100 = vmatpush1.bf16.msra.mxu0 0
        %1101 = vmatprep.mubr.bf16.mxu0 0
        %1102 = vmatmul.mubr.bf16.gmra.mrb[0].mxu0 %v1064
        %v1103 = vpop.f32.mrb[0].mxu0
        %v1104 = vadd.f32 0.0, %v1103
        %v1105 = vpop.f32.mrb[0].mxu0
        %v1106 = vpop.f32.mrb[0].mxu0
        %v1107 = vpop.f32.mrb[0].mxu0
        %1108 = vdwg.mxu0
        %v1109 = vpack.c.bf16 %v1104, %v1056
        %v1111 = vsel %vm669, %v1109, 0
        %v1114 = vsel %vm794, %v595, 0
        %1116 = vmatprep.subr.bf16.mxu0 0
        %1117 = vmatpush1.bf16.msra.mxu0 %v1114
        %1118 = vmatprep.subr.bf16.mxu0 0
        %1119 = vmatpush1.bf16.msra.mxu0 0
        %1120 = vmatprep.subr.bf16.mxu0 0
        %1121 = vmatpush1.bf16.msra.mxu0 0
        %1122 = vmatprep.subr.bf16.mxu0 0
        %1123 = vmatpush1.bf16.msra.mxu0 0
        %1124 = vmatprep.subr.bf16.mxu0 0
        %1125 = vmatpush1.bf16.msra.mxu0 0
        %1126 = vmatprep.subr.bf16.mxu0 0
        %1127 = vmatpush1.bf16.msra.mxu0 0
        %1128 = vmatprep.subr.bf16.mxu0 0
        %1129 = vmatpush1.bf16.msra.mxu0 0
        %1130 = vmatprep.subr.bf16.mxu0 0
        %1131 = vmatpush1.bf16.msra.mxu0 0
        %1132 = vmatprep.subr.bf16.mxu0 0
        %1133 = vmatpush1.bf16.msra.mxu0 0
        %1134 = vmatprep.subr.bf16.mxu0 0
        %1135 = vmatpush1.bf16.msra.mxu0 0
        %1136 = vmatprep.subr.bf16.mxu0 0
        %1137 = vmatpush1.bf16.msra.mxu0 0
        %1138 = vmatprep.subr.bf16.mxu0 0
        %1139 = vmatpush1.bf16.msra.mxu0 0
        %1140 = vmatprep.subr.bf16.mxu0 0
        %1141 = vmatpush1.bf16.msra.mxu0 0
        %1142 = vmatprep.subr.bf16.mxu0 0
        %1143 = vmatpush1.bf16.msra.mxu0 0
        %1144 = vmatprep.subr.bf16.mxu0 0
        %1145 = vmatpush1.bf16.msra.mxu0 0
        %1146 = vmatprep.subr.bf16.mxu0 0
        %1147 = vmatpush1.bf16.msra.mxu0 0
        %1148 = vmatprep.mubr.bf16.mxu0 0
        %1149 = vmatmul.mubr.bf16.gmra.mrb[0].mxu0 %v1111
        %v1150 = vpop.f32.mrb[0].mxu0
        %v1151 = vadd.f32 0.0, %v1150
        %v1152 = vpop.f32.mrb[0].mxu0
        %v1153 = vpop.f32.mrb[0].mxu0
        %v1154 = vadd.f32 0.0, %v1153
        %v1155 = vpop.f32.mrb[0].mxu0
        %1156 = vdwg.mxu0
        %v1158 = vsel %vm669, %v886, 0
        %v1161 = vsel %vm794, %v594, 0
        %1163 = vmatprep.subr.bf16.mxu0 0
        %1164 = vmatpush1.bf16.msra.mxu0 %v1161
        %1165 = vmatprep.subr.bf16.mxu0 0
        %1166 = vmatpush1.bf16.msra.mxu0 0
        %1167 = vmatprep.subr.bf16.mxu0 0
        %1168 = vmatpush1.bf16.msra.mxu0 0
        %1169 = vmatprep.subr.bf16.mxu0 0
        %1170 = vmatpush1.bf16.msra.mxu0 0
        %1171 = vmatprep.subr.bf16.mxu0 0
        %1172 = vmatpush1.bf16.msra.mxu0 0
        %1173 = vmatprep.subr.bf16.mxu0 0
        %1174 = vmatpush1.bf16.msra.mxu0 0
        %1175 = vmatprep.subr.bf16.mxu0 0
        %1176 = vmatpush1.bf16.msra.mxu0 0
        %1177 = vmatprep.subr.bf16.mxu0 0
        %1178 = vmatpush1.bf16.msra.mxu0 0
        %1179 = vmatprep.subr.bf16.mxu0 0
        %1180 = vmatpush1.bf16.msra.mxu0 0
        %1181 = vmatprep.subr.bf16.mxu0 0
        %1182 = vmatpush1.bf16.msra.mxu0 0
        %1183 = vmatprep.subr.bf16.mxu0 0
        %1184 = vmatpush1.bf16.msra.mxu0 0
        %1185 = vmatprep.subr.bf16.mxu0 0
        %1186 = vmatpush1.bf16.msra.mxu0 0
        %1187 = vmatprep.subr.bf16.mxu0 0
        %1188 = vmatpush1.bf16.msra.mxu0 0
        %1189 = vmatprep.subr.bf16.mxu0 0
        %1190 = vmatpush1.bf16.msra.mxu0 0
        %1191 = vmatprep.subr.bf16.mxu0 0
        %1192 = vmatpush1.bf16.msra.mxu0 0
        %1193 = vmatprep.subr.bf16.mxu0 0
        %1194 = vmatpush1.bf16.msra.mxu0 0
        %1195 = vmatprep.mubr.bf16.mxu0 0
        %1196 = vmatmul.mubr.bf16.gmra.mrb[0].mxu0 %v1158
        %v1197 = vpop.f32.mrb[0].mxu0
        %v1198 = vadd.f32 %v1151, %v1197
        %v1199 = vpop.f32.mrb[0].mxu0
        %v1200 = vpop.f32.mrb[0].mxu0
        %v1201 = vadd.f32 %v1154, %v1200
        %v1202 = vpop.f32.mrb[0].mxu0
        %1203 = vdwg.mxu0
        %1204 = vrot.lane.b32.xlu0 %v662, 112
        %v1205 = vpop.permute.xlu0 %1204
        %1206 = vrot.lane.b32.xlu0 %v664, 80
        %v1207 = vpop.permute.xlu0 %1206
        %v1209 = vsel %vm669, %v1205, 0
        %v1212 = vsel %vm669, %v1207, 0
        %1214 = vmatprep.subr.bf16.mxu0 0
        %1215 = vmatpush1.bf16.xpose.msra.mxu0 %v1212
        %1216 = vmatprep.subr.bf16.mxu0 0
        %1217 = vmatpush1.bf16.xpose.msra.mxu0 0
        %1218 = vmatprep.subr.bf16.mxu0 0
        %1219 = vmatpush1.bf16.xpose.msra.mxu0 0
        %1220 = vmatprep.subr.bf16.mxu0 0
        %1221 = vmatpush1.bf16.xpose.msra.mxu0 0
        %1222 = vmatprep.subr.bf16.mxu0 0
        %1223 = vmatpush1.bf16.xpose.msra.mxu0 0
        %1224 = vmatprep.subr.bf16.mxu0 0
        %1225 = vmatpush1.bf16.xpose.msra.mxu0 0
        %1226 = vmatprep.subr.bf16.mxu0 0
        %1227 = vmatpush1.bf16.xpose.msra.mxu0 0
        %1228 = vmatprep.subr.bf16.mxu0 0
        %1229 = vmatpush1.bf16.xpose.msra.mxu0 0
        %1230 = vmatprep.subr.bf16.mxu0 0
        %1231 = vmatpush1.bf16.xpose.msra.mxu0 0
        %1232 = vmatprep.subr.bf16.mxu0 0
        %1233 = vmatpush1.bf16.xpose.msra.mxu0 0
        %1234 = vmatprep.subr.bf16.mxu0 0
        %1235 = vmatpush1.bf16.xpose.msra.mxu0 0
        %1236 = vmatprep.subr.bf16.mxu0 0
        %1237 = vmatpush1.bf16.xpose.msra.mxu0 0
        %1238 = vmatprep.subr.bf16.mxu0 0
        %1239 = vmatpush1.bf16.xpose.msra.mxu0 0
        %1240 = vmatprep.subr.bf16.mxu0 0
        %1241 = vmatpush1.bf16.xpose.msra.mxu0 0
        %1242 = vmatprep.subr.bf16.mxu0 0
        %1243 = vmatpush1.bf16.xpose.msra.mxu0 0
        %1244 = vmatprep.subr.bf16.mxu0 0
        %1245 = vmatpush1.bf16.xpose.msra.mxu0 0
        %1246 = vmatprep.mubr.bf16.mxu0 0
        %1247 = vmatmul.mubr.bf16.gmra.mrb[0].mxu0 %v1209
        %v1248 = vpop.f32.mrb[0].mxu0
        %v1249 = vadd.f32 %v588, %v1248
        %v1250 = vpop.f32.mrb[0].mxu0
        %v1251 = vpop.f32.mrb[0].mxu0
        %v1252 = vpop.f32.mrb[0].mxu0
        %1253 = vdwg.mxu0
        %1254 = vrot.lane.b32.xlu0 %v663, 112
        %v1255 = vpop.permute.xlu0 %1254
        %1256 = vrot.lane.b32.xlu0 %v665, 80
        %v1257 = vpop.permute.xlu0 %1256
        %v1259 = vsel %vm669, %v1255, 0
        %v1262 = vsel %vm669, %v1257, 0
        %1264 = vmatprep.subr.bf16.mxu0 0
        %1265 = vmatpush1.bf16.xpose.msra.mxu0 %v1262
        %1266 = vmatprep.subr.bf16.mxu0 0
        %1267 = vmatpush1.bf16.xpose.msra.mxu0 0
        %1268 = vmatprep.subr.bf16.mxu0 0
        %1269 = vmatpush1.bf16.xpose.msra.mxu0 0
        %1270 = vmatprep.subr.bf16.mxu0 0
        %1271 = vmatpush1.bf16.xpose.msra.mxu0 0
        %1272 = vmatprep.subr.bf16.mxu0 0
        %1273 = vmatpush1.bf16.xpose.msra.mxu0 0
        %1274 = vmatprep.subr.bf16.mxu0 0
        %1275 = vmatpush1.bf16.xpose.msra.mxu0 0
        %1276 = vmatprep.subr.bf16.mxu0 0
        %1277 = vmatpush1.bf16.xpose.msra.mxu0 0
        %1278 = vmatprep.subr.bf16.mxu0 0
        %1279 = vmatpush1.bf16.xpose.msra.mxu0 0
        %1280 = vmatprep.subr.bf16.mxu0 0
        %1281 = vmatpush1.bf16.xpose.msra.mxu0 0
        %1282 = vmatprep.subr.bf16.mxu0 0
        %1283 = vmatpush1.bf16.xpose.msra.mxu0 0
        %1284 = vmatprep.subr.bf16.mxu0 0
        %1285 = vmatpush1.bf16.xpose.msra.mxu0 0
        %1286 = vmatprep.subr.bf16.mxu0 0
        %1287 = vmatpush1.bf16.xpose.msra.mxu0 0
        %1288 = vmatprep.subr.bf16.mxu0 0
        %1289 = vmatpush1.bf16.xpose.msra.mxu0 0
        %1290 = vmatprep.subr.bf16.mxu0 0
        %1291 = vmatpush1.bf16.xpose.msra.mxu0 0
        %1292 = vmatprep.subr.bf16.mxu0 0
        %1293 = vmatpush1.bf16.xpose.msra.mxu0 0
        %1294 = vmatprep.subr.bf16.mxu0 0
        %1295 = vmatpush1.bf16.xpose.msra.mxu0 0
        %1296 = vmatprep.mubr.bf16.mxu0 0
        %1297 = vmatmul.mubr.bf16.gmra.mrb[0].mxu0 %v1259
        %v1298 = vpop.f32.mrb[0].mxu0
        %v1299 = vadd.f32 %v589, %v1298
        %v1300 = vpop.f32.mrb[0].mxu0
        %v1301 = vpop.f32.mrb[0].mxu0
        %v1302 = vpop.f32.mrb[0].mxu0
        %1303 = vdwg.mxu0
        %v1304 = vsel %vm669, %v1249, -inf
        %1305 = vmax.xlane.f32.xlu0 %v1304
        %v1306 = vpop.xlane.xlu0 %1305
        %v1307 = vsel %vm669, %v1299, -inf
        %1308 = vmax.xlane.f32.xlu0 %v1307
        %v1309 = vpop.xlane.xlu0 %1308
        %v1310 = vsub.f32 %v1249, %v1306
        %v1311 = vsub.f32 %v1299, %v1309
        %v1312 = vmul.f32 %v1310, 1.442695
        %v1313 = vpow.pop %v1312
        %v1314 = vmul.f32 %v1311, 1.442695
        %v1315 = vpow.pop %v1314
        %v1316 = vsel %vm669, %v1313, 0.0
        %1317 = vadd.xlane.f32.xlu0 %v1316
        %v1318 = vpop.xlane.xlu0 %1317
        %v1319 = vsel %vm669, %v1315, 0.0
        %1320 = vadd.xlane.f32.xlu0 %v1319
        %v1321 = vpop.xlane.xlu0 %1320
        %v1322 = vrcp.pop %v1318
        %v1323 = vrcp.pop %v1321
        %v1324 = vmul.f32 %v1313, %v1322
        %v1325 = vmul.f32 %v1315, %v1323
        %v1326 = vpack.c.bf16 %v1324, %v1324
        %v1327 = vpack.c.bf16 %v1325, %v1325
        %1328 = vrot.lane.b32.xlu0 %v664, 48
        %v1329 = vpop.permute.xlu0 %1328
        %v1331 = vsel %vm669, %v1326, 0
        %v1334 = vsel %vm794, %v1329, 0
        %1336 = vmatprep.subr.bf16.mxu0 0
        %1337 = vmatpush1.bf16.msra.mxu0 %v1334
        %1338 = vmatprep.subr.bf16.mxu0 0
        %1339 = vmatpush1.bf16.msra.mxu0 0
        %1340 = vmatprep.subr.bf16.mxu0 0
        %1341 = vmatpush1.bf16.msra.mxu0 0
        %1342 = vmatprep.subr.bf16.mxu0 0
        %1343 = vmatpush1.bf16.msra.mxu0 0
        %1344 = vmatprep.subr.bf16.mxu0 0
        %1345 = vmatpush1.bf16.msra.mxu0 0
        %1346 = vmatprep.subr.bf16.mxu0 0
        %1347 = vmatpush1.bf16.msra.mxu0 0
        %1348 = vmatprep.subr.bf16.mxu0 0
        %1349 = vmatpush1.bf16.msra.mxu0 0
        %1350 = vmatprep.subr.bf16.mxu0 0
        %1351 = vmatpush1.bf16.msra.mxu0 0
        %1352 = vmatprep.subr.bf16.mxu0 0
        %1353 = vmatpush1.bf16.msra.mxu0 0
        %1354 = vmatprep.subr.bf16.mxu0 0
        %1355 = vmatpush1.bf16.msra.mxu0 0
        %1356 = vmatprep.subr.bf16.mxu0 0
        %1357 = vmatpush1.bf16.msra.mxu0 0
        %1358 = vmatprep.subr.bf16.mxu0 0
        %1359 = vmatpush1.bf16.msra.mxu0 0
        %1360 = vmatprep.subr.bf16.mxu0 0
        %1361 = vmatpush1.bf16.msra.mxu0 0
        %1362 = vmatprep.subr.bf16.mxu0 0
        %1363 = vmatpush1.bf16.msra.mxu0 0
        %1364 = vmatprep.subr.bf16.mxu0 0
        %1365 = vmatpush1.bf16.msra.mxu0 0
        %1366 = vmatprep.subr.bf16.mxu0 0
        %1367 = vmatpush1.bf16.msra.mxu0 0
        %1368 = vmatprep.mubr.bf16.mxu0 0
        %1369 = vmatmul.mubr.bf16.gmra.mrb[0].mxu0 %v1331
        %v1370 = vpop.f32.mrb[0].mxu0
        %v1371 = vadd.f32 0.0, %v1370
        %v1372 = vpop.f32.mrb[0].mxu0
        %v1373 = vpop.f32.mrb[0].mxu0
        %v1374 = vpop.f32.mrb[0].mxu0
        %1375 = vdwg.mxu0
        %1376 = vrot.lane.b32.xlu0 %v665, 48
        %v1377 = vpop.permute.xlu0 %1376
        %v1379 = vsel %vm669, %v1327, 0
        %v1382 = vsel %vm794, %v1377, 0
        %1384 = vmatprep.subr.bf16.mxu0 0
        %1385 = vmatpush1.bf16.msra.mxu0 %v1382
        %1386 = vmatprep.subr.bf16.mxu0 0
        %1387 = vmatpush1.bf16.msra.mxu0 0
        %1388 = vmatprep.subr.bf16.mxu0 0
        %1389 = vmatpush1.bf16.msra.mxu0 0
        %1390 = vmatprep.subr.bf16.mxu0 0
        %1391 = vmatpush1.bf16.msra.mxu0 0
        %1392 = vmatprep.subr.bf16.mxu0 0
        %1393 = vmatpush1.bf16.msra.mxu0 0
        %1394 = vmatprep.subr.bf16.mxu0 0
        %1395 = vmatpush1.bf16.msra.mxu0 0
        %1396 = vmatprep.subr.bf16.mxu0 0
        %1397 = vmatpush1.bf16.msra.mxu0 0
        %1398 = vmatprep.subr.bf16.mxu0 0
        %1399 = vmatpush1.bf16.msra.mxu0 0
        %1400 = vmatprep.subr.bf16.mxu0 0
        %1401 = vmatpush1.bf16.msra.mxu0 0
        %1402 = vmatprep.subr.bf16.mxu0 0
        %1403 = vmatpush1.bf16.msra.mxu0 0
        %1404 = vmatprep.subr.bf16.mxu0 0
        %1405 = vmatpush1.bf16.msra.mxu0 0
        %1406 = vmatprep.subr.bf16.mxu0 0
        %1407 = vmatpush1.bf16.msra.mxu0 0
        %1408 = vmatprep.subr.bf16.mxu0 0
        %1409 = vmatpush1.bf16.msra.mxu0 0
        %1410 = vmatprep.subr.bf16.mxu0 0
        %1411 = vmatpush1.bf16.msra.mxu0 0
        %1412 = vmatprep.subr.bf16.mxu0 0
        %1413 = vmatpush1.bf16.msra.mxu0 0
        %1414 = vmatprep.subr.bf16.mxu0 0
        %1415 = vmatpush1.bf16.msra.mxu0 0
        %1416 = vmatprep.mubr.bf16.mxu0 0
        %1417 = vmatmul.mubr.bf16.gmra.mrb[0].mxu0 %v1379
        %v1418 = vpop.f32.mrb[0].mxu0
        %v1419 = vadd.f32 0.0, %v1418
        %v1420 = vpop.f32.mrb[0].mxu0
        %v1421 = vpop.f32.mrb[0].mxu0
        %v1422 = vpop.f32.mrb[0].mxu0
        %1423 = vdwg.mxu0
        %v1424 = vpack.c.bf16 %v1419, %v1371
        %v1426 = vsel %vm669, %v1424, 0
        %v1429 = vsel %vm794, %v596, 0
        %1431 = vmatprep.subr.bf16.mxu0 0
        %1432 = vmatpush1.bf16.msra.mxu0 %v1429
        %1433 = vmatprep.subr.bf16.mxu0 0
        %1434 = vmatpush1.bf16.msra.mxu0 0
        %1435 = vmatprep.subr.bf16.mxu0 0
        %1436 = vmatpush1.bf16.msra.mxu0 0
        %1437 = vmatprep.subr.bf16.mxu0 0
        %1438 = vmatpush1.bf16.msra.mxu0 0
        %1439 = vmatprep.subr.bf16.mxu0 0
        %1440 = vmatpush1.bf16.msra.mxu0 0
        %1441 = vmatprep.subr.bf16.mxu0 0
        %1442 = vmatpush1.bf16.msra.mxu0 0
        %1443 = vmatprep.subr.bf16.mxu0 0
        %1444 = vmatpush1.bf16.msra.mxu0 0
        %1445 = vmatprep.subr.bf16.mxu0 0
        %1446 = vmatpush1.bf16.msra.mxu0 0
        %1447 = vmatprep.subr.bf16.mxu0 0
        %1448 = vmatpush1.bf16.msra.mxu0 0
        %1449 = vmatprep.subr.bf16.mxu0 0
        %1450 = vmatpush1.bf16.msra.mxu0 0
        %1451 = vmatprep.subr.bf16.mxu0 0
        %1452 = vmatpush1.bf16.msra.mxu0 0
        %1453 = vmatprep.subr.bf16.mxu0 0
        %1454 = vmatpush1.bf16.msra.mxu0 0
        %1455 = vmatprep.subr.bf16.mxu0 0
        %1456 = vmatpush1.bf16.msra.mxu0 0
        %1457 = vmatprep.subr.bf16.mxu0 0
        %1458 = vmatpush1.bf16.msra.mxu0 0
        %1459 = vmatprep.subr.bf16.mxu0 0
        %1460 = vmatpush1.bf16.msra.mxu0 0
        %1461 = vmatprep.subr.bf16.mxu0 0
        %1462 = vmatpush1.bf16.msra.mxu0 0
        %1463 = vmatprep.mubr.bf16.mxu0 0
        %1464 = vmatmul.mubr.bf16.gmra.mrb[0].mxu0 %v1426
        %v1465 = vpop.f32.mrb[0].mxu0
        %v1466 = vadd.f32 0.0, %v1465
        %v1467 = vpop.f32.mrb[0].mxu0
        %v1468 = vpop.f32.mrb[0].mxu0
        %v1469 = vadd.f32 0.0, %v1468
        %v1470 = vpop.f32.mrb[0].mxu0
        %1471 = vdwg.mxu0
        %v1472 = vadd.f32 %v1198, %v1466
        %v1473 = vadd.f32 %v1201, %v1469
        %1474 = vrot.lane.b32.xlu0 %v662, 104
        %v1475 = vpop.permute.xlu0 %1474
        %1476 = vrot.lane.b32.xlu0 %v664, 72
        %v1477 = vpop.permute.xlu0 %1476
        %v1479 = vsel %vm669, %v1475, 0
        %v1482 = vsel %vm669, %v1477, 0
        %1484 = vmatprep.subr.bf16.mxu0 0
        %1485 = vmatpush1.bf16.xpose.msra.mxu0 %v1482
        %1486 = vmatprep.subr.bf16.mxu0 0
        %1487 = vmatpush1.bf16.xpose.msra.mxu0 0
        %1488 = vmatprep.subr.bf16.mxu0 0
        %1489 = vmatpush1.bf16.xpose.msra.mxu0 0
        %1490 = vmatprep.subr.bf16.mxu0 0
        %1491 = vmatpush1.bf16.xpose.msra.mxu0 0
        %1492 = vmatprep.subr.bf16.mxu0 0
        %1493 = vmatpush1.bf16.xpose.msra.mxu0 0
        %1494 = vmatprep.subr.bf16.mxu0 0
        %1495 = vmatpush1.bf16.xpose.msra.mxu0 0
        %1496 = vmatprep.subr.bf16.mxu0 0
        %1497 = vmatpush1.bf16.xpose.msra.mxu0 0
        %1498 = vmatprep.subr.bf16.mxu0 0
        %1499 = vmatpush1.bf16.xpose.msra.mxu0 0
        %1500 = vmatprep.subr.bf16.mxu0 0
        %1501 = vmatpush1.bf16.xpose.msra.mxu0 0
        %1502 = vmatprep.subr.bf16.mxu0 0
        %1503 = vmatpush1.bf16.xpose.msra.mxu0 0
        %1504 = vmatprep.subr.bf16.mxu0 0
        %1505 = vmatpush1.bf16.xpose.msra.mxu0 0
        %1506 = vmatprep.subr.bf16.mxu0 0
        %1507 = vmatpush1.bf16.xpose.msra.mxu0 0
        %1508 = vmatprep.subr.bf16.mxu0 0
        %1509 = vmatpush1.bf16.xpose.msra.mxu0 0
        %1510 = vmatprep.subr.bf16.mxu0 0
        %1511 = vmatpush1.bf16.xpose.msra.mxu0 0
        %1512 = vmatprep.subr.bf16.mxu0 0
        %1513 = vmatpush1.bf16.xpose.msra.mxu0 0
        %1514 = vmatprep.subr.bf16.mxu0 0
        %1515 = vmatpush1.bf16.xpose.msra.mxu0 0
        %1516 = vmatprep.mubr.bf16.mxu0 0
        %1517 = vmatmul.mubr.bf16.gmra.mrb[0].mxu0 %v1479
        %v1518 = vpop.f32.mrb[0].mxu0
        %v1519 = vadd.f32 %v588, %v1518
        %v1520 = vpop.f32.mrb[0].mxu0
        %v1521 = vpop.f32.mrb[0].mxu0
        %v1522 = vpop.f32.mrb[0].mxu0
        %1523 = vdwg.mxu0
        %1524 = vrot.lane.b32.xlu0 %v663, 104
        %v1525 = vpop.permute.xlu0 %1524
        %1526 = vrot.lane.b32.xlu0 %v665, 72
        %v1527 = vpop.permute.xlu0 %1526
        %v1529 = vsel %vm669, %v1525, 0
        %v1532 = vsel %vm669, %v1527, 0
        %1534 = vmatprep.subr.bf16.mxu0 0
        %1535 = vmatpush1.bf16.xpose.msra.mxu0 %v1532
        %1536 = vmatprep.subr.bf16.mxu0 0
        %1537 = vmatpush1.bf16.xpose.msra.mxu0 0
        %1538 = vmatprep.subr.bf16.mxu0 0
        %1539 = vmatpush1.bf16.xpose.msra.mxu0 0
        %1540 = vmatprep.subr.bf16.mxu0 0
        %1541 = vmatpush1.bf16.xpose.msra.mxu0 0
        %1542 = vmatprep.subr.bf16.mxu0 0
        %1543 = vmatpush1.bf16.xpose.msra.mxu0 0
        %1544 = vmatprep.subr.bf16.mxu0 0
        %1545 = vmatpush1.bf16.xpose.msra.mxu0 0
        %1546 = vmatprep.subr.bf16.mxu0 0
        %1547 = vmatpush1.bf16.xpose.msra.mxu0 0
        %1548 = vmatprep.subr.bf16.mxu0 0
        %1549 = vmatpush1.bf16.xpose.msra.mxu0 0
        %1550 = vmatprep.subr.bf16.mxu0 0
        %1551 = vmatpush1.bf16.xpose.msra.mxu0 0
        %1552 = vmatprep.subr.bf16.mxu0 0
        %1553 = vmatpush1.bf16.xpose.msra.mxu0 0
        %1554 = vmatprep.subr.bf16.mxu0 0
        %1555 = vmatpush1.bf16.xpose.msra.mxu0 0
        %1556 = vmatprep.subr.bf16.mxu0 0
        %1557 = vmatpush1.bf16.xpose.msra.mxu0 0
        %1558 = vmatprep.subr.bf16.mxu0 0
        %1559 = vmatpush1.bf16.xpose.msra.mxu0 0
        %1560 = vmatprep.subr.bf16.mxu0 0
        %1561 = vmatpush1.bf16.xpose.msra.mxu0 0
        %1562 = vmatprep.subr.bf16.mxu0 0
        %1563 = vmatpush1.bf16.xpose.msra.mxu0 0
        %1564 = vmatprep.subr.bf16.mxu0 0
        %1565 = vmatpush1.bf16.xpose.msra.mxu0 0
        %1566 = vmatprep.mubr.bf16.mxu0 0
        %1567 = vmatmul.mubr.bf16.gmra.mrb[0].mxu0 %v1529
        %v1568 = vpop.f32.mrb[0].mxu0
        %v1569 = vadd.f32 %v589, %v1568
        %v1570 = vpop.f32.mrb[0].mxu0
        %v1571 = vpop.f32.mrb[0].mxu0
        %v1572 = vpop.f32.mrb[0].mxu0
        %1573 = vdwg.mxu0
        %v1574 = vsel %vm669, %v1519, -inf
        %1575 = vmax.xlane.f32.xlu0 %v1574
        %v1576 = vpop.xlane.xlu0 %1575
        %v1577 = vsel %vm669, %v1569, -inf
        %1578 = vmax.xlane.f32.xlu0 %v1577
        %v1579 = vpop.xlane.xlu0 %1578
        %v1580 = vsub.f32 %v1519, %v1576
        %v1581 = vsub.f32 %v1569, %v1579
        %v1582 = vmul.f32 %v1580, 1.442695
        %v1583 = vpow.pop %v1582
        %v1584 = vmul.f32 %v1581, 1.442695
        %v1585 = vpow.pop %v1584
        %v1586 = vsel %vm669, %v1583, 0.0
        %1587 = vadd.xlane.f32.xlu0 %v1586
        %v1588 = vpop.xlane.xlu0 %1587
        %v1589 = vsel %vm669, %v1585, 0.0
        %1590 = vadd.xlane.f32.xlu0 %v1589
        %v1591 = vpop.xlane.xlu0 %1590
        %v1592 = vrcp.pop %v1588
        %v1593 = vrcp.pop %v1591
        %v1594 = vmul.f32 %v1583, %v1592
        %v1595 = vmul.f32 %v1585, %v1593
        %v1596 = vpack.c.bf16 %v1594, %v1594
        %v1597 = vpack.c.bf16 %v1595, %v1595
        %1598 = vrot.lane.b32.xlu0 %v664, 40
        %v1599 = vpop.permute.xlu0 %1598
        %v1601 = vsel %vm669, %v1596, 0
        %v1604 = vsel %vm794, %v1599, 0
        %1606 = vmatprep.subr.bf16.mxu0 0
        %1607 = vmatpush1.bf16.msra.mxu0 %v1604
        %1608 = vmatprep.subr.bf16.mxu0 0
        %1609 = vmatpush1.bf16.msra.mxu0 0
        %1610 = vmatprep.subr.bf16.mxu0 0
        %1611 = vmatpush1.bf16.msra.mxu0 0
        %1612 = vmatprep.subr.bf16.mxu0 0
        %1613 = vmatpush1.bf16.msra.mxu0 0
        %1614 = vmatprep.subr.bf16.mxu0 0
        %1615 = vmatpush1.bf16.msra.mxu0 0
        %1616 = vmatprep.subr.bf16.mxu0 0
        %1617 = vmatpush1.bf16.msra.mxu0 0
        %1618 = vmatprep.subr.bf16.mxu0 0
        %1619 = vmatpush1.bf16.msra.mxu0 0
        %1620 = vmatprep.subr.bf16.mxu0 0
        %1621 = vmatpush1.bf16.msra.mxu0 0
        %1622 = vmatprep.subr.bf16.mxu0 0
        %1623 = vmatpush1.bf16.msra.mxu0 0
        %1624 = vmatprep.subr.bf16.mxu0 0
        %1625 = vmatpush1.bf16.msra.mxu0 0
        %1626 = vmatprep.subr.bf16.mxu0 0
        %1627 = vmatpush1.bf16.msra.mxu0 0
        %1628 = vmatprep.subr.bf16.mxu0 0
        %1629 = vmatpush1.bf16.msra.mxu0 0
        %1630 = vmatprep.subr.bf16.mxu0 0
        %1631 = vmatpush1.bf16.msra.mxu0 0
        %1632 = vmatprep.subr.bf16.mxu0 0
        %1633 = vmatpush1.bf16.msra.mxu0 0
        %1634 = vmatprep.subr.bf16.mxu0 0
        %1635 = vmatpush1.bf16.msra.mxu0 0
        %1636 = vmatprep.subr.bf16.mxu0 0
        %1637 = vmatpush1.bf16.msra.mxu0 0
        %1638 = vmatprep.mubr.bf16.mxu0 0
        %1639 = vmatmul.mubr.bf16.gmra.mrb[0].mxu0 %v1601
        %v1640 = vpop.f32.mrb[0].mxu0
        %v1641 = vadd.f32 0.0, %v1640
        %v1642 = vpop.f32.mrb[0].mxu0
        %v1643 = vpop.f32.mrb[0].mxu0
        %v1644 = vpop.f32.mrb[0].mxu0
        %1645 = vdwg.mxu0
        %1646 = vrot.lane.b32.xlu0 %v665, 40
        %v1647 = vpop.permute.xlu0 %1646
        %v1649 = vsel %vm669, %v1597, 0
        %v1652 = vsel %vm794, %v1647, 0
        %1654 = vmatprep.subr.bf16.mxu0 0
        %1655 = vmatpush1.bf16.msra.mxu0 %v1652
        %1656 = vmatprep.subr.bf16.mxu0 0
        %1657 = vmatpush1.bf16.msra.mxu0 0
        %1658 = vmatprep.subr.bf16.mxu0 0
        %1659 = vmatpush1.bf16.msra.mxu0 0
        %1660 = vmatprep.subr.bf16.mxu0 0
        %1661 = vmatpush1.bf16.msra.mxu0 0
        %1662 = vmatprep.subr.bf16.mxu0 0
        %1663 = vmatpush1.bf16.msra.mxu0 0
        %1664 = vmatprep.subr.bf16.mxu0 0
        %1665 = vmatpush1.bf16.msra.mxu0 0
        %1666 = vmatprep.subr.bf16.mxu0 0
        %1667 = vmatpush1.bf16.msra.mxu0 0
        %1668 = vmatprep.subr.bf16.mxu0 0
        %1669 = vmatpush1.bf16.msra.mxu0 0
        %1670 = vmatprep.subr.bf16.mxu0 0
        %1671 = vmatpush1.bf16.msra.mxu0 0
        %1672 = vmatprep.subr.bf16.mxu0 0
        %1673 = vmatpush1.bf16.msra.mxu0 0
        %1674 = vmatprep.subr.bf16.mxu0 0
        %1675 = vmatpush1.bf16.msra.mxu0 0
        %1676 = vmatprep.subr.bf16.mxu0 0
        %1677 = vmatpush1.bf16.msra.mxu0 0
        %1678 = vmatprep.subr.bf16.mxu0 0
        %1679 = vmatpush1.bf16.msra.mxu0 0
        %1680 = vmatprep.subr.bf16.mxu0 0
        %1681 = vmatpush1.bf16.msra.mxu0 0
        %1682 = vmatprep.subr.bf16.mxu0 0
        %1683 = vmatpush1.bf16.msra.mxu0 0
        %1684 = vmatprep.subr.bf16.mxu0 0
        %1685 = vmatpush1.bf16.msra.mxu0 0
        %1686 = vmatprep.mubr.bf16.mxu0 0
        %1687 = vmatmul.mubr.bf16.gmra.mrb[0].mxu0 %v1649
        %v1688 = vpop.f32.mrb[0].mxu0
        %v1689 = vadd.f32 0.0, %v1688
        %v1690 = vpop.f32.mrb[0].mxu0
        %v1691 = vpop.f32.mrb[0].mxu0
        %v1692 = vpop.f32.mrb[0].mxu0
        %1693 = vdwg.mxu0
        %v1694 = vpack.c.bf16 %v1689, %v1641
        %v1696 = vsel %vm669, %v1694, 0
        %v1699 = vsel %vm794, %v597, 0
        %1701 = vmatprep.subr.bf16.mxu0 0
        %1702 = vmatpush1.bf16.msra.mxu0 %v1699
        %1703 = vmatprep.subr.bf16.mxu0 0
        %1704 = vmatpush1.bf16.msra.mxu0 0
        %1705 = vmatprep.subr.bf16.mxu0 0
        %1706 = vmatpush1.bf16.msra.mxu0 0
        %1707 = vmatprep.subr.bf16.mxu0 0
        %1708 = vmatpush1.bf16.msra.mxu0 0
        %1709 = vmatprep.subr.bf16.mxu0 0
        %1710 = vmatpush1.bf16.msra.mxu0 0
        %1711 = vmatprep.subr.bf16.mxu0 0
        %1712 = vmatpush1.bf16.msra.mxu0 0
        %1713 = vmatprep.subr.bf16.mxu0 0
        %1714 = vmatpush1.bf16.msra.mxu0 0
        %1715 = vmatprep.subr.bf16.mxu0 0
        %1716 = vmatpush1.bf16.msra.mxu0 0
        %1717 = vmatprep.subr.bf16.mxu0 0
        %1718 = vmatpush1.bf16.msra.mxu0 0
        %1719 = vmatprep.subr.bf16.mxu0 0
        %1720 = vmatpush1.bf16.msra.mxu0 0
        %1721 = vmatprep.subr.bf16.mxu0 0
        %1722 = vmatpush1.bf16.msra.mxu0 0
        %1723 = vmatprep.subr.bf16.mxu0 0
        %1724 = vmatpush1.bf16.msra.mxu0 0
        %1725 = vmatprep.subr.bf16.mxu0 0
        %1726 = vmatpush1.bf16.msra.mxu0 0
        %1727 = vmatprep.subr.bf16.mxu0 0
        %1728 = vmatpush1.bf16.msra.mxu0 0
        %1729 = vmatprep.subr.bf16.mxu0 0
        %1730 = vmatpush1.bf16.msra.mxu0 0
        %1731 = vmatprep.subr.bf16.mxu0 0
        %1732 = vmatpush1.bf16.msra.mxu0 0
        %1733 = vmatprep.mubr.bf16.mxu0 0
        %1734 = vmatmul.mubr.bf16.gmra.mrb[0].mxu0 %v1696
        %v1735 = vpop.f32.mrb[0].mxu0
        %v1736 = vadd.f32 0.0, %v1735
        %v1737 = vpop.f32.mrb[0].mxu0
        %v1738 = vpop.f32.mrb[0].mxu0
        %v1739 = vadd.f32 0.0, %v1738
        %v1740 = vpop.f32.mrb[0].mxu0
        %1741 = vdwg.mxu0
        %v1742 = vadd.f32 %v1472, %v1736
        %v1743 = vadd.f32 %v1473, %v1739
        %v1744 = vlaneseq
        %v1745 = vshrl.u32 %v1744, 7
        %v1746 = vsub.s32 1, %v1745
        %v1747 = vrot.slane %v571, %v1746
        %v1748 = vadd.f32 %v1742, %v1747
        %v1749 = vadd.f32 %v1743, %v1747
        %v1750 = vadd.f32 %v569, %v1748
        %v1751 = vadd.f32 %v570, %v1749
        %v1752 = vsel %vm615, %v1750, 0.0
        %1753 = vadd.xlane.f32.xlu0 %v1752
        %v1754 = vpop.xlane.xlu0 %1753
        %v1755 = vsel %vm615, %v1751, 0.0
        %1756 = vadd.xlane.f32.xlu0 %v1755
        %v1757 = vpop.xlane.xlu0 %1756
        %v1758 = vrcp.pop 32.0
        %v1759 = vmul.f32 %v1754, %v1758
        %v1760 = vmul.f32 %v1757, %v1758
        %v1761 = vsub.f32 %v1750, %v1759
        %v1762 = vsub.f32 %v1751, %v1760
        %v1763 = vmul.f32 %v1761, %v1761
        %v1764 = vmul.f32 %v1762, %v1762
        %v1765 = vsel %vm615, %v1763, 0.0
        %1766 = vadd.xlane.f32.xlu0 %v1765
        %v1767 = vpop.xlane.xlu0 %1766
        %v1768 = vsel %vm615, %v1764, 0.0
        %1769 = vadd.xlane.f32.xlu0 %v1768
        %v1770 = vpop.xlane.xlu0 %1769
        %v1771 = vmul.f32 %v1767, %v1758
        %v1772 = vmul.f32 %v1770, %v1758
        %v1773 = vadd.f32 %v1771, 1e-05
        %v1774 = vadd.f32 %v1772, 1e-05
        %v1775 = vrsqrt.pop %v1773
        %v1776 = vrsqrt.pop %v1774
        %v1777 = vmul.f32 %v1761, %v1775
        %v1778 = vmul.f32 %v1762, %v1776
        %v1779 = vlaneseq
        %v1780 = vshrl.u32 %v1779, 7
        %v1781 = vsub.s32 6, %v1780
        %v1782 = vrot.slane %v571, %v1781
        %v1783 = vmul.f32 %v1777, %v1782
        %v1784 = vmul.f32 %v1778, %v1782
        %v1785 = vlaneseq
        %v1786 = vshrl.u32 %v1785, 7
        %v1787 = vsub.s32 7, %v1786
        %v1788 = vrot.slane %v571, %v1787
        %v1789 = vadd.f32 %v1783, %v1788
        %v1790 = vadd.f32 %v1784, %v1788
        %v1791 = vld [vmem:[%s540] sm:$0xf]
        %v1792 = vld [vmem:[%s540 + $0x4] sm:$0xf]
        %v1793 = vld [vmem:[%s540 + $0x8] sm:$0xf]
        %v1794 = vld [vmem:[%s540 + $0xc] sm:$0xf]
        %v1795 = vld [vmem:[%s545] sm:$0xf]
        %v1796 = vld [vmem:[%s545 + $0x4] sm:$0xf]
        %v1797 = vld [vmem:[%s545 + $0x8] sm:$0xf]
        %v1798 = vld [vmem:[%s545 + $0xc] sm:$0xf]
        %v1799 = vpack.c.bf16 %v1790, %v1789
        %v1800 = vlaneseq
        %v1801 = vshrl.u32 %v1800, 7
        %v1802 = vsub.s32 2, %v1801
        %v1803 = vrot.slane %v571, %v1802
        %v1808 = vunpack.c.l.b16 %v1791
        %v1809 = vunpack.c.l.b16 %v1792
        %v1810 = vunpack.c.l.b16 %v1793
        %v1811 = vunpack.c.l.b16 %v1794
        %v1812 = vpack.c.b16 %v1809, %v1808
        %v1813 = vpack.c.b16 %v1811, %v1810
        %v1817 = vsel %vm615, %v1799, 0
        %1819 = vmatprep.subr.bf16.mxu0 0
        %1820 = vmatpush1.bf16.msra.mxu0 %v1812
        %1821 = vmatprep.subr.bf16.mxu0 0
        %1822 = vmatpush1.bf16.msra.mxu0 %v1813
        %1823 = vmatprep.subr.bf16.mxu0 0
        %1824 = vmatpush1.bf16.msra.mxu0 0
        %1825 = vmatprep.subr.bf16.mxu0 0
        %1826 = vmatpush1.bf16.msra.mxu0 0
        %1827 = vmatprep.subr.bf16.mxu0 0
        %1828 = vmatpush1.bf16.msra.mxu0 0
        %1829 = vmatprep.subr.bf16.mxu0 0
        %1830 = vmatpush1.bf16.msra.mxu0 0
        %1831 = vmatprep.subr.bf16.mxu0 0
        %1832 = vmatpush1.bf16.msra.mxu0 0
        %1833 = vmatprep.subr.bf16.mxu0 0
        %1834 = vmatpush1.bf16.msra.mxu0 0
        %1835 = vmatprep.subr.bf16.mxu0 0
        %1836 = vmatpush1.bf16.msra.mxu0 0
        %1837 = vmatprep.subr.bf16.mxu0 0
        %1838 = vmatpush1.bf16.msra.mxu0 0
        %1839 = vmatprep.subr.bf16.mxu0 0
        %1840 = vmatpush1.bf16.msra.mxu0 0
        %1841 = vmatprep.subr.bf16.mxu0 0
        %1842 = vmatpush1.bf16.msra.mxu0 0
        %1843 = vmatprep.subr.bf16.mxu0 0
        %1844 = vmatpush1.bf16.msra.mxu0 0
        %1845 = vmatprep.subr.bf16.mxu0 0
        %1846 = vmatpush1.bf16.msra.mxu0 0
        %1847 = vmatprep.subr.bf16.mxu0 0
        %1848 = vmatpush1.bf16.msra.mxu0 0
        %1849 = vmatprep.subr.bf16.mxu0 0
        %1850 = vmatpush1.bf16.msra.mxu0 0
        %1851 = vmatprep.mubr.bf16.mxu0 0
        %1852 = vmatmul.mubr.bf16.gmra.mrb[0].mxu0 %v1817
        %v1853 = vpop.f32.mrb[0].mxu0
        %v1854 = vadd.f32 %v1803, %v1853
        %v1855 = vpop.f32.mrb[0].mxu0
        %v1856 = vpop.f32.mrb[0].mxu0
        %v1857 = vadd.f32 %v1803, %v1856
        %v1858 = vpop.f32.mrb[0].mxu0
        %1859 = vdwg.mxu0
        %v1862 = vunpack.c.l.b16 %v558
        %v1863 = vunpack.c.l.b16 %v559
        %v1864 = vpack.c.b16 %v1863, %v1862
        %1865 = vrot.lane.b32.xlu0 %v1812, 96
        %v1866 = vpop.permute.xlu0 %1865
        %1867 = vrot.lane.b32.xlu0 %v1813, 96
        %v1868 = vpop.permute.xlu0 %1867
        %1872 = vrot.lane.b32.xlu0 %v1803, 96
        %v1873 = vpop.permute.xlu0 %1872
        %v1876 = vsel %vm615, %v1864, 0
        %1878 = vmatprep.subr.bf16.mxu0 0
        %1879 = vmatpush1.bf16.msra.mxu0 %v1866
        %1880 = vmatprep.subr.bf16.mxu0 0
        %1881 = vmatpush1.bf16.msra.mxu0 %v1868
        %1882 = vmatprep.subr.bf16.mxu0 0
        %1883 = vmatpush1.bf16.msra.mxu0 0
        %1884 = vmatprep.subr.bf16.mxu0 0
        %1885 = vmatpush1.bf16.msra.mxu0 0
        %1886 = vmatprep.subr.bf16.mxu0 0
        %1887 = vmatpush1.bf16.msra.mxu0 0
        %1888 = vmatprep.subr.bf16.mxu0 0
        %1889 = vmatpush1.bf16.msra.mxu0 0
        %1890 = vmatprep.subr.bf16.mxu0 0
        %1891 = vmatpush1.bf16.msra.mxu0 0
        %1892 = vmatprep.subr.bf16.mxu0 0
        %1893 = vmatpush1.bf16.msra.mxu0 0
        %1894 = vmatprep.subr.bf16.mxu0 0
        %1895 = vmatpush1.bf16.msra.mxu0 0
        %1896 = vmatprep.subr.bf16.mxu0 0
        %1897 = vmatpush1.bf16.msra.mxu0 0
        %1898 = vmatprep.subr.bf16.mxu0 0
        %1899 = vmatpush1.bf16.msra.mxu0 0
        %1900 = vmatprep.subr.bf16.mxu0 0
        %1901 = vmatpush1.bf16.msra.mxu0 0
        %1902 = vmatprep.subr.bf16.mxu0 0
        %1903 = vmatpush1.bf16.msra.mxu0 0
        %1904 = vmatprep.subr.bf16.mxu0 0
        %1905 = vmatpush1.bf16.msra.mxu0 0
        %1906 = vmatprep.subr.bf16.mxu0 0
        %1907 = vmatpush1.bf16.msra.mxu0 0
        %1908 = vmatprep.subr.bf16.mxu0 0
        %1909 = vmatpush1.bf16.msra.mxu0 0
        %1910 = vmatprep.mubr.bf16.mxu0 0
        %1911 = vmatmul.mubr.bf16.gmra.mrb[0].mxu0 %v1876
        %v1912 = vpop.f32.mrb[0].mxu0
        %v1913 = vadd.f32 %v1873, %v1912
        %v1914 = vpop.f32.mrb[0].mxu0
        %v1915 = vpop.f32.mrb[0].mxu0
        %v1916 = vadd.f32 %v1873, %v1915
        %v1917 = vpop.f32.mrb[0].mxu0
        %1918 = vdwg.mxu0
        %v1919 = vmul.f32 %v1854, 0.35355338
        %v1920 = vmul.f32 %v1857, 0.35355338
        %v1921 = vpack.c.bf16 %v1919, %v1919
        %v1922 = vpack.c.bf16 %v1920, %v1920
        %v1923 = vpack.c.bf16 %v1913, %v1913
        %v1924 = vpack.c.bf16 %v1916, %v1916
        %v1926 = vsel %vm669, %v1921, 0
        %v1929 = vsel %vm669, %v1923, 0
        %1931 = vmatprep.subr.bf16.mxu0 0
        %1932 = vmatpush1.bf16.xpose.msra.mxu0 %v1929
        %1933 = vmatprep.subr.bf16.mxu0 0
        %1934 = vmatpush1.bf16.xpose.msra.mxu0 0
        %1935 = vmatprep.subr.bf16.mxu0 0
        %1936 = vmatpush1.bf16.xpose.msra.mxu0 0
        %1937 = vmatprep.subr.bf16.mxu0 0
        %1938 = vmatpush1.bf16.xpose.msra.mxu0 0
        %1939 = vmatprep.subr.bf16.mxu0 0
        %1940 = vmatpush1.bf16.xpose.msra.mxu0 0
        %1941 = vmatprep.subr.bf16.mxu0 0
        %1942 = vmatpush1.bf16.xpose.msra.mxu0 0
        %1943 = vmatprep.subr.bf16.mxu0 0
        %1944 = vmatpush1.bf16.xpose.msra.mxu0 0
        %1945 = vmatprep.subr.bf16.mxu0 0
        %1946 = vmatpush1.bf16.xpose.msra.mxu0 0
        %1947 = vmatprep.subr.bf16.mxu0 0
        %1948 = vmatpush1.bf16.xpose.msra.mxu0 0
        %1949 = vmatprep.subr.bf16.mxu0 0
        %1950 = vmatpush1.bf16.xpose.msra.mxu0 0
        %1951 = vmatprep.subr.bf16.mxu0 0
        %1952 = vmatpush1.bf16.xpose.msra.mxu0 0
        %1953 = vmatprep.subr.bf16.mxu0 0
        %1954 = vmatpush1.bf16.xpose.msra.mxu0 0
        %1955 = vmatprep.subr.bf16.mxu0 0
        %1956 = vmatpush1.bf16.xpose.msra.mxu0 0
        %1957 = vmatprep.subr.bf16.mxu0 0
        %1958 = vmatpush1.bf16.xpose.msra.mxu0 0
        %1959 = vmatprep.subr.bf16.mxu0 0
        %1960 = vmatpush1.bf16.xpose.msra.mxu0 0
        %1961 = vmatprep.subr.bf16.mxu0 0
        %1962 = vmatpush1.bf16.xpose.msra.mxu0 0
        %1963 = vmatprep.mubr.bf16.mxu0 0
        %1964 = vmatmul.mubr.bf16.gmra.mrb[0].mxu0 %v1926
        %v1965 = vpop.f32.mrb[0].mxu0
        %v1966 = vadd.f32 0.0, %v1965
        %v1967 = vpop.f32.mrb[0].mxu0
        %v1968 = vpop.f32.mrb[0].mxu0
        %v1969 = vpop.f32.mrb[0].mxu0
        %1970 = vdwg.mxu0
        %v1972 = vsel %vm669, %v1922, 0
        %v1975 = vsel %vm669, %v1924, 0
        %1977 = vmatprep.subr.bf16.mxu0 0
        %1978 = vmatpush1.bf16.xpose.msra.mxu0 %v1975
        %1979 = vmatprep.subr.bf16.mxu0 0
        %1980 = vmatpush1.bf16.xpose.msra.mxu0 0
        %1981 = vmatprep.subr.bf16.mxu0 0
        %1982 = vmatpush1.bf16.xpose.msra.mxu0 0
        %1983 = vmatprep.subr.bf16.mxu0 0
        %1984 = vmatpush1.bf16.xpose.msra.mxu0 0
        %1985 = vmatprep.subr.bf16.mxu0 0
        %1986 = vmatpush1.bf16.xpose.msra.mxu0 0
        %1987 = vmatprep.subr.bf16.mxu0 0
        %1988 = vmatpush1.bf16.xpose.msra.mxu0 0
        %1989 = vmatprep.subr.bf16.mxu0 0
        %1990 = vmatpush1.bf16.xpose.msra.mxu0 0
        %1991 = vmatprep.subr.bf16.mxu0 0
        %1992 = vmatpush1.bf16.xpose.msra.mxu0 0
        %1993 = vmatprep.subr.bf16.mxu0 0
        %1994 = vmatpush1.bf16.xpose.msra.mxu0 0
        %1995 = vmatprep.subr.bf16.mxu0 0
        %1996 = vmatpush1.bf16.xpose.msra.mxu0 0
        %1997 = vmatprep.subr.bf16.mxu0 0
        %1998 = vmatpush1.bf16.xpose.msra.mxu0 0
        %1999 = vmatprep.subr.bf16.mxu0 0
        %2000 = vmatpush1.bf16.xpose.msra.mxu0 0
        %2001 = vmatprep.subr.bf16.mxu0 0
        %2002 = vmatpush1.bf16.xpose.msra.mxu0 0
        %2003 = vmatprep.subr.bf16.mxu0 0
        %2004 = vmatpush1.bf16.xpose.msra.mxu0 0
        %2005 = vmatprep.subr.bf16.mxu0 0
        %2006 = vmatpush1.bf16.xpose.msra.mxu0 0
        %2007 = vmatprep.subr.bf16.mxu0 0
        %2008 = vmatpush1.bf16.xpose.msra.mxu0 0
        %2009 = vmatprep.mubr.bf16.mxu0 0
        %2010 = vmatmul.mubr.bf16.gmra.mrb[0].mxu0 %v1972
        %v2011 = vpop.f32.mrb[0].mxu0
        %v2012 = vadd.f32 0.0, %v2011
        %v2013 = vpop.f32.mrb[0].mxu0
        %v2014 = vpop.f32.mrb[0].mxu0
        %v2015 = vpop.f32.mrb[0].mxu0
        %2016 = vdwg.mxu0
        %v2017 = vsel %vm669, %v1966, -inf
        %2018 = vmax.xlane.f32.xlu0 %v2017
        %v2019 = vpop.xlane.xlu0 %2018
        %v2020 = vsel %vm669, %v2012, -inf
        %2021 = vmax.xlane.f32.xlu0 %v2020
        %v2022 = vpop.xlane.xlu0 %2021
        %v2023 = vsub.f32 %v1966, %v2019
        %v2024 = vsub.f32 %v2012, %v2022
        %v2025 = vmul.f32 %v2023, 1.442695
        %v2026 = vpow.pop %v2025
        %v2027 = vmul.f32 %v2024, 1.442695
        %v2028 = vpow.pop %v2027
        %v2029 = vsel %vm669, %v2026, 0.0
        %2030 = vadd.xlane.f32.xlu0 %v2029
        %v2031 = vpop.xlane.xlu0 %2030
        %v2032 = vsel %vm669, %v2028, 0.0
        %2033 = vadd.xlane.f32.xlu0 %v2032
        %v2034 = vpop.xlane.xlu0 %2033
        %v2035 = vrcp.pop %v2031
        %v2036 = vrcp.pop %v2034
        %v2037 = vmul.f32 %v2026, %v2035
        %v2038 = vmul.f32 %v2028, %v2036
        %v2039 = vpack.c.bf16 %v2037, %v2037
        %v2040 = vpack.c.bf16 %v2038, %v2038
        %2042 = vrot.lane.b32.xlu0 %v1923, 96
        %v2043 = vpop.permute.xlu0 %2042
        %v2045 = vsel %vm669, %v2039, 0
        %v2048 = vsel %vm794, %v2043, 0
        %2050 = vmatprep.subr.bf16.mxu0 0
        %2051 = vmatpush1.bf16.msra.mxu0 %v2048
        %2052 = vmatprep.subr.bf16.mxu0 0
        %2053 = vmatpush1.bf16.msra.mxu0 0
        %2054 = vmatprep.subr.bf16.mxu0 0
        %2055 = vmatpush1.bf16.msra.mxu0 0
        %2056 = vmatprep.subr.bf16.mxu0 0
        %2057 = vmatpush1.bf16.msra.mxu0 0
        %2058 = vmatprep.subr.bf16.mxu0 0
        %2059 = vmatpush1.bf16.msra.mxu0 0
        %2060 = vmatprep.subr.bf16.mxu0 0
        %2061 = vmatpush1.bf16.msra.mxu0 0
        %2062 = vmatprep.subr.bf16.mxu0 0
        %2063 = vmatpush1.bf16.msra.mxu0 0
        %2064 = vmatprep.subr.bf16.mxu0 0
        %2065 = vmatpush1.bf16.msra.mxu0 0
        %2066 = vmatprep.subr.bf16.mxu0 0
        %2067 = vmatpush1.bf16.msra.mxu0 0
        %2068 = vmatprep.subr.bf16.mxu0 0
        %2069 = vmatpush1.bf16.msra.mxu0 0
        %2070 = vmatprep.subr.bf16.mxu0 0
        %2071 = vmatpush1.bf16.msra.mxu0 0
        %2072 = vmatprep.subr.bf16.mxu0 0
        %2073 = vmatpush1.bf16.msra.mxu0 0
        %2074 = vmatprep.subr.bf16.mxu0 0
        %2075 = vmatpush1.bf16.msra.mxu0 0
        %2076 = vmatprep.subr.bf16.mxu0 0
        %2077 = vmatpush1.bf16.msra.mxu0 0
        %2078 = vmatprep.subr.bf16.mxu0 0
        %2079 = vmatpush1.bf16.msra.mxu0 0
        %2080 = vmatprep.subr.bf16.mxu0 0
        %2081 = vmatpush1.bf16.msra.mxu0 0
        %2082 = vmatprep.mubr.bf16.mxu0 0
        %2083 = vmatmul.mubr.bf16.gmra.mrb[0].mxu0 %v2045
        %v2084 = vpop.f32.mrb[0].mxu0
        %v2085 = vadd.f32 0.0, %v2084
        %v2086 = vpop.f32.mrb[0].mxu0
        %v2087 = vpop.f32.mrb[0].mxu0
        %v2088 = vpop.f32.mrb[0].mxu0
        %2089 = vdwg.mxu0
        %2091 = vrot.lane.b32.xlu0 %v1924, 96
        %v2092 = vpop.permute.xlu0 %2091
        %v2094 = vsel %vm669, %v2040, 0
        %v2097 = vsel %vm794, %v2092, 0
        %2099 = vmatprep.subr.bf16.mxu0 0
        %2100 = vmatpush1.bf16.msra.mxu0 %v2097
        %2101 = vmatprep.subr.bf16.mxu0 0
        %2102 = vmatpush1.bf16.msra.mxu0 0
        %2103 = vmatprep.subr.bf16.mxu0 0
        %2104 = vmatpush1.bf16.msra.mxu0 0
        %2105 = vmatprep.subr.bf16.mxu0 0
        %2106 = vmatpush1.bf16.msra.mxu0 0
        %2107 = vmatprep.subr.bf16.mxu0 0
        %2108 = vmatpush1.bf16.msra.mxu0 0
        %2109 = vmatprep.subr.bf16.mxu0 0
        %2110 = vmatpush1.bf16.msra.mxu0 0
        %2111 = vmatprep.subr.bf16.mxu0 0
        %2112 = vmatpush1.bf16.msra.mxu0 0
        %2113 = vmatprep.subr.bf16.mxu0 0
        %2114 = vmatpush1.bf16.msra.mxu0 0
        %2115 = vmatprep.subr.bf16.mxu0 0
        %2116 = vmatpush1.bf16.msra.mxu0 0
        %2117 = vmatprep.subr.bf16.mxu0 0
        %2118 = vmatpush1.bf16.msra.mxu0 0
        %2119 = vmatprep.subr.bf16.mxu0 0
        %2120 = vmatpush1.bf16.msra.mxu0 0
        %2121 = vmatprep.subr.bf16.mxu0 0
        %2122 = vmatpush1.bf16.msra.mxu0 0
        %2123 = vmatprep.subr.bf16.mxu0 0
        %2124 = vmatpush1.bf16.msra.mxu0 0
        %2125 = vmatprep.subr.bf16.mxu0 0
        %2126 = vmatpush1.bf16.msra.mxu0 0
        %2127 = vmatprep.subr.bf16.mxu0 0
        %2128 = vmatpush1.bf16.msra.mxu0 0
        %2129 = vmatprep.subr.bf16.mxu0 0
        %2130 = vmatpush1.bf16.msra.mxu0 0
        %2131 = vmatprep.mubr.bf16.mxu0 0
        %2132 = vmatmul.mubr.bf16.gmra.mrb[0].mxu0 %v2094
        %v2133 = vpop.f32.mrb[0].mxu0
        %v2134 = vadd.f32 0.0, %v2133
        %v2135 = vpop.f32.mrb[0].mxu0
        %v2136 = vpop.f32.mrb[0].mxu0
        %v2137 = vpop.f32.mrb[0].mxu0
        %2138 = vdwg.mxu0
        %v2139 = vpack.c.bf16 %v2134, %v2085
        %2141 = vrot.lane.b32.xlu0 %v1921, 120
        %v2142 = vpop.permute.xlu0 %2141
        %2143 = vrot.lane.b32.xlu0 %v1923, 120
        %v2144 = vpop.permute.xlu0 %2143
        %v2146 = vsel %vm669, %v2142, 0
        %v2149 = vsel %vm669, %v2144, 0
        %2151 = vmatprep.subr.bf16.mxu0 0
        %2152 = vmatpush1.bf16.xpose.msra.mxu0 %v2149
        %2153 = vmatprep.subr.bf16.mxu0 0
        %2154 = vmatpush1.bf16.xpose.msra.mxu0 0
        %2155 = vmatprep.subr.bf16.mxu0 0
        %2156 = vmatpush1.bf16.xpose.msra.mxu0 0
        %2157 = vmatprep.subr.bf16.mxu0 0
        %2158 = vmatpush1.bf16.xpose.msra.mxu0 0
        %2159 = vmatprep.subr.bf16.mxu0 0
        %2160 = vmatpush1.bf16.xpose.msra.mxu0 0
        %2161 = vmatprep.subr.bf16.mxu0 0
        %2162 = vmatpush1.bf16.xpose.msra.mxu0 0
        %2163 = vmatprep.subr.bf16.mxu0 0
        %2164 = vmatpush1.bf16.xpose.msra.mxu0 0
        %2165 = vmatprep.subr.bf16.mxu0 0
        %2166 = vmatpush1.bf16.xpose.msra.mxu0 0
        %2167 = vmatprep.subr.bf16.mxu0 0
        %2168 = vmatpush1.bf16.xpose.msra.mxu0 0
        %2169 = vmatprep.subr.bf16.mxu0 0
        %2170 = vmatpush1.bf16.xpose.msra.mxu0 0
        %2171 = vmatprep.subr.bf16.mxu0 0
        %2172 = vmatpush1.bf16.xpose.msra.mxu0 0
        %2173 = vmatprep.subr.bf16.mxu0 0
        %2174 = vmatpush1.bf16.xpose.msra.mxu0 0
        %2175 = vmatprep.subr.bf16.mxu0 0
        %2176 = vmatpush1.bf16.xpose.msra.mxu0 0
        %2177 = vmatprep.subr.bf16.mxu0 0
        %2178 = vmatpush1.bf16.xpose.msra.mxu0 0
        %2179 = vmatprep.subr.bf16.mxu0 0
        %2180 = vmatpush1.bf16.xpose.msra.mxu0 0
        %2181 = vmatprep.subr.bf16.mxu0 0
        %2182 = vmatpush1.bf16.xpose.msra.mxu0 0
        %2183 = vmatprep.mubr.bf16.mxu0 0
        %2184 = vmatmul.mubr.bf16.gmra.mrb[0].mxu0 %v2146
        %v2185 = vpop.f32.mrb[0].mxu0
        %v2186 = vadd.f32 0.0, %v2185
        %v2187 = vpop.f32.mrb[0].mxu0
        %v2188 = vpop.f32.mrb[0].mxu0
        %v2189 = vpop.f32.mrb[0].mxu0
        %2190 = vdwg.mxu0
        %2192 = vrot.lane.b32.xlu0 %v1922, 120
        %v2193 = vpop.permute.xlu0 %2192
        %2194 = vrot.lane.b32.xlu0 %v1924, 120
        %v2195 = vpop.permute.xlu0 %2194
        %v2197 = vsel %vm669, %v2193, 0
        %v2200 = vsel %vm669, %v2195, 0
        %2202 = vmatprep.subr.bf16.mxu0 0
        %2203 = vmatpush1.bf16.xpose.msra.mxu0 %v2200
        %2204 = vmatprep.subr.bf16.mxu0 0
        %2205 = vmatpush1.bf16.xpose.msra.mxu0 0
        %2206 = vmatprep.subr.bf16.mxu0 0
        %2207 = vmatpush1.bf16.xpose.msra.mxu0 0
        %2208 = vmatprep.subr.bf16.mxu0 0
        %2209 = vmatpush1.bf16.xpose.msra.mxu0 0
        %2210 = vmatprep.subr.bf16.mxu0 0
        %2211 = vmatpush1.bf16.xpose.msra.mxu0 0
        %2212 = vmatprep.subr.bf16.mxu0 0
        %2213 = vmatpush1.bf16.xpose.msra.mxu0 0
        %2214 = vmatprep.subr.bf16.mxu0 0
        %2215 = vmatpush1.bf16.xpose.msra.mxu0 0
        %2216 = vmatprep.subr.bf16.mxu0 0
        %2217 = vmatpush1.bf16.xpose.msra.mxu0 0
        %2218 = vmatprep.subr.bf16.mxu0 0
        %2219 = vmatpush1.bf16.xpose.msra.mxu0 0
        %2220 = vmatprep.subr.bf16.mxu0 0
        %2221 = vmatpush1.bf16.xpose.msra.mxu0 0
        %2222 = vmatprep.subr.bf16.mxu0 0
        %2223 = vmatpush1.bf16.xpose.msra.mxu0 0
        %2224 = vmatprep.subr.bf16.mxu0 0
        %2225 = vmatpush1.bf16.xpose.msra.mxu0 0
        %2226 = vmatprep.subr.bf16.mxu0 0
        %2227 = vmatpush1.bf16.xpose.msra.mxu0 0
        %2228 = vmatprep.subr.bf16.mxu0 0
        %2229 = vmatpush1.bf16.xpose.msra.mxu0 0
        %2230 = vmatprep.subr.bf16.mxu0 0
        %2231 = vmatpush1.bf16.xpose.msra.mxu0 0
        %2232 = vmatprep.subr.bf16.mxu0 0
        %2233 = vmatpush1.bf16.xpose.msra.mxu0 0
        %2234 = vmatprep.mubr.bf16.mxu0 0
        %2235 = vmatmul.mubr.bf16.gmra.mrb[0].mxu0 %v2197
        %v2236 = vpop.f32.mrb[0].mxu0
        %v2237 = vadd.f32 0.0, %v2236
        %v2238 = vpop.f32.mrb[0].mxu0
        %v2239 = vpop.f32.mrb[0].mxu0
        %v2240 = vpop.f32.mrb[0].mxu0
        %2241 = vdwg.mxu0
        %v2242 = vsel %vm669, %v2186, -inf
        %2243 = vmax.xlane.f32.xlu0 %v2242
        %v2244 = vpop.xlane.xlu0 %2243
        %v2245 = vsel %vm669, %v2237, -inf
        %2246 = vmax.xlane.f32.xlu0 %v2245
        %v2247 = vpop.xlane.xlu0 %2246
        %v2248 = vsub.f32 %v2186, %v2244
        %v2249 = vsub.f32 %v2237, %v2247
        %v2250 = vmul.f32 %v2248, 1.442695
        %v2251 = vpow.pop %v2250
        %v2252 = vmul.f32 %v2249, 1.442695
        %v2253 = vpow.pop %v2252
        %v2254 = vsel %vm669, %v2251, 0.0
        %2255 = vadd.xlane.f32.xlu0 %v2254
        %v2256 = vpop.xlane.xlu0 %2255
        %v2257 = vsel %vm669, %v2253, 0.0
        %2258 = vadd.xlane.f32.xlu0 %v2257
        %v2259 = vpop.xlane.xlu0 %2258
        %v2260 = vrcp.pop %v2256
        %v2261 = vrcp.pop %v2259
        %v2262 = vmul.f32 %v2251, %v2260
        %v2263 = vmul.f32 %v2253, %v2261
        %v2264 = vpack.c.bf16 %v2262, %v2262
        %v2265 = vpack.c.bf16 %v2263, %v2263
        %2266 = vrot.lane.b32.xlu0 %v1923, 88
        %v2267 = vpop.permute.xlu0 %2266
        %v2269 = vsel %vm669, %v2264, 0
        %v2272 = vsel %vm794, %v2267, 0
        %2274 = vmatprep.subr.bf16.mxu0 0
        %2275 = vmatpush1.bf16.msra.mxu0 %v2272
        %2276 = vmatprep.subr.bf16.mxu0 0
        %2277 = vmatpush1.bf16.msra.mxu0 0
        %2278 = vmatprep.subr.bf16.mxu0 0
        %2279 = vmatpush1.bf16.msra.mxu0 0
        %2280 = vmatprep.subr.bf16.mxu0 0
        %2281 = vmatpush1.bf16.msra.mxu0 0
        %2282 = vmatprep.subr.bf16.mxu0 0
        %2283 = vmatpush1.bf16.msra.mxu0 0
        %2284 = vmatprep.subr.bf16.mxu0 0
        %2285 = vmatpush1.bf16.msra.mxu0 0
        %2286 = vmatprep.subr.bf16.mxu0 0
        %2287 = vmatpush1.bf16.msra.mxu0 0
        %2288 = vmatprep.subr.bf16.mxu0 0
        %2289 = vmatpush1.bf16.msra.mxu0 0
        %2290 = vmatprep.subr.bf16.mxu0 0
        %2291 = vmatpush1.bf16.msra.mxu0 0
        %2292 = vmatprep.subr.bf16.mxu0 0
        %2293 = vmatpush1.bf16.msra.mxu0 0
        %2294 = vmatprep.subr.bf16.mxu0 0
        %2295 = vmatpush1.bf16.msra.mxu0 0
        %2296 = vmatprep.subr.bf16.mxu0 0
        %2297 = vmatpush1.bf16.msra.mxu0 0
        %2298 = vmatprep.subr.bf16.mxu0 0
        %2299 = vmatpush1.bf16.msra.mxu0 0
        %2300 = vmatprep.subr.bf16.mxu0 0
        %2301 = vmatpush1.bf16.msra.mxu0 0
        %2302 = vmatprep.subr.bf16.mxu0 0
        %2303 = vmatpush1.bf16.msra.mxu0 0
        %2304 = vmatprep.subr.bf16.mxu0 0
        %2305 = vmatpush1.bf16.msra.mxu0 0
        %2306 = vmatprep.mubr.bf16.mxu0 0
        %2307 = vmatmul.mubr.bf16.gmra.mrb[0].mxu0 %v2269
        %v2308 = vpop.f32.mrb[0].mxu0
        %v2309 = vadd.f32 0.0, %v2308
        %v2310 = vpop.f32.mrb[0].mxu0
        %v2311 = vpop.f32.mrb[0].mxu0
        %v2312 = vpop.f32.mrb[0].mxu0
        %2313 = vdwg.mxu0
        %2314 = vrot.lane.b32.xlu0 %v1924, 88
        %v2315 = vpop.permute.xlu0 %2314
        %v2317 = vsel %vm669, %v2265, 0
        %v2320 = vsel %vm794, %v2315, 0
        %2322 = vmatprep.subr.bf16.mxu0 0
        %2323 = vmatpush1.bf16.msra.mxu0 %v2320
        %2324 = vmatprep.subr.bf16.mxu0 0
        %2325 = vmatpush1.bf16.msra.mxu0 0
        %2326 = vmatprep.subr.bf16.mxu0 0
        %2327 = vmatpush1.bf16.msra.mxu0 0
        %2328 = vmatprep.subr.bf16.mxu0 0
        %2329 = vmatpush1.bf16.msra.mxu0 0
        %2330 = vmatprep.subr.bf16.mxu0 0
        %2331 = vmatpush1.bf16.msra.mxu0 0
        %2332 = vmatprep.subr.bf16.mxu0 0
        %2333 = vmatpush1.bf16.msra.mxu0 0
        %2334 = vmatprep.subr.bf16.mxu0 0
        %2335 = vmatpush1.bf16.msra.mxu0 0
        %2336 = vmatprep.subr.bf16.mxu0 0
        %2337 = vmatpush1.bf16.msra.mxu0 0
        %2338 = vmatprep.subr.bf16.mxu0 0
        %2339 = vmatpush1.bf16.msra.mxu0 0
        %2340 = vmatprep.subr.bf16.mxu0 0
        %2341 = vmatpush1.bf16.msra.mxu0 0
        %2342 = vmatprep.subr.bf16.mxu0 0
        %2343 = vmatpush1.bf16.msra.mxu0 0
        %2344 = vmatprep.subr.bf16.mxu0 0
        %2345 = vmatpush1.bf16.msra.mxu0 0
        %2346 = vmatprep.subr.bf16.mxu0 0
        %2347 = vmatpush1.bf16.msra.mxu0 0
        %2348 = vmatprep.subr.bf16.mxu0 0
        %2349 = vmatpush1.bf16.msra.mxu0 0
        %2350 = vmatprep.subr.bf16.mxu0 0
        %2351 = vmatpush1.bf16.msra.mxu0 0
        %2352 = vmatprep.subr.bf16.mxu0 0
        %2353 = vmatpush1.bf16.msra.mxu0 0
        %2354 = vmatprep.mubr.bf16.mxu0 0
        %2355 = vmatmul.mubr.bf16.gmra.mrb[0].mxu0 %v2317
        %v2356 = vpop.f32.mrb[0].mxu0
        %v2357 = vadd.f32 0.0, %v2356
        %v2358 = vpop.f32.mrb[0].mxu0
        %v2359 = vpop.f32.mrb[0].mxu0
        %v2360 = vpop.f32.mrb[0].mxu0
        %2361 = vdwg.mxu0
        %v2362 = vpack.c.bf16 %v2357, %v2309
        %v2364 = vsel %vm669, %v2362, 0
        %v2367 = vsel %vm794, %v1796, 0
        %2369 = vmatprep.subr.bf16.mxu0 0
        %2370 = vmatpush1.bf16.msra.mxu0 %v2367
        %2371 = vmatprep.subr.bf16.mxu0 0
        %2372 = vmatpush1.bf16.msra.mxu0 0
        %2373 = vmatprep.subr.bf16.mxu0 0
        %2374 = vmatpush1.bf16.msra.mxu0 0
        %2375 = vmatprep.subr.bf16.mxu0 0
        %2376 = vmatpush1.bf16.msra.mxu0 0
        %2377 = vmatprep.subr.bf16.mxu0 0
        %2378 = vmatpush1.bf16.msra.mxu0 0
        %2379 = vmatprep.subr.bf16.mxu0 0
        %2380 = vmatpush1.bf16.msra.mxu0 0
        %2381 = vmatprep.subr.bf16.mxu0 0
        %2382 = vmatpush1.bf16.msra.mxu0 0
        %2383 = vmatprep.subr.bf16.mxu0 0
        %2384 = vmatpush1.bf16.msra.mxu0 0
        %2385 = vmatprep.subr.bf16.mxu0 0
        %2386 = vmatpush1.bf16.msra.mxu0 0
        %2387 = vmatprep.subr.bf16.mxu0 0
        %2388 = vmatpush1.bf16.msra.mxu0 0
        %2389 = vmatprep.subr.bf16.mxu0 0
        %2390 = vmatpush1.bf16.msra.mxu0 0
        %2391 = vmatprep.subr.bf16.mxu0 0
        %2392 = vmatpush1.bf16.msra.mxu0 0
        %2393 = vmatprep.subr.bf16.mxu0 0
        %2394 = vmatpush1.bf16.msra.mxu0 0
        %2395 = vmatprep.subr.bf16.mxu0 0
        %2396 = vmatpush1.bf16.msra.mxu0 0
        %2397 = vmatprep.subr.bf16.mxu0 0
        %2398 = vmatpush1.bf16.msra.mxu0 0
        %2399 = vmatprep.subr.bf16.mxu0 0
        %2400 = vmatpush1.bf16.msra.mxu0 0
        %2401 = vmatprep.mubr.bf16.mxu0 0
        %2402 = vmatmul.mubr.bf16.gmra.mrb[0].mxu0 %v2364
        %v2403 = vpop.f32.mrb[0].mxu0
        %v2404 = vadd.f32 0.0, %v2403
        %v2405 = vpop.f32.mrb[0].mxu0
        %v2406 = vpop.f32.mrb[0].mxu0
        %v2407 = vadd.f32 0.0, %v2406
        %v2408 = vpop.f32.mrb[0].mxu0
        %2409 = vdwg.mxu0
        %v2411 = vsel %vm669, %v2139, 0
        %v2414 = vsel %vm794, %v1795, 0
        %2416 = vmatprep.subr.bf16.mxu0 0
        %2417 = vmatpush1.bf16.msra.mxu0 %v2414
        %2418 = vmatprep.subr.bf16.mxu0 0
        %2419 = vmatpush1.bf16.msra.mxu0 0
        %2420 = vmatprep.subr.bf16.mxu0 0
        %2421 = vmatpush1.bf16.msra.mxu0 0
        %2422 = vmatprep.subr.bf16.mxu0 0
        %2423 = vmatpush1.bf16.msra.mxu0 0
        %2424 = vmatprep.subr.bf16.mxu0 0
        %2425 = vmatpush1.bf16.msra.mxu0 0
        %2426 = vmatprep.subr.bf16.mxu0 0
        %2427 = vmatpush1.bf16.msra.mxu0 0
        %2428 = vmatprep.subr.bf16.mxu0 0
        %2429 = vmatpush1.bf16.msra.mxu0 0
        %2430 = vmatprep.subr.bf16.mxu0 0
        %2431 = vmatpush1.bf16.msra.mxu0 0
        %2432 = vmatprep.subr.bf16.mxu0 0
        %2433 = vmatpush1.bf16.msra.mxu0 0
        %2434 = vmatprep.subr.bf16.mxu0 0
        %2435 = vmatpush1.bf16.msra.mxu0 0
        %2436 = vmatprep.subr.bf16.mxu0 0
        %2437 = vmatpush1.bf16.msra.mxu0 0
        %2438 = vmatprep.subr.bf16.mxu0 0
        %2439 = vmatpush1.bf16.msra.mxu0 0
        %2440 = vmatprep.subr.bf16.mxu0 0
        %2441 = vmatpush1.bf16.msra.mxu0 0
        %2442 = vmatprep.subr.bf16.mxu0 0
        %2443 = vmatpush1.bf16.msra.mxu0 0
        %2444 = vmatprep.subr.bf16.mxu0 0
        %2445 = vmatpush1.bf16.msra.mxu0 0
        %2446 = vmatprep.subr.bf16.mxu0 0
        %2447 = vmatpush1.bf16.msra.mxu0 0
        %2448 = vmatprep.mubr.bf16.mxu0 0
        %2449 = vmatmul.mubr.bf16.gmra.mrb[0].mxu0 %v2411
        %v2450 = vpop.f32.mrb[0].mxu0
        %v2451 = vadd.f32 %v2404, %v2450
        %v2452 = vpop.f32.mrb[0].mxu0
        %v2453 = vpop.f32.mrb[0].mxu0
        %v2454 = vadd.f32 %v2407, %v2453
        %v2455 = vpop.f32.mrb[0].mxu0
        %2456 = vdwg.mxu0
        %2457 = vrot.lane.b32.xlu0 %v1921, 112
        %v2458 = vpop.permute.xlu0 %2457
        %2459 = vrot.lane.b32.xlu0 %v1923, 112
        %v2460 = vpop.permute.xlu0 %2459
        %v2462 = vsel %vm669, %v2458, 0
        %v2465 = vsel %vm669, %v2460, 0
        %2467 = vmatprep.subr.bf16.mxu0 0
        %2468 = vmatpush1.bf16.xpose.msra.mxu0 %v2465
        %2469 = vmatprep.subr.bf16.mxu0 0
        %2470 = vmatpush1.bf16.xpose.msra.mxu0 0
        %2471 = vmatprep.subr.bf16.mxu0 0
        %2472 = vmatpush1.bf16.xpose.msra.mxu0 0
        %2473 = vmatprep.subr.bf16.mxu0 0
        %2474 = vmatpush1.bf16.xpose.msra.mxu0 0
        %2475 = vmatprep.subr.bf16.mxu0 0
        %2476 = vmatpush1.bf16.xpose.msra.mxu0 0
        %2477 = vmatprep.subr.bf16.mxu0 0
        %2478 = vmatpush1.bf16.xpose.msra.mxu0 0
        %2479 = vmatprep.subr.bf16.mxu0 0
        %2480 = vmatpush1.bf16.xpose.msra.mxu0 0
        %2481 = vmatprep.subr.bf16.mxu0 0
        %2482 = vmatpush1.bf16.xpose.msra.mxu0 0
        %2483 = vmatprep.subr.bf16.mxu0 0
        %2484 = vmatpush1.bf16.xpose.msra.mxu0 0
        %2485 = vmatprep.subr.bf16.mxu0 0
        %2486 = vmatpush1.bf16.xpose.msra.mxu0 0
        %2487 = vmatprep.subr.bf16.mxu0 0
        %2488 = vmatpush1.bf16.xpose.msra.mxu0 0
        %2489 = vmatprep.subr.bf16.mxu0 0
        %2490 = vmatpush1.bf16.xpose.msra.mxu0 0
        %2491 = vmatprep.subr.bf16.mxu0 0
        %2492 = vmatpush1.bf16.xpose.msra.mxu0 0
        %2493 = vmatprep.subr.bf16.mxu0 0
        %2494 = vmatpush1.bf16.xpose.msra.mxu0 0
        %2495 = vmatprep.subr.bf16.mxu0 0
        %2496 = vmatpush1.bf16.xpose.msra.mxu0 0
        %2497 = vmatprep.subr.bf16.mxu0 0
        %2498 = vmatpush1.bf16.xpose.msra.mxu0 0
        %2499 = vmatprep.mubr.bf16.mxu0 0
        %2500 = vmatmul.mubr.bf16.gmra.mrb[0].mxu0 %v2462
        %v2501 = vpop.f32.mrb[0].mxu0
        %v2502 = vadd.f32 0.0, %v2501
        %v2503 = vpop.f32.mrb[0].mxu0
        %v2504 = vpop.f32.mrb[0].mxu0
        %v2505 = vpop.f32.mrb[0].mxu0
        %2506 = vdwg.mxu0
        %2507 = vrot.lane.b32.xlu0 %v1922, 112
        %v2508 = vpop.permute.xlu0 %2507
        %2509 = vrot.lane.b32.xlu0 %v1924, 112
        %v2510 = vpop.permute.xlu0 %2509
        %v2512 = vsel %vm669, %v2508, 0
        %v2515 = vsel %vm669, %v2510, 0
        %2517 = vmatprep.subr.bf16.mxu0 0
        %2518 = vmatpush1.bf16.xpose.msra.mxu0 %v2515
        %2519 = vmatprep.subr.bf16.mxu0 0
        %2520 = vmatpush1.bf16.xpose.msra.mxu0 0
        %2521 = vmatprep.subr.bf16.mxu0 0
        %2522 = vmatpush1.bf16.xpose.msra.mxu0 0
        %2523 = vmatprep.subr.bf16.mxu0 0
        %2524 = vmatpush1.bf16.xpose.msra.mxu0 0
        %2525 = vmatprep.subr.bf16.mxu0 0
        %2526 = vmatpush1.bf16.xpose.msra.mxu0 0
        %2527 = vmatprep.subr.bf16.mxu0 0
        %2528 = vmatpush1.bf16.xpose.msra.mxu0 0
        %2529 = vmatprep.subr.bf16.mxu0 0
        %2530 = vmatpush1.bf16.xpose.msra.mxu0 0
        %2531 = vmatprep.subr.bf16.mxu0 0
        %2532 = vmatpush1.bf16.xpose.msra.mxu0 0
        %2533 = vmatprep.subr.bf16.mxu0 0
        %2534 = vmatpush1.bf16.xpose.msra.mxu0 0
        %2535 = vmatprep.subr.bf16.mxu0 0
        %2536 = vmatpush1.bf16.xpose.msra.mxu0 0
        %2537 = vmatprep.subr.bf16.mxu0 0
        %2538 = vmatpush1.bf16.xpose.msra.mxu0 0
        %2539 = vmatprep.subr.bf16.mxu0 0
        %2540 = vmatpush1.bf16.xpose.msra.mxu0 0
        %2541 = vmatprep.subr.bf16.mxu0 0
        %2542 = vmatpush1.bf16.xpose.msra.mxu0 0
        %2543 = vmatprep.subr.bf16.mxu0 0
        %2544 = vmatpush1.bf16.xpose.msra.mxu0 0
        %2545 = vmatprep.subr.bf16.mxu0 0
        %2546 = vmatpush1.bf16.xpose.msra.mxu0 0
        %2547 = vmatprep.subr.bf16.mxu0 0
        %2548 = vmatpush1.bf16.xpose.msra.mxu0 0
        %2549 = vmatprep.mubr.bf16.mxu0 0
        %2550 = vmatmul.mubr.bf16.gmra.mrb[0].mxu0 %v2512
        %v2551 = vpop.f32.mrb[0].mxu0
        %v2552 = vadd.f32 0.0, %v2551
        %v2553 = vpop.f32.mrb[0].mxu0
        %v2554 = vpop.f32.mrb[0].mxu0
        %v2555 = vpop.f32.mrb[0].mxu0
        %2556 = vdwg.mxu0
        %v2557 = vsel %vm669, %v2502, -inf
        %2558 = vmax.xlane.f32.xlu0 %v2557
        %v2559 = vpop.xlane.xlu0 %2558
        %v2560 = vsel %vm669, %v2552, -inf
        %2561 = vmax.xlane.f32.xlu0 %v2560
        %v2562 = vpop.xlane.xlu0 %2561
        %v2563 = vsub.f32 %v2502, %v2559
        %v2564 = vsub.f32 %v2552, %v2562
        %v2565 = vmul.f32 %v2563, 1.442695
        %v2566 = vpow.pop %v2565
        %v2567 = vmul.f32 %v2564, 1.442695
        %v2568 = vpow.pop %v2567
        %v2569 = vsel %vm669, %v2566, 0.0
        %2570 = vadd.xlane.f32.xlu0 %v2569
        %v2571 = vpop.xlane.xlu0 %2570
        %v2572 = vsel %vm669, %v2568, 0.0
        %2573 = vadd.xlane.f32.xlu0 %v2572
        %v2574 = vpop.xlane.xlu0 %2573
        %v2575 = vrcp.pop %v2571
        %v2576 = vrcp.pop %v2574
        %v2577 = vmul.f32 %v2566, %v2575
        %v2578 = vmul.f32 %v2568, %v2576
        %v2579 = vpack.c.bf16 %v2577, %v2577
        %v2580 = vpack.c.bf16 %v2578, %v2578
        %2581 = vrot.lane.b32.xlu0 %v1923, 80
        %v2582 = vpop.permute.xlu0 %2581
        %v2584 = vsel %vm669, %v2579, 0
        %v2587 = vsel %vm794, %v2582, 0
        %2589 = vmatprep.subr.bf16.mxu0 0
        %2590 = vmatpush1.bf16.msra.mxu0 %v2587
        %2591 = vmatprep.subr.bf16.mxu0 0
        %2592 = vmatpush1.bf16.msra.mxu0 0
        %2593 = vmatprep.subr.bf16.mxu0 0
        %2594 = vmatpush1.bf16.msra.mxu0 0
        %2595 = vmatprep.subr.bf16.mxu0 0
        %2596 = vmatpush1.bf16.msra.mxu0 0
        %2597 = vmatprep.subr.bf16.mxu0 0
        %2598 = vmatpush1.bf16.msra.mxu0 0
        %2599 = vmatprep.subr.bf16.mxu0 0
        %2600 = vmatpush1.bf16.msra.mxu0 0
        %2601 = vmatprep.subr.bf16.mxu0 0
        %2602 = vmatpush1.bf16.msra.mxu0 0
        %2603 = vmatprep.subr.bf16.mxu0 0
        %2604 = vmatpush1.bf16.msra.mxu0 0
        %2605 = vmatprep.subr.bf16.mxu0 0
        %2606 = vmatpush1.bf16.msra.mxu0 0
        %2607 = vmatprep.subr.bf16.mxu0 0
        %2608 = vmatpush1.bf16.msra.mxu0 0
        %2609 = vmatprep.subr.bf16.mxu0 0
        %2610 = vmatpush1.bf16.msra.mxu0 0
        %2611 = vmatprep.subr.bf16.mxu0 0
        %2612 = vmatpush1.bf16.msra.mxu0 0
        %2613 = vmatprep.subr.bf16.mxu0 0
        %2614 = vmatpush1.bf16.msra.mxu0 0
        %2615 = vmatprep.subr.bf16.mxu0 0
        %2616 = vmatpush1.bf16.msra.mxu0 0
        %2617 = vmatprep.subr.bf16.mxu0 0
        %2618 = vmatpush1.bf16.msra.mxu0 0
        %2619 = vmatprep.subr.bf16.mxu0 0
        %2620 = vmatpush1.bf16.msra.mxu0 0
        %2621 = vmatprep.mubr.bf16.mxu0 0
        %2622 = vmatmul.mubr.bf16.gmra.mrb[0].mxu0 %v2584
        %v2623 = vpop.f32.mrb[0].mxu0
        %v2624 = vadd.f32 0.0, %v2623
        %v2625 = vpop.f32.mrb[0].mxu0
        %v2626 = vpop.f32.mrb[0].mxu0
        %v2627 = vpop.f32.mrb[0].mxu0
        %2628 = vdwg.mxu0
        %2629 = vrot.lane.b32.xlu0 %v1924, 80
        %v2630 = vpop.permute.xlu0 %2629
        %v2632 = vsel %vm669, %v2580, 0
        %v2635 = vsel %vm794, %v2630, 0
        %2637 = vmatprep.subr.bf16.mxu0 0
        %2638 = vmatpush1.bf16.msra.mxu0 %v2635
        %2639 = vmatprep.subr.bf16.mxu0 0
        %2640 = vmatpush1.bf16.msra.mxu0 0
        %2641 = vmatprep.subr.bf16.mxu0 0
        %2642 = vmatpush1.bf16.msra.mxu0 0
        %2643 = vmatprep.subr.bf16.mxu0 0
        %2644 = vmatpush1.bf16.msra.mxu0 0
        %2645 = vmatprep.subr.bf16.mxu0 0
        %2646 = vmatpush1.bf16.msra.mxu0 0
        %2647 = vmatprep.subr.bf16.mxu0 0
        %2648 = vmatpush1.bf16.msra.mxu0 0
        %2649 = vmatprep.subr.bf16.mxu0 0
        %2650 = vmatpush1.bf16.msra.mxu0 0
        %2651 = vmatprep.subr.bf16.mxu0 0
        %2652 = vmatpush1.bf16.msra.mxu0 0
        %2653 = vmatprep.subr.bf16.mxu0 0
        %2654 = vmatpush1.bf16.msra.mxu0 0
        %2655 = vmatprep.subr.bf16.mxu0 0
        %2656 = vmatpush1.bf16.msra.mxu0 0
        %2657 = vmatprep.subr.bf16.mxu0 0
        %2658 = vmatpush1.bf16.msra.mxu0 0
        %2659 = vmatprep.subr.bf16.mxu0 0
        %2660 = vmatpush1.bf16.msra.mxu0 0
        %2661 = vmatprep.subr.bf16.mxu0 0
        %2662 = vmatpush1.bf16.msra.mxu0 0
        %2663 = vmatprep.subr.bf16.mxu0 0
        %2664 = vmatpush1.bf16.msra.mxu0 0
        %2665 = vmatprep.subr.bf16.mxu0 0
        %2666 = vmatpush1.bf16.msra.mxu0 0
        %2667 = vmatprep.subr.bf16.mxu0 0
        %2668 = vmatpush1.bf16.msra.mxu0 0
        %2669 = vmatprep.mubr.bf16.mxu0 0
        %2670 = vmatmul.mubr.bf16.gmra.mrb[0].mxu0 %v2632
        %v2671 = vpop.f32.mrb[0].mxu0
        %v2672 = vadd.f32 0.0, %v2671
        %v2673 = vpop.f32.mrb[0].mxu0
        %v2674 = vpop.f32.mrb[0].mxu0
        %v2675 = vpop.f32.mrb[0].mxu0
        %2676 = vdwg.mxu0
        %v2677 = vpack.c.bf16 %v2672, %v2624
        %v2679 = vsel %vm669, %v2677, 0
        %v2682 = vsel %vm794, %v1797, 0
        %2684 = vmatprep.subr.bf16.mxu0 0
        %2685 = vmatpush1.bf16.msra.mxu0 %v2682
        %2686 = vmatprep.subr.bf16.mxu0 0
        %2687 = vmatpush1.bf16.msra.mxu0 0
        %2688 = vmatprep.subr.bf16.mxu0 0
        %2689 = vmatpush1.bf16.msra.mxu0 0
        %2690 = vmatprep.subr.bf16.mxu0 0
        %2691 = vmatpush1.bf16.msra.mxu0 0
        %2692 = vmatprep.subr.bf16.mxu0 0
        %2693 = vmatpush1.bf16.msra.mxu0 0
        %2694 = vmatprep.subr.bf16.mxu0 0
        %2695 = vmatpush1.bf16.msra.mxu0 0
        %2696 = vmatprep.subr.bf16.mxu0 0
        %2697 = vmatpush1.bf16.msra.mxu0 0
        %2698 = vmatprep.subr.bf16.mxu0 0
        %2699 = vmatpush1.bf16.msra.mxu0 0
        %2700 = vmatprep.subr.bf16.mxu0 0
        %2701 = vmatpush1.bf16.msra.mxu0 0
        %2702 = vmatprep.subr.bf16.mxu0 0
        %2703 = vmatpush1.bf16.msra.mxu0 0
        %2704 = vmatprep.subr.bf16.mxu0 0
        %2705 = vmatpush1.bf16.msra.mxu0 0
        %2706 = vmatprep.subr.bf16.mxu0 0
        %2707 = vmatpush1.bf16.msra.mxu0 0
        %2708 = vmatprep.subr.bf16.mxu0 0
        %2709 = vmatpush1.bf16.msra.mxu0 0
        %2710 = vmatprep.subr.bf16.mxu0 0
        %2711 = vmatpush1.bf16.msra.mxu0 0
        %2712 = vmatprep.subr.bf16.mxu0 0
        %2713 = vmatpush1.bf16.msra.mxu0 0
        %2714 = vmatprep.subr.bf16.mxu0 0
        %2715 = vmatpush1.bf16.msra.mxu0 0
        %2716 = vmatprep.mubr.bf16.mxu0 0
        %2717 = vmatmul.mubr.bf16.gmra.mrb[0].mxu0 %v2679
        %v2718 = vpop.f32.mrb[0].mxu0
        %v2719 = vadd.f32 0.0, %v2718
        %v2720 = vpop.f32.mrb[0].mxu0
        %v2721 = vpop.f32.mrb[0].mxu0
        %v2722 = vadd.f32 0.0, %v2721
        %v2723 = vpop.f32.mrb[0].mxu0
        %2724 = vdwg.mxu0
        %v2725 = vadd.f32 %v2451, %v2719
        %v2726 = vadd.f32 %v2454, %v2722
        %2727 = vrot.lane.b32.xlu0 %v1921, 104
        %v2728 = vpop.permute.xlu0 %2727
        %2729 = vrot.lane.b32.xlu0 %v1923, 104
        %v2730 = vpop.permute.xlu0 %2729
        %v2732 = vsel %vm669, %v2728, 0
        %v2735 = vsel %vm669, %v2730, 0
        %2737 = vmatprep.subr.bf16.mxu0 0
        %2738 = vmatpush1.bf16.xpose.msra.mxu0 %v2735
        %2739 = vmatprep.subr.bf16.mxu0 0
        %2740 = vmatpush1.bf16.xpose.msra.mxu0 0
        %2741 = vmatprep.subr.bf16.mxu0 0
        %2742 = vmatpush1.bf16.xpose.msra.mxu0 0
        %2743 = vmatprep.subr.bf16.mxu0 0
        %2744 = vmatpush1.bf16.xpose.msra.mxu0 0
        %2745 = vmatprep.subr.bf16.mxu0 0
        %2746 = vmatpush1.bf16.xpose.msra.mxu0 0
        %2747 = vmatprep.subr.bf16.mxu0 0
        %2748 = vmatpush1.bf16.xpose.msra.mxu0 0
        %2749 = vmatprep.subr.bf16.mxu0 0
        %2750 = vmatpush1.bf16.xpose.msra.mxu0 0
        %2751 = vmatprep.subr.bf16.mxu0 0
        %2752 = vmatpush1.bf16.xpose.msra.mxu0 0
        %2753 = vmatprep.subr.bf16.mxu0 0
        %2754 = vmatpush1.bf16.xpose.msra.mxu0 0
        %2755 = vmatprep.subr.bf16.mxu0 0
        %2756 = vmatpush1.bf16.xpose.msra.mxu0 0
        %2757 = vmatprep.subr.bf16.mxu0 0
        %2758 = vmatpush1.bf16.xpose.msra.mxu0 0
        %2759 = vmatprep.subr.bf16.mxu0 0
        %2760 = vmatpush1.bf16.xpose.msra.mxu0 0
        %2761 = vmatprep.subr.bf16.mxu0 0
        %2762 = vmatpush1.bf16.xpose.msra.mxu0 0
        %2763 = vmatprep.subr.bf16.mxu0 0
        %2764 = vmatpush1.bf16.xpose.msra.mxu0 0
        %2765 = vmatprep.subr.bf16.mxu0 0
        %2766 = vmatpush1.bf16.xpose.msra.mxu0 0
        %2767 = vmatprep.subr.bf16.mxu0 0
        %2768 = vmatpush1.bf16.xpose.msra.mxu0 0
        %2769 = vmatprep.mubr.bf16.mxu0 0
        %2770 = vmatmul.mubr.bf16.gmra.mrb[0].mxu0 %v2732
        %v2771 = vpop.f32.mrb[0].mxu0
        %v2772 = vadd.f32 0.0, %v2771
        %v2773 = vpop.f32.mrb[0].mxu0
        %v2774 = vpop.f32.mrb[0].mxu0
        %v2775 = vpop.f32.mrb[0].mxu0
        %2776 = vdwg.mxu0
        %2777 = vrot.lane.b32.xlu0 %v1922, 104
        %v2778 = vpop.permute.xlu0 %2777
        %2779 = vrot.lane.b32.xlu0 %v1924, 104
        %v2780 = vpop.permute.xlu0 %2779
        %v2782 = vsel %vm669, %v2778, 0
        %v2785 = vsel %vm669, %v2780, 0
        %2787 = vmatprep.subr.bf16.mxu0 0
        %2788 = vmatpush1.bf16.xpose.msra.mxu0 %v2785
        %2789 = vmatprep.subr.bf16.mxu0 0
        %2790 = vmatpush1.bf16.xpose.msra.mxu0 0
        %2791 = vmatprep.subr.bf16.mxu0 0
        %2792 = vmatpush1.bf16.xpose.msra.mxu0 0
        %2793 = vmatprep.subr.bf16.mxu0 0
        %2794 = vmatpush1.bf16.xpose.msra.mxu0 0
        %2795 = vmatprep.subr.bf16.mxu0 0
        %2796 = vmatpush1.bf16.xpose.msra.mxu0 0
        %2797 = vmatprep.subr.bf16.mxu0 0
        %2798 = vmatpush1.bf16.xpose.msra.mxu0 0
        %2799 = vmatprep.subr.bf16.mxu0 0
        %2800 = vmatpush1.bf16.xpose.msra.mxu0 0
        %2801 = vmatprep.subr.bf16.mxu0 0
        %2802 = vmatpush1.bf16.xpose.msra.mxu0 0
        %2803 = vmatprep.subr.bf16.mxu0 0
        %2804 = vmatpush1.bf16.xpose.msra.mxu0 0
        %2805 = vmatprep.subr.bf16.mxu0 0
        %2806 = vmatpush1.bf16.xpose.msra.mxu0 0
        %2807 = vmatprep.subr.bf16.mxu0 0
        %2808 = vmatpush1.bf16.xpose.msra.mxu0 0
        %2809 = vmatprep.subr.bf16.mxu0 0
        %2810 = vmatpush1.bf16.xpose.msra.mxu0 0
        %2811 = vmatprep.subr.bf16.mxu0 0
        %2812 = vmatpush1.bf16.xpose.msra.mxu0 0
        %2813 = vmatprep.subr.bf16.mxu0 0
        %2814 = vmatpush1.bf16.xpose.msra.mxu0 0
        %2815 = vmatprep.subr.bf16.mxu0 0
        %2816 = vmatpush1.bf16.xpose.msra.mxu0 0
        %2817 = vmatprep.subr.bf16.mxu0 0
        %2818 = vmatpush1.bf16.xpose.msra.mxu0 0
        %2819 = vmatprep.mubr.bf16.mxu0 0
        %2820 = vmatmul.mubr.bf16.gmra.mrb[0].mxu0 %v2782
        %v2821 = vpop.f32.mrb[0].mxu0
        %v2822 = vadd.f32 0.0, %v2821
        %v2823 = vpop.f32.mrb[0].mxu0
        %v2824 = vpop.f32.mrb[0].mxu0
        %v2825 = vpop.f32.mrb[0].mxu0
        %2826 = vdwg.mxu0
        %v2827 = vsel %vm669, %v2772, -inf
        %2828 = vmax.xlane.f32.xlu0 %v2827
        %v2829 = vpop.xlane.xlu0 %2828
        %v2830 = vsel %vm669, %v2822, -inf
        %2831 = vmax.xlane.f32.xlu0 %v2830
        %v2832 = vpop.xlane.xlu0 %2831
        %v2833 = vsub.f32 %v2772, %v2829
        %v2834 = vsub.f32 %v2822, %v2832
        %v2835 = vmul.f32 %v2833, 1.442695
        %v2836 = vpow.pop %v2835
        %v2837 = vmul.f32 %v2834, 1.442695
        %v2838 = vpow.pop %v2837
        %v2839 = vsel %vm669, %v2836, 0.0
        %2840 = vadd.xlane.f32.xlu0 %v2839
        %v2841 = vpop.xlane.xlu0 %2840
        %v2842 = vsel %vm669, %v2838, 0.0
        %2843 = vadd.xlane.f32.xlu0 %v2842
        %v2844 = vpop.xlane.xlu0 %2843
        %v2845 = vrcp.pop %v2841
        %v2846 = vrcp.pop %v2844
        %v2847 = vmul.f32 %v2836, %v2845
        %v2848 = vmul.f32 %v2838, %v2846
        %v2849 = vpack.c.bf16 %v2847, %v2847
        %v2850 = vpack.c.bf16 %v2848, %v2848
        %2851 = vrot.lane.b32.xlu0 %v1923, 72
        %v2852 = vpop.permute.xlu0 %2851
        %v2854 = vsel %vm669, %v2849, 0
        %v2857 = vsel %vm794, %v2852, 0
        %2859 = vmatprep.subr.bf16.mxu0 0
        %2860 = vmatpush1.bf16.msra.mxu0 %v2857
        %2861 = vmatprep.subr.bf16.mxu0 0
        %2862 = vmatpush1.bf16.msra.mxu0 0
        %2863 = vmatprep.subr.bf16.mxu0 0
        %2864 = vmatpush1.bf16.msra.mxu0 0
        %2865 = vmatprep.subr.bf16.mxu0 0
        %2866 = vmatpush1.bf16.msra.mxu0 0
        %2867 = vmatprep.subr.bf16.mxu0 0
        %2868 = vmatpush1.bf16.msra.mxu0 0
        %2869 = vmatprep.subr.bf16.mxu0 0
        %2870 = vmatpush1.bf16.msra.mxu0 0
        %2871 = vmatprep.subr.bf16.mxu0 0
        %2872 = vmatpush1.bf16.msra.mxu0 0
        %2873 = vmatprep.subr.bf16.mxu0 0
        %2874 = vmatpush1.bf16.msra.mxu0 0
        %2875 = vmatprep.subr.bf16.mxu0 0
        %2876 = vmatpush1.bf16.msra.mxu0 0
        %2877 = vmatprep.subr.bf16.mxu0 0
        %2878 = vmatpush1.bf16.msra.mxu0 0
        %2879 = vmatprep.subr.bf16.mxu0 0
        %2880 = vmatpush1.bf16.msra.mxu0 0
        %2881 = vmatprep.subr.bf16.mxu0 0
        %2882 = vmatpush1.bf16.msra.mxu0 0
        %2883 = vmatprep.subr.bf16.mxu0 0
        %2884 = vmatpush1.bf16.msra.mxu0 0
        %2885 = vmatprep.subr.bf16.mxu0 0
        %2886 = vmatpush1.bf16.msra.mxu0 0
        %2887 = vmatprep.subr.bf16.mxu0 0
        %2888 = vmatpush1.bf16.msra.mxu0 0
        %2889 = vmatprep.subr.bf16.mxu0 0
        %2890 = vmatpush1.bf16.msra.mxu0 0
        %2891 = vmatprep.mubr.bf16.mxu0 0
        %2892 = vmatmul.mubr.bf16.gmra.mrb[0].mxu0 %v2854
        %v2893 = vpop.f32.mrb[0].mxu0
        %v2894 = vadd.f32 0.0, %v2893
        %v2895 = vpop.f32.mrb[0].mxu0
        %v2896 = vpop.f32.mrb[0].mxu0
        %v2897 = vpop.f32.mrb[0].mxu0
        %2898 = vdwg.mxu0
        %2899 = vrot.lane.b32.xlu0 %v1924, 72
        %v2900 = vpop.permute.xlu0 %2899
        %v2902 = vsel %vm669, %v2850, 0
        %v2905 = vsel %vm794, %v2900, 0
        %2907 = vmatprep.subr.bf16.mxu0 0
        %2908 = vmatpush1.bf16.msra.mxu0 %v2905
        %2909 = vmatprep.subr.bf16.mxu0 0
        %2910 = vmatpush1.bf16.msra.mxu0 0
        %2911 = vmatprep.subr.bf16.mxu0 0
        %2912 = vmatpush1.bf16.msra.mxu0 0
        %2913 = vmatprep.subr.bf16.mxu0 0
        %2914 = vmatpush1.bf16.msra.mxu0 0
        %2915 = vmatprep.subr.bf16.mxu0 0
        %2916 = vmatpush1.bf16.msra.mxu0 0
        %2917 = vmatprep.subr.bf16.mxu0 0
        %2918 = vmatpush1.bf16.msra.mxu0 0
        %2919 = vmatprep.subr.bf16.mxu0 0
        %2920 = vmatpush1.bf16.msra.mxu0 0
        %2921 = vmatprep.subr.bf16.mxu0 0
        %2922 = vmatpush1.bf16.msra.mxu0 0
        %2923 = vmatprep.subr.bf16.mxu0 0
        %2924 = vmatpush1.bf16.msra.mxu0 0
        %2925 = vmatprep.subr.bf16.mxu0 0
        %2926 = vmatpush1.bf16.msra.mxu0 0
        %2927 = vmatprep.subr.bf16.mxu0 0
        %2928 = vmatpush1.bf16.msra.mxu0 0
        %2929 = vmatprep.subr.bf16.mxu0 0
        %2930 = vmatpush1.bf16.msra.mxu0 0
        %2931 = vmatprep.subr.bf16.mxu0 0
        %2932 = vmatpush1.bf16.msra.mxu0 0
        %2933 = vmatprep.subr.bf16.mxu0 0
        %2934 = vmatpush1.bf16.msra.mxu0 0
        %2935 = vmatprep.subr.bf16.mxu0 0
        %2936 = vmatpush1.bf16.msra.mxu0 0
        %2937 = vmatprep.subr.bf16.mxu0 0
        %2938 = vmatpush1.bf16.msra.mxu0 0
        %2939 = vmatprep.mubr.bf16.mxu0 0
        %2940 = vmatmul.mubr.bf16.gmra.mrb[0].mxu0 %v2902
        %v2941 = vpop.f32.mrb[0].mxu0
        %v2942 = vadd.f32 0.0, %v2941
        %v2943 = vpop.f32.mrb[0].mxu0
        %v2944 = vpop.f32.mrb[0].mxu0
        %v2945 = vpop.f32.mrb[0].mxu0
        %2946 = vdwg.mxu0
        %v2947 = vpack.c.bf16 %v2942, %v2894
        %v2949 = vsel %vm669, %v2947, 0
        %v2952 = vsel %vm794, %v1798, 0
        %2954 = vmatprep.subr.bf16.mxu0 0
        %2955 = vmatpush1.bf16.msra.mxu0 %v2952
        %2956 = vmatprep.subr.bf16.mxu0 0
        %2957 = vmatpush1.bf16.msra.mxu0 0
        %2958 = vmatprep.subr.bf16.mxu0 0
        %2959 = vmatpush1.bf16.msra.mxu0 0
        %2960 = vmatprep.subr.bf16.mxu0 0
        %2961 = vmatpush1.bf16.msra.mxu0 0
        %2962 = vmatprep.subr.bf16.mxu0 0
        %2963 = vmatpush1.bf16.msra.mxu0 0
        %2964 = vmatprep.subr.bf16.mxu0 0
        %2965 = vmatpush1.bf16.msra.mxu0 0
        %2966 = vmatprep.subr.bf16.mxu0 0
        %2967 = vmatpush1.bf16.msra.mxu0 0
        %2968 = vmatprep.subr.bf16.mxu0 0
        %2969 = vmatpush1.bf16.msra.mxu0 0
        %2970 = vmatprep.subr.bf16.mxu0 0
        %2971 = vmatpush1.bf16.msra.mxu0 0
        %2972 = vmatprep.subr.bf16.mxu0 0
        %2973 = vmatpush1.bf16.msra.mxu0 0
        %2974 = vmatprep.subr.bf16.mxu0 0
        %2975 = vmatpush1.bf16.msra.mxu0 0
        %2976 = vmatprep.subr.bf16.mxu0 0
        %2977 = vmatpush1.bf16.msra.mxu0 0
        %2978 = vmatprep.subr.bf16.mxu0 0
        %2979 = vmatpush1.bf16.msra.mxu0 0
        %2980 = vmatprep.subr.bf16.mxu0 0
        %2981 = vmatpush1.bf16.msra.mxu0 0
        %2982 = vmatprep.subr.bf16.mxu0 0
        %2983 = vmatpush1.bf16.msra.mxu0 0
        %2984 = vmatprep.subr.bf16.mxu0 0
        %2985 = vmatpush1.bf16.msra.mxu0 0
        %2986 = vmatprep.mubr.bf16.mxu0 0
        %2987 = vmatmul.mubr.bf16.gmra.mrb[0].mxu0 %v2949
        %v2988 = vpop.f32.mrb[0].mxu0
        %v2989 = vadd.f32 0.0, %v2988
        %v2990 = vpop.f32.mrb[0].mxu0
        %v2991 = vpop.f32.mrb[0].mxu0
        %v2992 = vadd.f32 0.0, %v2991
        %v2993 = vpop.f32.mrb[0].mxu0
        %2994 = vdwg.mxu0
        %v2995 = vadd.f32 %v2725, %v2989
        %v2996 = vadd.f32 %v2726, %v2992
        %v2997 = vlaneseq
        %v2998 = vshrl.u32 %v2997, 7
        %v2999 = vsub.s32 3, %v2998
        %v3000 = vrot.slane %v571, %v2999
        %v3001 = vadd.f32 %v2995, %v3000
        %v3002 = vadd.f32 %v2996, %v3000
        %v3003 = vadd.f32 %v1789, %v3001
        %v3004 = vadd.f32 %v1790, %v3002
        %v3005 = vsel %vm615, %v3003, 0.0
        %3006 = vadd.xlane.f32.xlu0 %v3005
        %v3007 = vpop.xlane.xlu0 %3006
        %v3008 = vsel %vm615, %v3004, 0.0
        %3009 = vadd.xlane.f32.xlu0 %v3008
        %v3010 = vpop.xlane.xlu0 %3009
        %v3011 = vmul.f32 %v3007, %v1758
        %v3012 = vmul.f32 %v3010, %v1758
        %v3013 = vsub.f32 %v3003, %v3011
        %v3014 = vsub.f32 %v3004, %v3012
        %v3015 = vmul.f32 %v3013, %v3013
        %v3016 = vmul.f32 %v3014, %v3014
        %v3017 = vsel %vm615, %v3015, 0.0
        %3018 = vadd.xlane.f32.xlu0 %v3017
        %v3019 = vpop.xlane.xlu0 %3018
        %v3020 = vsel %vm615, %v3016, 0.0
        %3021 = vadd.xlane.f32.xlu0 %v3020
        %v3022 = vpop.xlane.xlu0 %3021
        %v3023 = vmul.f32 %v3019, %v1758
        %v3024 = vmul.f32 %v3022, %v1758
        %v3025 = vadd.f32 %v3023, 1e-05
        %v3026 = vadd.f32 %v3024, 1e-05
        %v3027 = vrsqrt.pop %v3025
        %v3028 = vrsqrt.pop %v3026
        %v3029 = vmul.f32 %v3013, %v3027
        %v3030 = vmul.f32 %v3014, %v3028
        %v3031 = vlaneseq
        %v3032 = vshrl.u32 %v3031, 7
        %v3033 = vsub.s32 0, %v3032
        %v3034 = vrot.slane %v572, %v3033
        %v3035 = vmul.f32 %v3029, %v3034
        %v3036 = vmul.f32 %v3030, %v3034
        %v3037 = vlaneseq
        %v3038 = vshrl.u32 %v3037, 7
        %v3039 = vsub.s32 1, %v3038
        %v3040 = vrot.slane %v572, %v3039
        %v3041 = vadd.f32 %v3035, %v3040
        %v3042 = vadd.f32 %v3036, %v3040
        %v3043 = vpack.c.bf16 %v3042, %v3041
        %v3044 = vld [vmem:[%s454] sm:$0xf]
        %v3045 = vld [vmem:[%s454 + $0x4] sm:$0xf]
        %v3046 = vld [vmem:[%s454 + $0x8] sm:$0xf]
        %v3047 = vld [vmem:[%s454 + $0xc] sm:$0xf]
        %v3048 = vlaneseq
        %v3049 = vshrl.u32 %v3048, 7
        %v3050 = vsub.s32 4, %v3049
        %v3051 = vrot.slane %v571, %v3050
        %v3056 = vunpack.c.l.b16 %v3044
        %v3057 = vunpack.c.l.b16 %v3045
        %v3058 = vunpack.c.l.b16 %v3046
        %v3059 = vunpack.c.l.b16 %v3047
        %v3060 = vpack.c.b16 %v3057, %v3056
        %v3061 = vpack.c.b16 %v3059, %v3058
        %v3065 = vsel %vm615, %v3043, 0
        %3067 = vmatprep.subr.bf16.mxu0 0
        %3068 = vmatpush1.bf16.msra.mxu0 %v3060
        %3069 = vmatprep.subr.bf16.mxu0 0
        %3070 = vmatpush1.bf16.msra.mxu0 %v3061
        %3071 = vmatprep.subr.bf16.mxu0 0
        %3072 = vmatpush1.bf16.msra.mxu0 0
        %3073 = vmatprep.subr.bf16.mxu0 0
        %3074 = vmatpush1.bf16.msra.mxu0 0
        %3075 = vmatprep.subr.bf16.mxu0 0
        %3076 = vmatpush1.bf16.msra.mxu0 0
        %3077 = vmatprep.subr.bf16.mxu0 0
        %3078 = vmatpush1.bf16.msra.mxu0 0
        %3079 = vmatprep.subr.bf16.mxu0 0
        %3080 = vmatpush1.bf16.msra.mxu0 0
        %3081 = vmatprep.subr.bf16.mxu0 0
        %3082 = vmatpush1.bf16.msra.mxu0 0
        %3083 = vmatprep.subr.bf16.mxu0 0
        %3084 = vmatpush1.bf16.msra.mxu0 0
        %3085 = vmatprep.subr.bf16.mxu0 0
        %3086 = vmatpush1.bf16.msra.mxu0 0
        %3087 = vmatprep.subr.bf16.mxu0 0
        %3088 = vmatpush1.bf16.msra.mxu0 0
        %3089 = vmatprep.subr.bf16.mxu0 0
        %3090 = vmatpush1.bf16.msra.mxu0 0
        %3091 = vmatprep.subr.bf16.mxu0 0
        %3092 = vmatpush1.bf16.msra.mxu0 0
        %3093 = vmatprep.subr.bf16.mxu0 0
        %3094 = vmatpush1.bf16.msra.mxu0 0
        %3095 = vmatprep.subr.bf16.mxu0 0
        %3096 = vmatpush1.bf16.msra.mxu0 0
        %3097 = vmatprep.subr.bf16.mxu0 0
        %3098 = vmatpush1.bf16.msra.mxu0 0
        %3099 = vmatprep.mubr.bf16.mxu0 0
        %3100 = vmatmul.mubr.bf16.gmra.mrb[0].mxu0 %v3065
        %v3101 = vpop.f32.mrb[0].mxu0
        %v3102 = vadd.f32 %v3051, %v3101
        %v3103 = vpop.f32.mrb[0].mxu0
        %v3104 = vpop.f32.mrb[0].mxu0
        %v3105 = vadd.f32 %v3051, %v3104
        %v3106 = vpop.f32.mrb[0].mxu0
        %3107 = vdwg.mxu0
        %v3108 = vmax.f32 %v3102, 0.0
        %v3109 = vmax.f32 %v3105, 0.0
        %v3110 = vpack.c.bf16 %v3109, %v3108
        %v3111 = vld [vmem:[%s550] sm:$0xf]
        %v3112 = vld [vmem:[%s550 + $0x4] sm:$0xf]
        %v3113 = vld [vmem:[%s550 + $0x8] sm:$0xf]
        %v3114 = vld [vmem:[%s550 + $0xc] sm:$0xf]
        %v3115 = vld [vmem:[%s550 + $0x10] sm:$0xf]
        %v3116 = vld [vmem:[%s550 + $0x14] sm:$0xf]
        %v3117 = vld [vmem:[%s550 + $0x18] sm:$0xf]
        %v3118 = vld [vmem:[%s550 + $0x1c] sm:$0xf]
        %v3119 = vlaneseq
        %v3120 = vshrl.u32 %v3119, 7
        %v3121 = vsub.s32 5, %v3120
        %v3122 = vrot.slane %v571, %v3121
        %v3131 = vunpack.c.l.b16 %v3111
        %v3132 = vunpack.c.l.b16 %v3112
        %v3133 = vunpack.c.l.b16 %v3113
        %v3134 = vunpack.c.l.b16 %v3114
        %v3135 = vunpack.c.l.b16 %v3115
        %v3136 = vunpack.c.l.b16 %v3116
        %v3137 = vunpack.c.l.b16 %v3117
        %v3138 = vunpack.c.l.b16 %v3118
        %v3139 = vpack.c.b16 %v3132, %v3131
        %v3140 = vpack.c.b16 %v3134, %v3133
        %v3141 = vpack.c.b16 %v3136, %v3135
        %v3142 = vpack.c.b16 %v3138, %v3137
        %vm3147 = vcmask 523264
        %v3149 = vsel %vm3147, %v3110, 0
        %3151 = vmatprep.subr.bf16.mxu0 0
        %3152 = vmatpush1.bf16.msra.mxu0 %v3139
        %3153 = vmatprep.subr.bf16.mxu0 0
        %3154 = vmatpush1.bf16.msra.mxu0 %v3140
        %3155 = vmatprep.subr.bf16.mxu0 0
        %3156 = vmatpush1.bf16.msra.mxu0 %v3141
        %3157 = vmatprep.subr.bf16.mxu0 0
        %3158 = vmatpush1.bf16.msra.mxu0 %v3142
        %3159 = vmatprep.subr.bf16.mxu0 0
        %3160 = vmatpush1.bf16.msra.mxu0 0
        %3161 = vmatprep.subr.bf16.mxu0 0
        %3162 = vmatpush1.bf16.msra.mxu0 0
        %3163 = vmatprep.subr.bf16.mxu0 0
        %3164 = vmatpush1.bf16.msra.mxu0 0
        %3165 = vmatprep.subr.bf16.mxu0 0
        %3166 = vmatpush1.bf16.msra.mxu0 0
        %3167 = vmatprep.subr.bf16.mxu0 0
        %3168 = vmatpush1.bf16.msra.mxu0 0
        %3169 = vmatprep.subr.bf16.mxu0 0
        %3170 = vmatpush1.bf16.msra.mxu0 0
        %3171 = vmatprep.subr.bf16.mxu0 0
        %3172 = vmatpush1.bf16.msra.mxu0 0
        %3173 = vmatprep.subr.bf16.mxu0 0
        %3174 = vmatpush1.bf16.msra.mxu0 0
        %3175 = vmatprep.subr.bf16.mxu0 0
        %3176 = vmatpush1.bf16.msra.mxu0 0
        %3177 = vmatprep.subr.bf16.mxu0 0
        %3178 = vmatpush1.bf16.msra.mxu0 0
        %3179 = vmatprep.subr.bf16.mxu0 0
        %3180 = vmatpush1.bf16.msra.mxu0 0
        %3181 = vmatprep.subr.bf16.mxu0 0
        %3182 = vmatpush1.bf16.msra.mxu0 0
        %3183 = vmatprep.mubr.bf16.mxu0 0
        %3184 = vmatmul.mubr.bf16.gmra.mrb[0].mxu0 %v3149
        %v3185 = vpop.f32.mrb[0].mxu0
        %v3186 = vadd.f32 %v3122, %v3185
        %v3187 = vpop.f32.mrb[0].mxu0
        %v3188 = vpop.f32.mrb[0].mxu0
        %v3189 = vadd.f32 %v3122, %v3188
        %v3190 = vpop.f32.mrb[0].mxu0
        %3191 = vdwg.mxu0
        %v3192 = vadd.f32 %v3041, %v3186
        %v3193 = vadd.f32 %v3042, %v3189
        %v3194 = vsel %vm615, %v3192, 0.0
        %3195 = vadd.xlane.f32.xlu0 %v3194
        %v3196 = vpop.xlane.xlu0 %3195
        %v3197 = vsel %vm615, %v3193, 0.0
        %3198 = vadd.xlane.f32.xlu0 %v3197
        %v3199 = vpop.xlane.xlu0 %3198
        %v3200 = vmul.f32 %v3196, %v1758
        %v3201 = vmul.f32 %v3199, %v1758
        %v3202 = vsub.f32 %v3192, %v3200
        %v3203 = vsub.f32 %v3193, %v3201
        %v3204 = vmul.f32 %v3202, %v3202
        %v3205 = vmul.f32 %v3203, %v3203
        %v3206 = vsel %vm615, %v3204, 0.0
        %3207 = vadd.xlane.f32.xlu0 %v3206
        %v3208 = vpop.xlane.xlu0 %3207
        %v3209 = vsel %vm615, %v3205, 0.0
        %3210 = vadd.xlane.f32.xlu0 %v3209
        %v3211 = vpop.xlane.xlu0 %3210
        %v3212 = vmul.f32 %v3208, %v1758
        %v3213 = vmul.f32 %v3211, %v1758
        %v3214 = vadd.f32 %v3212, 1e-05
        %v3215 = vadd.f32 %v3213, 1e-05
        %v3216 = vrsqrt.pop %v3214
        %v3217 = vrsqrt.pop %v3215
        %v3218 = vmul.f32 %v3202, %v3216
        %v3219 = vmul.f32 %v3203, %v3217
        %v3220 = vlaneseq
        %v3221 = vshrl.u32 %v3220, 7
        %v3222 = vsub.s32 2, %v3221
        %v3223 = vrot.slane %v572, %v3222
        %v3224 = vmul.f32 %v3218, %v3223
        %v3225 = vmul.f32 %v3219, %v3223
        %v3226 = vlaneseq
        %v3227 = vshrl.u32 %v3226, 7
        %v3228 = vsub.s32 3, %v3227
        %v3229 = vrot.slane %v572, %v3228
        %v3230 = vadd.f32 %v3224, %v3229
        %v3231 = vadd.f32 %v3225, %v3229
        %3232 = vst.msk [vmem:[#allocation2] sm:$0xff] %vm615, %v3230
        %3233 = vst.msk [vmem:[#allocation2 + $0x8] sm:$0xff] %vm615, %v3231
        %p3234 = scmp.eq.s32.totalorder %s29, 1
        // Predicated region
        $region77: #{tpu_custom_call.1} parent=59 // pred_check
          %p3235 = pneg %p3234
        $region78: #{tpu_custom_call.1} parent=59 // pred_check_branch
          %3237 = sbr.rel (%p3235) target = $region80
        $region79: #{tpu_custom_call.1} parent=59 // pred_region
          %3238 = vst.msk [vmem:[#allocation9] sm:$0xff] %vm615, %v3230
          %3239 = vst.msk [vmem:[#allocation9 + $0x8] sm:$0xff] %vm615, %v3231
        $region80: #{tpu_custom_call.1} parent=59 // pred_fallthru
          _
        // Predicated region
        $region81: #{tpu_custom_call.1} parent=59 // pred_check
          %p3240 = pneg %p309
        $region82: #{tpu_custom_call.1} parent=59 // pred_check_branch
          %3242 = sbr.rel (%p3240) target = $region84
        $region83: #{tpu_custom_call.1} parent=59 // pred_region
          %s3243 = smul.u32 2, %s28
          %s3245 = ssub.s32 256, 256
          %3246 = vsyncadd [#allocation5], %s3245
          %s3247 = smul.addr %s3243, 128
          %s3248 = scalar_lea.hbm %s10, %s3247
          %s3249 = sshll.u32 [#allocation9], 4
          %s3250 = int_to_ptr.vmem [resolvable:$true] %s3249
          %3255 = dma.vmem_to_hbm [thread:$0]  %s3250, 256, %s3248, [#allocation5], 128, 128, 8
        $region84: #{tpu_custom_call.1} parent=59 // pred_fallthru
          _
        // Predicated region
        $region85: #{tpu_custom_call.1} parent=59 // pred_check
          %p3256 = pneg %p309
        $region86: #{tpu_custom_call.1} parent=59 // pred_check_branch
          %3258 = sbr.rel (%p3256) target = $region88
        $region87: #{tpu_custom_call.1} parent=59 // pred_region
          %3259 = dma.done [#allocation5], 256
        $region88: #{tpu_custom_call.1} parent=59 // pred_fallthru
          _
      $region60: #{tpu_custom_call.1} parent=5 // pred_fallthru
        _
      %p3260 = scmp.le.s32.totalorder 2, %s19
      // Predicated region
      $region89: #{tpu_custom_call.1} parent=5 // pred_check
        %p3261 = pneg %p3260
      $region90: #{tpu_custom_call.1} parent=5 // pred_check_branch
        %3263 = sbr.rel (%p3261) target = $region92
      $region91: #{tpu_custom_call.1} parent=5 // pred_region
        %s3264 = ssub.s32 %s19, 2
      $region92: #{tpu_custom_call.1} parent=5 // pred_fallthru
        _
    $region6: #{tpu_custom_call.1} parent=1 // loop_footer
      %s23 = sadd.s32 1, %s19
    $region7: #{tpu_custom_call.1} parent=1 // loop_footer_branch
      %18 = sbr.rel target = $region3
    $region8: #{tpu_custom_call.1} parent=1 // loop_exit
      _
    %3265 = vsyncpa [#allocation4], 1
    %s3266 = scalar_lea.sflag [#allocation4], 1
    %3267 = vsyncpa %s3266, 1
    %3268 = vsyncpa [#allocation7], 1
    %3269 = vsyncpa [#allocation5], 1
    %s3270 = scalar_lea.sflag [#allocation5], 1
    %3271 = vsyncpa %s3270, 1

</llo_original>
